<compile_context>
chip_gen: v5e
topology: v5e:2x2
jax: 0.10.0
libtpu: 0.0.40
codegen_flags: <defaults>
</compile_context>

<pallas_src>
import functools

import jax
import jax.numpy as jnp
from jax.experimental import pallas as pl
from jax.experimental.pallas import tpu as pltpu


def _answer_rnn_kernel(n_layers, tok_ref, h0_ref, embt_ref, w_ih_ref, w_hh_ref,
                       b_rz_ref, b_in_ref, b_hn_ref, wout_ref, bout_ref,
                       logp_ref, hout_ref):
    H = h0_ref.shape[1]
    Bt = h0_ref.shape[2]
    V_pad = embt_ref.shape[1]
    T = logp_ref.shape[1]

    # ---- hoisted over the whole sequence (independent of the recurrence) -----------
    toks = tok_ref[0]                                               # (1, T*Bt) int32
    one_hot = (jax.lax.broadcasted_iota(jnp.int32, (V_pad, T * Bt), 0)
               == toks).astype(embt_ref.dtype)                      # (V_pad, T*Bt) bf16
    emb_all = jnp.dot(embt_ref[...], one_hot,
                      preferred_element_type=jnp.float32)           # (H, T*Bt) f32
    x_all = jnp.maximum(emb_all, 0.0)                               # F.relu(embedded)
    gx_all = jnp.dot(w_ih_ref[...], x_all.astype(embt_ref.dtype),
                     preferred_element_type=jnp.float32)            # (3H, T*Bt) f32

    w_ih = w_ih_ref[...]
    w_hh = w_hh_ref[...]
    b_rz = b_rz_ref[...]
    b_in = b_in_ref[...]
    b_hn = b_hn_ref[...]
    w_out = wout_ref[...]
    b_out = bout_ref[...]

    def gru_cell(gx, gh, h):
        # PyTorch gate order [r, z, n]; r/z biases pre-summed in the wrapper.
        rz = jax.nn.sigmoid(gx[:2 * H] + gh[:2 * H] + b_rz)         # (2H, Bt)
        r = rz[:H]
        z = rz[H:]
        n = jnp.tanh(gx[2 * H:] + b_in + r * (gh[2 * H:] + b_hn))
        return (1.0 - z) * n + z * h

    h = h0_ref[0]                                                   # (H, Bt) f32
    for t in range(T):                       # static unroll; T is small and static
        gx = gx_all[:, t * Bt:(t + 1) * Bt]                         # lane-aligned slice
        gh = jnp.dot(w_hh, h.astype(w_hh.dtype),
                     preferred_element_type=jnp.float32)            # the ONE per-step matmul
        h = gru_cell(gx, gh, h)
        # Weight-tied repeated GRUCell for n_layers > 1 (matches the reference forward;
        # NOT stacked nn.GRU per-layer weights).
        for _ in range(n_layers - 1):
            x = jnp.maximum(h, 0.0).astype(w_ih.dtype)
            gx_l = jnp.dot(w_ih, x, preferred_element_type=jnp.float32)
            gh_l = jnp.dot(w_hh, h.astype(w_hh.dtype),
                           preferred_element_type=jnp.float32)
            h = gru_cell(gx_l, gh_l, h)

        # output2tag (2 classes) + log-softmax on VPU/XLU (no MXU round trip for 2 rows);
        # the logp block is VMEM-resident for the whole sequence, flushed once at the end.
        l0 = jnp.sum(h * w_out[:, 0:1], axis=0, keepdims=True) + b_out[0:1, :]
        l1 = jnp.sum(h * w_out[:, 1:2], axis=0, keepdims=True) + b_out[1:2, :]
        m = jnp.maximum(l0, l1)
        lse = m + jnp.log(jnp.exp(l0 - m) + jnp.exp(l1 - m))
        logp_ref[0, t, 0:1, :] = l0 - lse
        logp_ref[0, t, 1:2, :] = l1 - lse

    hout_ref[0] = h


def answer_rnn_forward_seq(tokens, hidden, params, *, n_layers=1, block_b=128):
    """tokens: (B, T) int32; hidden: (1, B, H) f32.
    Returns (logp (B, T, 2) f32, hidden (1, B, H) f32)."""
    V, H = params["embedding"].shape
    B, T = tokens.shape
    assert H % 8 == 0
    assert block_b % 128 == 0, "batch tile must be lane-dense (multiple of 128)"
    B_pad = ((B + block_b - 1) // block_b) * block_b    # pad batch up to the lane tile
    nb = B_pad // block_b                               # v7x: prefer nb multiple of 2
    V_pad = ((V + 127) // 128) * 128

    f32, bf16 = jnp.float32, jnp.bfloat16
    # ---- one-time layout / dtype prep (outside the hot loop) -----------------------
    # MXU operands in bf16 (halves VMEM/DMA, native MXU rate); everything else f32.
    emb_t = jnp.zeros((H, V_pad), bf16).at[:, :V].set(params["embedding"].T.astype(bf16))
    w_ih = params["w_ih"].astype(bf16)                  # (3H, H) PyTorch layout
    w_hh = params["w_hh"].astype(bf16)
    b_ih = params["b_ih"].astype(f32)
    b_hh = params["b_hh"].astype(f32)
    b_rz = (b_ih[:2 * H] + b_hh[:2 * H]).reshape(2 * H, 1)    # pre-summed r/z bias
    b_in = b_ih[2 * H:].reshape(H, 1)
    b_hn = b_hh[2 * H:].reshape(H, 1)
    w_out_c = params["w_out"].T.astype(f32)             # (H, 2)
    b_out_c = params["b_out"].reshape(2, 1).astype(f32)

    tok = jnp.zeros((B_pad, T), jnp.int32).at[:B].set(tokens.astype(jnp.int32))
    h0 = jnp.zeros((B_pad, H), f32).at[:B].set(hidden.reshape(B, H).astype(f32))
    # batch is the lane dim; tokens flattened so column index = t * block_b + lane.
    tok_blk = tok.reshape(nb, block_b, T).transpose(0, 2, 1).reshape(nb, 1, T * block_b)
    h0_blk = h0.reshape(nb, block_b, H).transpose(0, 2, 1)            # (nb, H, Bt)

    kernel = functools.partial(_answer_rnn_kernel, n_layers)
    const2 = lambda b: (0, 0)                           # resident weights, DMA'd once
    grid_spec = pltpu.PrefetchScalarGridSpec(
        num_scalar_prefetch=0,
        grid=(nb,),
        in_specs=[
            pl.BlockSpec((1, 1, T * block_b), lambda b: (b, 0, 0)),   # tokens (per block)
            pl.BlockSpec((1, H, block_b), lambda b: (b, 0, 0)),       # h0     (per block)
            # TODO(synk): for production vocab sizes keep the table in HBM
            # (memory_space=pl.ANY) and DMA-gather the Bt rows for step t+1 one step
            # ahead instead of the resident one-hot matmul.
            pl.BlockSpec((H, V_pad), const2),                         # embedding^T (bf16)
            pl.BlockSpec((3 * H, H), const2),                         # W_ih (bf16)
            pl.BlockSpec((3 * H, H), const2),                         # W_hh (bf16)
            pl.BlockSpec((2 * H, 1), const2),                         # b_r|b_z combined
            pl.BlockSpec((H, 1), const2),                             # b_in
            pl.BlockSpec((H, 1), const2),                             # b_hn
            pl.BlockSpec((H, 2), const2),                             # W_out^T
            pl.BlockSpec((2, 1), const2),                             # b_out
        ],
        out_specs=(
            pl.BlockSpec((1, T, 2, block_b), lambda b: (b, 0, 0, 0)), # logp, whole seq
            pl.BlockSpec((1, H, block_b), lambda b: (b, 0, 0)),       # final hidden
        ),
    )

    logp_blk, h_blk = pl.pallas_call(
        kernel,
        out_shape=(jax.ShapeDtypeStruct((nb, T, 2, block_b), f32),
                   jax.ShapeDtypeStruct((nb, H, block_b), f32)),
        grid_spec=grid_spec,
        compiler_params=pltpu.CompilerParams(
            dimension_semantics=("parallel",),
            # explicit scoped-VMEM budget; re-derive when H / vocab / block_b grow
            vmem_limit_bytes=32 * 1024 * 1024),
    )(tok_blk, h0_blk, emb_t, w_ih, w_hh, b_rz, b_in, b_hn, w_out_c, b_out_c)

    logp = logp_blk.transpose(0, 3, 1, 2).reshape(B_pad, T, 2)[:B]
    h_final = h_blk.transpose(0, 2, 1).reshape(B_pad, H)[:B]
    return logp, h_final.reshape(1, B, H)


def init_params(key, input_size, hidden_size):
    ks = jax.random.split(key, 7)
    H = hidden_size
    s = 1.0 / jnp.sqrt(H)
    return {
        "embedding": jax.random.normal(ks[0], (input_size, H), jnp.float32),
        "w_ih": jax.random.normal(ks[1], (3 * H, H), jnp.float32) * s,   # PyTorch layout
        "w_hh": jax.random.normal(ks[2], (3 * H, H), jnp.float32) * s,
        "b_ih": jax.random.normal(ks[3], (3 * H,), jnp.float32) * s,
        "b_hh": jax.random.normal(ks[4], (3 * H,), jnp.float32) * s,
        "w_out": jax.random.normal(ks[5], (2, H), jnp.float32) * s,      # Linear(H, 2)
        "b_out": jax.random.normal(ks[6], (2,), jnp.float32) * s,
    }


def _reference_forward(tokens, hidden, params, n_layers=1):
    """Pure-JAX mirror of the PyTorch forward, per token per sequence.
    The MXU operands are rounded to bf16 exactly as the kernel feeds them."""
    hp = jax.lax.Precision.HIGHEST
    rnd = lambda a: a.astype(jnp.bfloat16).astype(jnp.float32)
    emb = rnd(params["embedding"])
    w_ih, w_hh = rnd(params["w_ih"]), rnd(params["w_hh"])
    b_ih, b_hh = params["b_ih"], params["b_hh"]
    w_out, b_out = params["w_out"], params["b_out"]
    H = emb.shape[1]
    B, T = tokens.shape
    h = hidden.reshape(B, H)
    logps = []
    for t in range(T):
        out = emb[tokens[:, t]]
        for _ in range(n_layers):
            x = jnp.maximum(out, 0.0)
            gi = jnp.dot(x, w_ih.T, precision=hp) + b_ih
            gh = jnp.dot(h, w_hh.T, precision=hp) + b_hh
            r = jax.nn.sigmoid(gi[:, :H] + gh[:, :H])
            z = jax.nn.sigmoid(gi[:, H:2 * H] + gh[:, H:2 * H])
            n = jnp.tanh(gi[:, 2 * H:] + r * gh[:, 2 * H:])
            h = (1.0 - z) * n + z * h
            out = h
        logits = jnp.dot(out, w_out.T, precision=hp) + b_out
        logps.append(jax.nn.log_softmax(logits, axis=-1))
    return jnp.stack(logps, axis=1), h


if __name__ == "__main__":
    V = 50         # vocab size
    H = 32         # hidden size (stand-in for HIDDEN_DIM=256; any multiple of 8)
    B = 16         # batch of independent sequences (padded up to the 128-lane tile)
    T = 6          # tokens per sequence
    BLOCK_B = 128  # lane-dense batch tile (256 on v6e/v7x; pick nb>=2 to feed both v7x TCs)

    key = jax.random.PRNGKey(0)
    kp, kt, kh = jax.random.split(key, 3)
    params = init_params(kp, V, H)
    tokens = jax.random.randint(kt, (B, T), 0, V, dtype=jnp.int32)
    hidden = jax.random.normal(kh, (1, B, H), jnp.float32) * 0.1  # initHidden() would be zeros

    fwd = jax.jit(functools.partial(answer_rnn_forward_seq, n_layers=1, block_b=BLOCK_B))
    logp, h_final = fwd(tokens, hidden, params)
    jax.block_until_ready((logp, h_final))

    ref_logp, ref_h = _reference_forward(tokens, hidden, params, n_layers=1)

    assert logp.shape == (B, T, 2) and h_final.shape == (1, B, H)
    assert jnp.allclose(jnp.sum(jnp.exp(logp), axis=-1), 1.0, atol=1e-4)
    assert jnp.allclose(logp, ref_logp, atol=2e-2, rtol=2e-2)
    assert jnp.allclose(h_final.reshape(B, H), ref_h, atol=2e-2, rtol=2e-2)
    print("KERNEL_OK")
</pallas_src>

<mosaic_0001>
module attributes {stable_mosaic.version = 11 : i64} {
  func.func @_answer_rnn_kernel(%arg0: i32, %arg1: memref<1x1x768xi32, #tpu.memory_space<vmem>>, %arg2: memref<1x32x128xf32, #tpu.memory_space<vmem>>, %arg3: memref<32x128xbf16, #tpu.memory_space<vmem>>, %arg4: memref<96x32xbf16, #tpu.memory_space<vmem>>, %arg5: memref<96x32xbf16, #tpu.memory_space<vmem>>, %arg6: memref<64x1xf32, #tpu.memory_space<vmem>>, %arg7: memref<32x1xf32, #tpu.memory_space<vmem>>, %arg8: memref<32x1xf32, #tpu.memory_space<vmem>>, %arg9: memref<32x2xf32, #tpu.memory_space<vmem>>, %arg10: memref<2x1xf32, #tpu.memory_space<vmem>>, %arg11: memref<1x6x2x128xf32, #tpu.memory_space<vmem>>, %arg12: memref<1x32x128xf32, #tpu.memory_space<vmem>>) attributes {dimension_semantics = [#tpu.dimension_semantics<parallel>], iteration_bounds = array<i64: 1>, scalar_prefetch = 0 : i64, scratch_operands = 0 : i64, tpu.core_type = #tpu.core_type<tc>, window_params = [{transform_indices = @transform_0, window_bounds = array<i64: 1, 1, 768>}, {transform_indices = @transform_1, window_bounds = array<i64: 1, 32, 128>}, {pipeline_mode = #tpu.pipeline_mode<synchronous>, transform_indices = @transform_2, window_bounds = array<i64: 32, 128>}, {pipeline_mode = #tpu.pipeline_mode<synchronous>, transform_indices = @transform_3, window_bounds = array<i64: 96, 32>}, {pipeline_mode = #tpu.pipeline_mode<synchronous>, transform_indices = @transform_4, window_bounds = array<i64: 96, 32>}, {pipeline_mode = #tpu.pipeline_mode<synchronous>, transform_indices = @transform_5, window_bounds = array<i64: 64, 1>}, {pipeline_mode = #tpu.pipeline_mode<synchronous>, transform_indices = @transform_6, window_bounds = array<i64: 32, 1>}, {pipeline_mode = #tpu.pipeline_mode<synchronous>, transform_indices = @transform_7, window_bounds = array<i64: 32, 1>}, {pipeline_mode = #tpu.pipeline_mode<synchronous>, transform_indices = @transform_8, window_bounds = array<i64: 32, 2>}, {pipeline_mode = #tpu.pipeline_mode<synchronous>, transform_indices = @transform_9, window_bounds = array<i64: 2, 1>}, {transform_indices = @transform_10, window_bounds = array<i64: 1, 6, 2, 128>}, {transform_indices = @transform_11, window_bounds = array<i64: 1, 32, 128>}]} {
    %c0 = arith.constant 0 : index
    %c0_0 = arith.constant 0 : index
    %c0_1 = arith.constant 0 : index
    %0 = vector.load %arg1[%c0, %c0_0, %c0_1] : memref<1x1x768xi32, #tpu.memory_space<vmem>>, vector<1x1x768xi32>
    %1 = vector.shape_cast %0 : vector<1x1x768xi32> to vector<1x768xi32>
    %2 = tpu.iota {dimensions = array<i32: 0>} : vector<128x768xi32>
    %3 = vector.broadcast %1 : vector<1x768xi32> to vector<128x768xi32>
    %4 = arith.cmpi eq, %2, %3 : vector<128x768xi32>
    %5 = arith.extui %4 : vector<128x768xi1> to vector<128x768xi32>
    %6 = arith.sitofp %5 : vector<128x768xi32> to vector<128x768xf32>
    %7 = arith.truncf %6 : vector<128x768xf32> to vector<128x768xbf16>
    %c0_2 = arith.constant 0 : index
    %c0_3 = arith.constant 0 : index
    %8 = vector.load %arg3[%c0_2, %c0_3] : memref<32x128xbf16, #tpu.memory_space<vmem>>, vector<32x128xbf16>
    %cst = arith.constant dense<0.000000e+00> : vector<32x768xf32>
    %9 = tpu.matmul %8, %7, %cst {dimension_numbers = #tpu.dot_dimension_numbers<[1], [0], [0], [1], [0, 0, 1, 1], [], []>} : vector<32x128xbf16>, vector<128x768xbf16>, vector<32x768xf32> -> vector<32x768xf32>
    %cst_4 = arith.constant 0.000000e+00 : f32
    %10 = vector.broadcast %cst_4 : f32 to vector<32x768xf32>
    %11 = arith.maximumf %9, %10 : vector<32x768xf32>
    %c0_5 = arith.constant 0 : index
    %c0_6 = arith.constant 0 : index
    %12 = vector.load %arg4[%c0_5, %c0_6] : memref<96x32xbf16, #tpu.memory_space<vmem>>, vector<96x32xbf16>
    %13 = arith.truncf %11 : vector<32x768xf32> to vector<32x768xbf16>
    %cst_7 = arith.constant dense<0.000000e+00> : vector<96x768xf32>
    %14 = tpu.matmul %12, %13, %cst_7 {dimension_numbers = #tpu.dot_dimension_numbers<[1], [0], [0], [1], [0, 0, 1, 1], [], []>} : vector<96x32xbf16>, vector<32x768xbf16>, vector<96x768xf32> -> vector<96x768xf32>
    %c0_8 = arith.constant 0 : index
    %c0_9 = arith.constant 0 : index
    %15 = vector.load %arg5[%c0_8, %c0_9] : memref<96x32xbf16, #tpu.memory_space<vmem>>, vector<96x32xbf16>
    %c0_10 = arith.constant 0 : index
    %c0_11 = arith.constant 0 : index
    %16 = vector.load %arg6[%c0_10, %c0_11] : memref<64x1xf32, #tpu.memory_space<vmem>>, vector<64x1xf32>
    %c0_12 = arith.constant 0 : index
    %c0_13 = arith.constant 0 : index
    %17 = vector.load %arg7[%c0_12, %c0_13] : memref<32x1xf32, #tpu.memory_space<vmem>>, vector<32x1xf32>
    %c0_14 = arith.constant 0 : index
    %c0_15 = arith.constant 0 : index
    %18 = vector.load %arg8[%c0_14, %c0_15] : memref<32x1xf32, #tpu.memory_space<vmem>>, vector<32x1xf32>
    %c0_16 = arith.constant 0 : index
    %c0_17 = arith.constant 0 : index
    %19 = vector.load %arg9[%c0_16, %c0_17] : memref<32x2xf32, #tpu.memory_space<vmem>>, vector<32x2xf32>
    %c0_18 = arith.constant 0 : index
    %c0_19 = arith.constant 0 : index
    %20 = vector.load %arg10[%c0_18, %c0_19] : memref<2x1xf32, #tpu.memory_space<vmem>>, vector<2x1xf32>
    %c0_20 = arith.constant 0 : index
    %c0_21 = arith.constant 0 : index
    %c0_22 = arith.constant 0 : index
    %21 = vector.load %arg2[%c0_20, %c0_21, %c0_22] : memref<1x32x128xf32, #tpu.memory_space<vmem>>, vector<1x32x128xf32>
    %22 = vector.shape_cast %21 : vector<1x32x128xf32> to vector<32x128xf32>
    %23 = vector.extract_strided_slice %14 {offsets = [0, 0], sizes = [96, 128], strides = [1, 1]} : vector<96x768xf32> to vector<96x128xf32>
    %24 = arith.truncf %22 : vector<32x128xf32> to vector<32x128xbf16>
    %cst_23 = arith.constant dense<0.000000e+00> : vector<96x128xf32>
    %25 = tpu.matmul %15, %24, %cst_23 {dimension_numbers = #tpu.dot_dimension_numbers<[1], [0], [0], [1], [0, 0, 1, 1], [], []>} : vector<96x32xbf16>, vector<32x128xbf16>, vector<96x128xf32> -> vector<96x128xf32>
    %26 = vector.extract_strided_slice %23 {offsets = [0, 0], sizes = [64, 128], strides = [1, 1]} : vector<96x128xf32> to vector<64x128xf32>
    %27 = vector.extract_strided_slice %25 {offsets = [0, 0], sizes = [64, 128], strides = [1, 1]} : vector<96x128xf32> to vector<64x128xf32>
    %28 = arith.addf %26, %27 : vector<64x128xf32>
    %29 = vector.broadcast %16 : vector<64x1xf32> to vector<64x128xf32>
    %30 = arith.addf %28, %29 : vector<64x128xf32>
    %31 = arith.negf %30 : vector<64x128xf32>
    %32 = math.exp %31 : vector<64x128xf32>
    %cst_24 = arith.constant 1.000000e+00 : f32
    %33 = vector.broadcast %cst_24 : f32 to vector<64x128xf32>
    %34 = arith.addf %33, %32 : vector<64x128xf32>
    %35 = arith.divf %33, %34 : vector<64x128xf32>
    %36 = vector.extract_strided_slice %35 {offsets = [0, 0], sizes = [32, 128], strides = [1, 1]} : vector<64x128xf32> to vector<32x128xf32>
    %37 = vector.extract_strided_slice %35 {offsets = [32, 0], sizes = [32, 128], strides = [1, 1]} : vector<64x128xf32> to vector<32x128xf32>
    %38 = vector.extract_strided_slice %23 {offsets = [64, 0], sizes = [32, 128], strides = [1, 1]} : vector<96x128xf32> to vector<32x128xf32>
    %39 = vector.broadcast %17 : vector<32x1xf32> to vector<32x128xf32>
    %40 = arith.addf %38, %39 : vector<32x128xf32>
    %41 = vector.extract_strided_slice %25 {offsets = [64, 0], sizes = [32, 128], strides = [1, 1]} : vector<96x128xf32> to vector<32x128xf32>
    %42 = vector.broadcast %18 : vector<32x1xf32> to vector<32x128xf32>
    %43 = arith.addf %41, %42 : vector<32x128xf32>
    %44 = arith.mulf %36, %43 : vector<32x128xf32>
    %45 = arith.addf %40, %44 : vector<32x128xf32>
    %46 = math.tanh %45 : vector<32x128xf32>
    %cst_25 = arith.constant 1.000000e+00 : f32
    %47 = vector.broadcast %cst_25 : f32 to vector<32x128xf32>
    %48 = arith.subf %47, %37 : vector<32x128xf32>
    %49 = arith.mulf %48, %46 : vector<32x128xf32>
    %50 = arith.mulf %37, %22 : vector<32x128xf32>
    %51 = arith.addf %49, %50 : vector<32x128xf32>
    %52 = vector.extract_strided_slice %19 {offsets = [0, 0], sizes = [32, 1], strides = [1, 1]} : vector<32x2xf32> to vector<32x1xf32>
    %53 = vector.broadcast %52 : vector<32x1xf32> to vector<32x128xf32>
    %54 = arith.mulf %51, %53 : vector<32x128xf32>
    %cst_26 = arith.constant dense<0.000000e+00> : vector<128xf32>
    %55 = vector.multi_reduction <add>, %54, %cst_26 [0] : vector<32x128xf32> to vector<128xf32>
    %56 = vector.shape_cast %55 : vector<128xf32> to vector<1x128xf32>
    %57 = vector.extract_strided_slice %20 {offsets = [0, 0], sizes = [1, 1], strides = [1, 1]} : vector<2x1xf32> to vector<1x1xf32>
    %58 = vector.broadcast %57 : vector<1x1xf32> to vector<1x128xf32>
    %59 = arith.addf %56, %58 : vector<1x128xf32>
    %60 = vector.extract_strided_slice %19 {offsets = [0, 1], sizes = [32, 1], strides = [1, 1]} : vector<32x2xf32> to vector<32x1xf32>
    %61 = vector.broadcast %60 : vector<32x1xf32> to vector<32x128xf32>
    %62 = arith.mulf %51, %61 : vector<32x128xf32>
    %cst_27 = arith.constant dense<0.000000e+00> : vector<128xf32>
    %63 = vector.multi_reduction <add>, %62, %cst_27 [0] : vector<32x128xf32> to vector<128xf32>
    %64 = vector.shape_cast %63 : vector<128xf32> to vector<1x128xf32>
    %65 = vector.extract_strided_slice %20 {offsets = [1, 0], sizes = [1, 1], strides = [1, 1]} : vector<2x1xf32> to vector<1x1xf32>
    %66 = vector.broadcast %65 : vector<1x1xf32> to vector<1x128xf32>
    %67 = arith.addf %64, %66 : vector<1x128xf32>
    %68 = arith.maximumf %59, %67 : vector<1x128xf32>
    %69 = arith.subf %59, %68 : vector<1x128xf32>
    %70 = math.exp %69 : vector<1x128xf32>
    %71 = arith.subf %67, %68 : vector<1x128xf32>
    %72 = math.exp %71 : vector<1x128xf32>
    %73 = arith.addf %70, %72 : vector<1x128xf32>
    %74 = math.log %73 : vector<1x128xf32>
    %75 = arith.addf %68, %74 : vector<1x128xf32>
    %76 = arith.subf %59, %75 : vector<1x128xf32>
    %c0_28 = arith.constant 0 : index
    %c0_29 = arith.constant 0 : index
    %c0_30 = arith.constant 0 : index
    %c0_31 = arith.constant 0 : index
    %77 = vector.load %arg11[%c0_28, %c0_29, %c0_30, %c0_31] : memref<1x6x2x128xf32, #tpu.memory_space<vmem>>, vector<1x1x1x128xf32>
    %78 = vector.shape_cast %77 : vector<1x1x1x128xf32> to vector<1x128xf32>
    %79 = vector.shape_cast %76 : vector<1x128xf32> to vector<1x1x1x128xf32>
    tpu.vector_store %arg11[%c0_28, %c0_29, %c0_30, %c0_31], %79 {strides = array<i32>} : memref<1x6x2x128xf32, #tpu.memory_space<vmem>>, vector<1x1x1x128xf32>,
    %80 = arith.subf %67, %75 : vector<1x128xf32>
    %c0_32 = arith.constant 0 : index
    %c0_33 = arith.constant 0 : index
    %c1 = arith.constant 1 : index
    %c0_34 = arith.constant 0 : index
    %81 = vector.load %arg11[%c0_32, %c0_33, %c1, %c0_34] : memref<1x6x2x128xf32, #tpu.memory_space<vmem>>, vector<1x1x1x128xf32>
    %82 = vector.shape_cast %81 : vector<1x1x1x128xf32> to vector<1x128xf32>
    %83 = vector.shape_cast %80 : vector<1x128xf32> to vector<1x1x1x128xf32>
    tpu.vector_store %arg11[%c0_32, %c0_33, %c1, %c0_34], %83 {strides = array<i32>} : memref<1x6x2x128xf32, #tpu.memory_space<vmem>>, vector<1x1x1x128xf32>,
    %84 = vector.extract_strided_slice %14 {offsets = [0, 128], sizes = [96, 128], strides = [1, 1]} : vector<96x768xf32> to vector<96x128xf32>
    %85 = arith.truncf %51 : vector<32x128xf32> to vector<32x128xbf16>
    %cst_35 = arith.constant dense<0.000000e+00> : vector<96x128xf32>
    %86 = tpu.matmul %15, %85, %cst_35 {dimension_numbers = #tpu.dot_dimension_numbers<[1], [0], [0], [1], [0, 0, 1, 1], [], []>} : vector<96x32xbf16>, vector<32x128xbf16>, vector<96x128xf32> -> vector<96x128xf32>
    %87 = vector.extract_strided_slice %84 {offsets = [0, 0], sizes = [64, 128], strides = [1, 1]} : vector<96x128xf32> to vector<64x128xf32>
    %88 = vector.extract_strided_slice %86 {offsets = [0, 0], sizes = [64, 128], strides = [1, 1]} : vector<96x128xf32> to vector<64x128xf32>
    %89 = arith.addf %87, %88 : vector<64x128xf32>
    %90 = vector.broadcast %16 : vector<64x1xf32> to vector<64x128xf32>
    %91 = arith.addf %89, %90 : vector<64x128xf32>
    %92 = arith.negf %91 : vector<64x128xf32>
    %93 = math.exp %92 : vector<64x128xf32>
    %cst_36 = arith.constant 1.000000e+00 : f32
    %94 = vector.broadcast %cst_36 : f32 to vector<64x128xf32>
    %95 = arith.addf %94, %93 : vector<64x128xf32>
    %96 = arith.divf %94, %95 : vector<64x128xf32>
    %97 = vector.extract_strided_slice %96 {offsets = [0, 0], sizes = [32, 128], strides = [1, 1]} : vector<64x128xf32> to vector<32x128xf32>
    %98 = vector.extract_strided_slice %96 {offsets = [32, 0], sizes = [32, 128], strides = [1, 1]} : vector<64x128xf32> to vector<32x128xf32>
    %99 = vector.extract_strided_slice %84 {offsets = [64, 0], sizes = [32, 128], strides = [1, 1]} : vector<96x128xf32> to vector<32x128xf32>
    %100 = vector.broadcast %17 : vector<32x1xf32> to vector<32x128xf32>
    %101 = arith.addf %99, %100 : vector<32x128xf32>
    %102 = vector.extract_strided_slice %86 {offsets = [64, 0], sizes = [32, 128], strides = [1, 1]} : vector<96x128xf32> to vector<32x128xf32>
    %103 = vector.broadcast %18 : vector<32x1xf32> to vector<32x128xf32>
    %104 = arith.addf %102, %103 : vector<32x128xf32>
    %105 = arith.mulf %97, %104 : vector<32x128xf32>
    %106 = arith.addf %101, %105 : vector<32x128xf32>
    %107 = math.tanh %106 : vector<32x128xf32>
    %cst_37 = arith.constant 1.000000e+00 : f32
    %108 = vector.broadcast %cst_37 : f32 to vector<32x128xf32>
    %109 = arith.subf %108, %98 : vector<32x128xf32>
    %110 = arith.mulf %109, %107 : vector<32x128xf32>
    %111 = arith.mulf %98, %51 : vector<32x128xf32>
    %112 = arith.addf %110, %111 : vector<32x128xf32>
    %113 = vector.extract_strided_slice %19 {offsets = [0, 0], sizes = [32, 1], strides = [1, 1]} : vector<32x2xf32> to vector<32x1xf32>
    %114 = vector.broadcast %113 : vector<32x1xf32> to vector<32x128xf32>
    %115 = arith.mulf %112, %114 : vector<32x128xf32>
    %cst_38 = arith.constant dense<0.000000e+00> : vector<128xf32>
    %116 = vector.multi_reduction <add>, %115, %cst_38 [0] : vector<32x128xf32> to vector<128xf32>
    %117 = vector.shape_cast %116 : vector<128xf32> to vector<1x128xf32>
    %118 = vector.extract_strided_slice %20 {offsets = [0, 0], sizes = [1, 1], strides = [1, 1]} : vector<2x1xf32> to vector<1x1xf32>
    %119 = vector.broadcast %118 : vector<1x1xf32> to vector<1x128xf32>
    %120 = arith.addf %117, %119 : vector<1x128xf32>
    %121 = vector.extract_strided_slice %19 {offsets = [0, 1], sizes = [32, 1], strides = [1, 1]} : vector<32x2xf32> to vector<32x1xf32>
    %122 = vector.broadcast %121 : vector<32x1xf32> to vector<32x128xf32>
    %123 = arith.mulf %112, %122 : vector<32x128xf32>
    %cst_39 = arith.constant dense<0.000000e+00> : vector<128xf32>
    %124 = vector.multi_reduction <add>, %123, %cst_39 [0] : vector<32x128xf32> to vector<128xf32>
    %125 = vector.shape_cast %124 : vector<128xf32> to vector<1x128xf32>
    %126 = vector.extract_strided_slice %20 {offsets = [1, 0], sizes = [1, 1], strides = [1, 1]} : vector<2x1xf32> to vector<1x1xf32>
    %127 = vector.broadcast %126 : vector<1x1xf32> to vector<1x128xf32>
    %128 = arith.addf %125, %127 : vector<1x128xf32>
    %129 = arith.maximumf %120, %128 : vector<1x128xf32>
    %130 = arith.subf %120, %129 : vector<1x128xf32>
    %131 = math.exp %130 : vector<1x128xf32>
    %132 = arith.subf %128, %129 : vector<1x128xf32>
    %133 = math.exp %132 : vector<1x128xf32>
    %134 = arith.addf %131, %133 : vector<1x128xf32>
    %135 = math.log %134 : vector<1x128xf32>
    %136 = arith.addf %129, %135 : vector<1x128xf32>
    %137 = arith.subf %120, %136 : vector<1x128xf32>
    %c0_40 = arith.constant 0 : index
    %c1_41 = arith.constant 1 : index
    %c0_42 = arith.constant 0 : index
    %c0_43 = arith.constant 0 : index
    %138 = vector.load %arg11[%c0_40, %c1_41, %c0_42, %c0_43] : memref<1x6x2x128xf32, #tpu.memory_space<vmem>>, vector<1x1x1x128xf32>
    %139 = vector.shape_cast %138 : vector<1x1x1x128xf32> to vector<1x128xf32>
    %140 = vector.shape_cast %137 : vector<1x128xf32> to vector<1x1x1x128xf32>
    tpu.vector_store %arg11[%c0_40, %c1_41, %c0_42, %c0_43], %140 {strides = array<i32>} : memref<1x6x2x128xf32, #tpu.memory_space<vmem>>, vector<1x1x1x128xf32>,
    %141 = arith.subf %128, %136 : vector<1x128xf32>
    %c0_44 = arith.constant 0 : index
    %c1_45 = arith.constant 1 : index
    %c1_46 = arith.constant 1 : index
    %c0_47 = arith.constant 0 : index
    %142 = vector.load %arg11[%c0_44, %c1_45, %c1_46, %c0_47] : memref<1x6x2x128xf32, #tpu.memory_space<vmem>>, vector<1x1x1x128xf32>
    %143 = vector.shape_cast %142 : vector<1x1x1x128xf32> to vector<1x128xf32>
    %144 = vector.shape_cast %141 : vector<1x128xf32> to vector<1x1x1x128xf32>
    tpu.vector_store %arg11[%c0_44, %c1_45, %c1_46, %c0_47], %144 {strides = array<i32>} : memref<1x6x2x128xf32, #tpu.memory_space<vmem>>, vector<1x1x1x128xf32>,
    %145 = vector.extract_strided_slice %14 {offsets = [0, 256], sizes = [96, 128], strides = [1, 1]} : vector<96x768xf32> to vector<96x128xf32>
    %146 = arith.truncf %112 : vector<32x128xf32> to vector<32x128xbf16>
    %cst_48 = arith.constant dense<0.000000e+00> : vector<96x128xf32>
    %147 = tpu.matmul %15, %146, %cst_48 {dimension_numbers = #tpu.dot_dimension_numbers<[1], [0], [0], [1], [0, 0, 1, 1], [], []>} : vector<96x32xbf16>, vector<32x128xbf16>, vector<96x128xf32> -> vector<96x128xf32>
    %148 = vector.extract_strided_slice %145 {offsets = [0, 0], sizes = [64, 128], strides = [1, 1]} : vector<96x128xf32> to vector<64x128xf32>
    %149 = vector.extract_strided_slice %147 {offsets = [0, 0], sizes = [64, 128], strides = [1, 1]} : vector<96x128xf32> to vector<64x128xf32>
    %150 = arith.addf %148, %149 : vector<64x128xf32>
    %151 = vector.broadcast %16 : vector<64x1xf32> to vector<64x128xf32>
    %152 = arith.addf %150, %151 : vector<64x128xf32>
    %153 = arith.negf %152 : vector<64x128xf32>
    %154 = math.exp %153 : vector<64x128xf32>
    %cst_49 = arith.constant 1.000000e+00 : f32
    %155 = vector.broadcast %cst_49 : f32 to vector<64x128xf32>
    %156 = arith.addf %155, %154 : vector<64x128xf32>
    %157 = arith.divf %155, %156 : vector<64x128xf32>
    %158 = vector.extract_strided_slice %157 {offsets = [0, 0], sizes = [32, 128], strides = [1, 1]} : vector<64x128xf32> to vector<32x128xf32>
    %159 = vector.extract_strided_slice %157 {offsets = [32, 0], sizes = [32, 128], strides = [1, 1]} : vector<64x128xf32> to vector<32x128xf32>
    %160 = vector.extract_strided_slice %145 {offsets = [64, 0], sizes = [32, 128], strides = [1, 1]} : vector<96x128xf32> to vector<32x128xf32>
    %161 = vector.broadcast %17 : vector<32x1xf32> to vector<32x128xf32>
    %162 = arith.addf %160, %161 : vector<32x128xf32>
    %163 = vector.extract_strided_slice %147 {offsets = [64, 0], sizes = [32, 128], strides = [1, 1]} : vector<96x128xf32> to vector<32x128xf32>
    %164 = vector.broadcast %18 : vector<32x1xf32> to vector<32x128xf32>
    %165 = arith.addf %163, %164 : vector<32x128xf32>
    %166 = arith.mulf %158, %165 : vector<32x128xf32>
    %167 = arith.addf %162, %166 : vector<32x128xf32>
    %168 = math.tanh %167 : vector<32x128xf32>
    %cst_50 = arith.constant 1.000000e+00 : f32
    %169 = vector.broadcast %cst_50 : f32 to vector<32x128xf32>
    %170 = arith.subf %169, %159 : vector<32x128xf32>
    %171 = arith.mulf %170, %168 : vector<32x128xf32>
    %172 = arith.mulf %159, %112 : vector<32x128xf32>
    %173 = arith.addf %171, %172 : vector<32x128xf32>
    %174 = vector.extract_strided_slice %19 {offsets = [0, 0], sizes = [32, 1], strides = [1, 1]} : vector<32x2xf32> to vector<32x1xf32>
    %175 = vector.broadcast %174 : vector<32x1xf32> to vector<32x128xf32>
    %176 = arith.mulf %173, %175 : vector<32x128xf32>
    %cst_51 = arith.constant dense<0.000000e+00> : vector<128xf32>
    %177 = vector.multi_reduction <add>, %176, %cst_51 [0] : vector<32x128xf32> to vector<128xf32>
    %178 = vector.shape_cast %177 : vector<128xf32> to vector<1x128xf32>
    %179 = vector.extract_strided_slice %20 {offsets = [0, 0], sizes = [1, 1], strides = [1, 1]} : vector<2x1xf32> to vector<1x1xf32>
    %180 = vector.broadcast %179 : vector<1x1xf32> to vector<1x128xf32>
    %181 = arith.addf %178, %180 : vector<1x128xf32>
    %182 = vector.extract_strided_slice %19 {offsets = [0, 1], sizes = [32, 1], strides = [1, 1]} : vector<32x2xf32> to vector<32x1xf32>
    %183 = vector.broadcast %182 : vector<32x1xf32> to vector<32x128xf32>
    %184 = arith.mulf %173, %183 : vector<32x128xf32>
    %cst_52 = arith.constant dense<0.000000e+00> : vector<128xf32>
    %185 = vector.multi_reduction <add>, %184, %cst_52 [0] : vector<32x128xf32> to vector<128xf32>
    %186 = vector.shape_cast %185 : vector<128xf32> to vector<1x128xf32>
    %187 = vector.extract_strided_slice %20 {offsets = [1, 0], sizes = [1, 1], strides = [1, 1]} : vector<2x1xf32> to vector<1x1xf32>
    %188 = vector.broadcast %187 : vector<1x1xf32> to vector<1x128xf32>
    %189 = arith.addf %186, %188 : vector<1x128xf32>
    %190 = arith.maximumf %181, %189 : vector<1x128xf32>
    %191 = arith.subf %181, %190 : vector<1x128xf32>
    %192 = math.exp %191 : vector<1x128xf32>
    %193 = arith.subf %189, %190 : vector<1x128xf32>
    %194 = math.exp %193 : vector<1x128xf32>
    %195 = arith.addf %192, %194 : vector<1x128xf32>
    %196 = math.log %195 : vector<1x128xf32>
    %197 = arith.addf %190, %196 : vector<1x128xf32>
    %198 = arith.subf %181, %197 : vector<1x128xf32>
    %c0_53 = arith.constant 0 : index
    %c2 = arith.constant 2 : index
    %c0_54 = arith.constant 0 : index
    %c0_55 = arith.constant 0 : index
    %199 = vector.load %arg11[%c0_53, %c2, %c0_54, %c0_55] : memref<1x6x2x128xf32, #tpu.memory_space<vmem>>, vector<1x1x1x128xf32>
    %200 = vector.shape_cast %199 : vector<1x1x1x128xf32> to vector<1x128xf32>
    %201 = vector.shape_cast %198 : vector<1x128xf32> to vector<1x1x1x128xf32>
    tpu.vector_store %arg11[%c0_53, %c2, %c0_54, %c0_55], %201 {strides = array<i32>} : memref<1x6x2x128xf32, #tpu.memory_space<vmem>>, vector<1x1x1x128xf32>,
    %202 = arith.subf %189, %197 : vector<1x128xf32>
    %c0_56 = arith.constant 0 : index
    %c2_57 = arith.constant 2 : index
    %c1_58 = arith.constant 1 : index
    %c0_59 = arith.constant 0 : index
    %203 = vector.load %arg11[%c0_56, %c2_57, %c1_58, %c0_59] : memref<1x6x2x128xf32, #tpu.memory_space<vmem>>, vector<1x1x1x128xf32>
    %204 = vector.shape_cast %203 : vector<1x1x1x128xf32> to vector<1x128xf32>
    %205 = vector.shape_cast %202 : vector<1x128xf32> to vector<1x1x1x128xf32>
    tpu.vector_store %arg11[%c0_56, %c2_57, %c1_58, %c0_59], %205 {strides = array<i32>} : memref<1x6x2x128xf32, #tpu.memory_space<vmem>>, vector<1x1x1x128xf32>,
    %206 = vector.extract_strided_slice %14 {offsets = [0, 384], sizes = [96, 128], strides = [1, 1]} : vector<96x768xf32> to vector<96x128xf32>
    %207 = arith.truncf %173 : vector<32x128xf32> to vector<32x128xbf16>
    %cst_60 = arith.constant dense<0.000000e+00> : vector<96x128xf32>
    %208 = tpu.matmul %15, %207, %cst_60 {dimension_numbers = #tpu.dot_dimension_numbers<[1], [0], [0], [1], [0, 0, 1, 1], [], []>} : vector<96x32xbf16>, vector<32x128xbf16>, vector<96x128xf32> -> vector<96x128xf32>
    %209 = vector.extract_strided_slice %206 {offsets = [0, 0], sizes = [64, 128], strides = [1, 1]} : vector<96x128xf32> to vector<64x128xf32>
    %210 = vector.extract_strided_slice %208 {offsets = [0, 0], sizes = [64, 128], strides = [1, 1]} : vector<96x128xf32> to vector<64x128xf32>
    %211 = arith.addf %209, %210 : vector<64x128xf32>
    %212 = vector.broadcast %16 : vector<64x1xf32> to vector<64x128xf32>
    %213 = arith.addf %211, %212 : vector<64x128xf32>
    %214 = arith.negf %213 : vector<64x128xf32>
    %215 = math.exp %214 : vector<64x128xf32>
    %cst_61 = arith.constant 1.000000e+00 : f32
    %216 = vector.broadcast %cst_61 : f32 to vector<64x128xf32>
    %217 = arith.addf %216, %215 : vector<64x128xf32>
    %218 = arith.divf %216, %217 : vector<64x128xf32>
    %219 = vector.extract_strided_slice %218 {offsets = [0, 0], sizes = [32, 128], strides = [1, 1]} : vector<64x128xf32> to vector<32x128xf32>
    %220 = vector.extract_strided_slice %218 {offsets = [32, 0], sizes = [32, 128], strides = [1, 1]} : vector<64x128xf32> to vector<32x128xf32>
    %221 = vector.extract_strided_slice %206 {offsets = [64, 0], sizes = [32, 128], strides = [1, 1]} : vector<96x128xf32> to vector<32x128xf32>
    %222 = vector.broadcast %17 : vector<32x1xf32> to vector<32x128xf32>
    %223 = arith.addf %221, %222 : vector<32x128xf32>
    %224 = vector.extract_strided_slice %208 {offsets = [64, 0], sizes = [32, 128], strides = [1, 1]} : vector<96x128xf32> to vector<32x128xf32>
    %225 = vector.broadcast %18 : vector<32x1xf32> to vector<32x128xf32>
    %226 = arith.addf %224, %225 : vector<32x128xf32>
    %227 = arith.mulf %219, %226 : vector<32x128xf32>
    %228 = arith.addf %223, %227 : vector<32x128xf32>
    %229 = math.tanh %228 : vector<32x128xf32>
    %cst_62 = arith.constant 1.000000e+00 : f32
    %230 = vector.broadcast %cst_62 : f32 to vector<32x128xf32>
    %231 = arith.subf %230, %220 : vector<32x128xf32>
    %232 = arith.mulf %231, %229 : vector<32x128xf32>
    %233 = arith.mulf %220, %173 : vector<32x128xf32>
    %234 = arith.addf %232, %233 : vector<32x128xf32>
    %235 = vector.extract_strided_slice %19 {offsets = [0, 0], sizes = [32, 1], strides = [1, 1]} : vector<32x2xf32> to vector<32x1xf32>
    %236 = vector.broadcast %235 : vector<32x1xf32> to vector<32x128xf32>
    %237 = arith.mulf %234, %236 : vector<32x128xf32>
    %cst_63 = arith.constant dense<0.000000e+00> : vector<128xf32>
    %238 = vector.multi_reduction <add>, %237, %cst_63 [0] : vector<32x128xf32> to vector<128xf32>
    %239 = vector.shape_cast %238 : vector<128xf32> to vector<1x128xf32>
    %240 = vector.extract_strided_slice %20 {offsets = [0, 0], sizes = [1, 1], strides = [1, 1]} : vector<2x1xf32> to vector<1x1xf32>
    %241 = vector.broadcast %240 : vector<1x1xf32> to vector<1x128xf32>
    %242 = arith.addf %239, %241 : vector<1x128xf32>
    %243 = vector.extract_strided_slice %19 {offsets = [0, 1], sizes = [32, 1], strides = [1, 1]} : vector<32x2xf32> to vector<32x1xf32>
    %244 = vector.broadcast %243 : vector<32x1xf32> to vector<32x128xf32>
    %245 = arith.mulf %234, %244 : vector<32x128xf32>
    %cst_64 = arith.constant dense<0.000000e+00> : vector<128xf32>
    %246 = vector.multi_reduction <add>, %245, %cst_64 [0] : vector<32x128xf32> to vector<128xf32>
    %247 = vector.shape_cast %246 : vector<128xf32> to vector<1x128xf32>
    %248 = vector.extract_strided_slice %20 {offsets = [1, 0], sizes = [1, 1], strides = [1, 1]} : vector<2x1xf32> to vector<1x1xf32>
    %249 = vector.broadcast %248 : vector<1x1xf32> to vector<1x128xf32>
    %250 = arith.addf %247, %249 : vector<1x128xf32>
    %251 = arith.maximumf %242, %250 : vector<1x128xf32>
    %252 = arith.subf %242, %251 : vector<1x128xf32>
    %253 = math.exp %252 : vector<1x128xf32>
    %254 = arith.subf %250, %251 : vector<1x128xf32>
    %255 = math.exp %254 : vector<1x128xf32>
    %256 = arith.addf %253, %255 : vector<1x128xf32>
    %257 = math.log %256 : vector<1x128xf32>
    %258 = arith.addf %251, %257 : vector<1x128xf32>
    %259 = arith.subf %242, %258 : vector<1x128xf32>
    %c0_65 = arith.constant 0 : index
    %c3 = arith.constant 3 : index
    %c0_66 = arith.constant 0 : index
    %c0_67 = arith.constant 0 : index
    %260 = vector.load %arg11[%c0_65, %c3, %c0_66, %c0_67] : memref<1x6x2x128xf32, #tpu.memory_space<vmem>>, vector<1x1x1x128xf32>
    %261 = vector.shape_cast %260 : vector<1x1x1x128xf32> to vector<1x128xf32>
    %262 = vector.shape_cast %259 : vector<1x128xf32> to vector<1x1x1x128xf32>
    tpu.vector_store %arg11[%c0_65, %c3, %c0_66, %c0_67], %262 {strides = array<i32>} : memref<1x6x2x128xf32, #tpu.memory_space<vmem>>, vector<1x1x1x128xf32>,
    %263 = arith.subf %250, %258 : vector<1x128xf32>
    %c0_68 = arith.constant 0 : index
    %c3_69 = arith.constant 3 : index
    %c1_70 = arith.constant 1 : index
    %c0_71 = arith.constant 0 : index
    %264 = vector.load %arg11[%c0_68, %c3_69, %c1_70, %c0_71] : memref<1x6x2x128xf32, #tpu.memory_space<vmem>>, vector<1x1x1x128xf32>
    %265 = vector.shape_cast %264 : vector<1x1x1x128xf32> to vector<1x128xf32>
    %266 = vector.shape_cast %263 : vector<1x128xf32> to vector<1x1x1x128xf32>
    tpu.vector_store %arg11[%c0_68, %c3_69, %c1_70, %c0_71], %266 {strides = array<i32>} : memref<1x6x2x128xf32, #tpu.memory_space<vmem>>, vector<1x1x1x128xf32>,
    %267 = vector.extract_strided_slice %14 {offsets = [0, 512], sizes = [96, 128], strides = [1, 1]} : vector<96x768xf32> to vector<96x128xf32>
    %268 = arith.truncf %234 : vector<32x128xf32> to vector<32x128xbf16>
    %cst_72 = arith.constant dense<0.000000e+00> : vector<96x128xf32>
    %269 = tpu.matmul %15, %268, %cst_72 {dimension_numbers = #tpu.dot_dimension_numbers<[1], [0], [0], [1], [0, 0, 1, 1], [], []>} : vector<96x32xbf16>, vector<32x128xbf16>, vector<96x128xf32> -> vector<96x128xf32>
    %270 = vector.extract_strided_slice %267 {offsets = [0, 0], sizes = [64, 128], strides = [1, 1]} : vector<96x128xf32> to vector<64x128xf32>
    %271 = vector.extract_strided_slice %269 {offsets = [0, 0], sizes = [64, 128], strides = [1, 1]} : vector<96x128xf32> to vector<64x128xf32>
    %272 = arith.addf %270, %271 : vector<64x128xf32>
    %273 = vector.broadcast %16 : vector<64x1xf32> to vector<64x128xf32>
    %274 = arith.addf %272, %273 : vector<64x128xf32>
    %275 = arith.negf %274 : vector<64x128xf32>
    %276 = math.exp %275 : vector<64x128xf32>
    %cst_73 = arith.constant 1.000000e+00 : f32
    %277 = vector.broadcast %cst_73 : f32 to vector<64x128xf32>
    %278 = arith.addf %277, %276 : vector<64x128xf32>
    %279 = arith.divf %277, %278 : vector<64x128xf32>
    %280 = vector.extract_strided_slice %279 {offsets = [0, 0], sizes = [32, 128], strides = [1, 1]} : vector<64x128xf32> to vector<32x128xf32>
    %281 = vector.extract_strided_slice %279 {offsets = [32, 0], sizes = [32, 128], strides = [1, 1]} : vector<64x128xf32> to vector<32x128xf32>
    %282 = vector.extract_strided_slice %267 {offsets = [64, 0], sizes = [32, 128], strides = [1, 1]} : vector<96x128xf32> to vector<32x128xf32>
    %283 = vector.broadcast %17 : vector<32x1xf32> to vector<32x128xf32>
    %284 = arith.addf %282, %283 : vector<32x128xf32>
    %285 = vector.extract_strided_slice %269 {offsets = [64, 0], sizes = [32, 128], strides = [1, 1]} : vector<96x128xf32> to vector<32x128xf32>
    %286 = vector.broadcast %18 : vector<32x1xf32> to vector<32x128xf32>
    %287 = arith.addf %285, %286 : vector<32x128xf32>
    %288 = arith.mulf %280, %287 : vector<32x128xf32>
    %289 = arith.addf %284, %288 : vector<32x128xf32>
    %290 = math.tanh %289 : vector<32x128xf32>
    %cst_74 = arith.constant 1.000000e+00 : f32
    %291 = vector.broadcast %cst_74 : f32 to vector<32x128xf32>
    %292 = arith.subf %291, %281 : vector<32x128xf32>
    %293 = arith.mulf %292, %290 : vector<32x128xf32>
    %294 = arith.mulf %281, %234 : vector<32x128xf32>
    %295 = arith.addf %293, %294 : vector<32x128xf32>
    %296 = vector.extract_strided_slice %19 {offsets = [0, 0], sizes = [32, 1], strides = [1, 1]} : vector<32x2xf32> to vector<32x1xf32>
    %297 = vector.broadcast %296 : vector<32x1xf32> to vector<32x128xf32>
    %298 = arith.mulf %295, %297 : vector<32x128xf32>
    %cst_75 = arith.constant dense<0.000000e+00> : vector<128xf32>
    %299 = vector.multi_reduction <add>, %298, %cst_75 [0] : vector<32x128xf32> to vector<128xf32>
    %300 = vector.shape_cast %299 : vector<128xf32> to vector<1x128xf32>
    %301 = vector.extract_strided_slice %20 {offsets = [0, 0], sizes = [1, 1], strides = [1, 1]} : vector<2x1xf32> to vector<1x1xf32>
    %302 = vector.broadcast %301 : vector<1x1xf32> to vector<1x128xf32>
    %303 = arith.addf %300, %302 : vector<1x128xf32>
    %304 = vector.extract_strided_slice %19 {offsets = [0, 1], sizes = [32, 1], strides = [1, 1]} : vector<32x2xf32> to vector<32x1xf32>
    %305 = vector.broadcast %304 : vector<32x1xf32> to vector<32x128xf32>
    %306 = arith.mulf %295, %305 : vector<32x128xf32>
    %cst_76 = arith.constant dense<0.000000e+00> : vector<128xf32>
    %307 = vector.multi_reduction <add>, %306, %cst_76 [0] : vector<32x128xf32> to vector<128xf32>
    %308 = vector.shape_cast %307 : vector<128xf32> to vector<1x128xf32>
    %309 = vector.extract_strided_slice %20 {offsets = [1, 0], sizes = [1, 1], strides = [1, 1]} : vector<2x1xf32> to vector<1x1xf32>
    %310 = vector.broadcast %309 : vector<1x1xf32> to vector<1x128xf32>
    %311 = arith.addf %308, %310 : vector<1x128xf32>
    %312 = arith.maximumf %303, %311 : vector<1x128xf32>
    %313 = arith.subf %303, %312 : vector<1x128xf32>
    %314 = math.exp %313 : vector<1x128xf32>
    %315 = arith.subf %311, %312 : vector<1x128xf32>
    %316 = math.exp %315 : vector<1x128xf32>
    %317 = arith.addf %314, %316 : vector<1x128xf32>
    %318 = math.log %317 : vector<1x128xf32>
    %319 = arith.addf %312, %318 : vector<1x128xf32>
    %320 = arith.subf %303, %319 : vector<1x128xf32>
    %c0_77 = arith.constant 0 : index
    %c4 = arith.constant 4 : index
    %c0_78 = arith.constant 0 : index
    %c0_79 = arith.constant 0 : index
    %321 = vector.load %arg11[%c0_77, %c4, %c0_78, %c0_79] : memref<1x6x2x128xf32, #tpu.memory_space<vmem>>, vector<1x1x1x128xf32>
    %322 = vector.shape_cast %321 : vector<1x1x1x128xf32> to vector<1x128xf32>
    %323 = vector.shape_cast %320 : vector<1x128xf32> to vector<1x1x1x128xf32>
    tpu.vector_store %arg11[%c0_77, %c4, %c0_78, %c0_79], %323 {strides = array<i32>} : memref<1x6x2x128xf32, #tpu.memory_space<vmem>>, vector<1x1x1x128xf32>,
    %324 = arith.subf %311, %319 : vector<1x128xf32>
    %c0_80 = arith.constant 0 : index
    %c4_81 = arith.constant 4 : index
    %c1_82 = arith.constant 1 : index
    %c0_83 = arith.constant 0 : index
    %325 = vector.load %arg11[%c0_80, %c4_81, %c1_82, %c0_83] : memref<1x6x2x128xf32, #tpu.memory_space<vmem>>, vector<1x1x1x128xf32>
    %326 = vector.shape_cast %325 : vector<1x1x1x128xf32> to vector<1x128xf32>
    %327 = vector.shape_cast %324 : vector<1x128xf32> to vector<1x1x1x128xf32>
    tpu.vector_store %arg11[%c0_80, %c4_81, %c1_82, %c0_83], %327 {strides = array<i32>} : memref<1x6x2x128xf32, #tpu.memory_space<vmem>>, vector<1x1x1x128xf32>,
    %328 = vector.extract_strided_slice %14 {offsets = [0, 640], sizes = [96, 128], strides = [1, 1]} : vector<96x768xf32> to vector<96x128xf32>
    %329 = arith.truncf %295 : vector<32x128xf32> to vector<32x128xbf16>
    %cst_84 = arith.constant dense<0.000000e+00> : vector<96x128xf32>
    %330 = tpu.matmul %15, %329, %cst_84 {dimension_numbers = #tpu.dot_dimension_numbers<[1], [0], [0], [1], [0, 0, 1, 1], [], []>} : vector<96x32xbf16>, vector<32x128xbf16>, vector<96x128xf32> -> vector<96x128xf32>
    %331 = vector.extract_strided_slice %328 {offsets = [0, 0], sizes = [64, 128], strides = [1, 1]} : vector<96x128xf32> to vector<64x128xf32>
    %332 = vector.extract_strided_slice %330 {offsets = [0, 0], sizes = [64, 128], strides = [1, 1]} : vector<96x128xf32> to vector<64x128xf32>
    %333 = arith.addf %331, %332 : vector<64x128xf32>
    %334 = vector.broadcast %16 : vector<64x1xf32> to vector<64x128xf32>
    %335 = arith.addf %333, %334 : vector<64x128xf32>
    %336 = arith.negf %335 : vector<64x128xf32>
    %337 = math.exp %336 : vector<64x128xf32>
    %cst_85 = arith.constant 1.000000e+00 : f32
    %338 = vector.broadcast %cst_85 : f32 to vector<64x128xf32>
    %339 = arith.addf %338, %337 : vector<64x128xf32>
    %340 = arith.divf %338, %339 : vector<64x128xf32>
    %341 = vector.extract_strided_slice %340 {offsets = [0, 0], sizes = [32, 128], strides = [1, 1]} : vector<64x128xf32> to vector<32x128xf32>
    %342 = vector.extract_strided_slice %340 {offsets = [32, 0], sizes = [32, 128], strides = [1, 1]} : vector<64x128xf32> to vector<32x128xf32>
    %343 = vector.extract_strided_slice %328 {offsets = [64, 0], sizes = [32, 128], strides = [1, 1]} : vector<96x128xf32> to vector<32x128xf32>
    %344 = vector.broadcast %17 : vector<32x1xf32> to vector<32x128xf32>
    %345 = arith.addf %343, %344 : vector<32x128xf32>
    %346 = vector.extract_strided_slice %330 {offsets = [64, 0], sizes = [32, 128], strides = [1, 1]} : vector<96x128xf32> to vector<32x128xf32>
    %347 = vector.broadcast %18 : vector<32x1xf32> to vector<32x128xf32>
    %348 = arith.addf %346, %347 : vector<32x128xf32>
    %349 = arith.mulf %341, %348 : vector<32x128xf32>
    %350 = arith.addf %345, %349 : vector<32x128xf32>
    %351 = math.tanh %350 : vector<32x128xf32>
    %cst_86 = arith.constant 1.000000e+00 : f32
    %352 = vector.broadcast %cst_86 : f32 to vector<32x128xf32>
    %353 = arith.subf %352, %342 : vector<32x128xf32>
    %354 = arith.mulf %353, %351 : vector<32x128xf32>
    %355 = arith.mulf %342, %295 : vector<32x128xf32>
    %356 = arith.addf %354, %355 : vector<32x128xf32>
    %357 = vector.extract_strided_slice %19 {offsets = [0, 0], sizes = [32, 1], strides = [1, 1]} : vector<32x2xf32> to vector<32x1xf32>
    %358 = vector.broadcast %357 : vector<32x1xf32> to vector<32x128xf32>
    %359 = arith.mulf %356, %358 : vector<32x128xf32>
    %cst_87 = arith.constant dense<0.000000e+00> : vector<128xf32>
    %360 = vector.multi_reduction <add>, %359, %cst_87 [0] : vector<32x128xf32> to vector<128xf32>
    %361 = vector.shape_cast %360 : vector<128xf32> to vector<1x128xf32>
    %362 = vector.extract_strided_slice %20 {offsets = [0, 0], sizes = [1, 1], strides = [1, 1]} : vector<2x1xf32> to vector<1x1xf32>
    %363 = vector.broadcast %362 : vector<1x1xf32> to vector<1x128xf32>
    %364 = arith.addf %361, %363 : vector<1x128xf32>
    %365 = vector.extract_strided_slice %19 {offsets = [0, 1], sizes = [32, 1], strides = [1, 1]} : vector<32x2xf32> to vector<32x1xf32>
    %366 = vector.broadcast %365 : vector<32x1xf32> to vector<32x128xf32>
    %367 = arith.mulf %356, %366 : vector<32x128xf32>
    %cst_88 = arith.constant dense<0.000000e+00> : vector<128xf32>
    %368 = vector.multi_reduction <add>, %367, %cst_88 [0] : vector<32x128xf32> to vector<128xf32>
    %369 = vector.shape_cast %368 : vector<128xf32> to vector<1x128xf32>
    %370 = vector.extract_strided_slice %20 {offsets = [1, 0], sizes = [1, 1], strides = [1, 1]} : vector<2x1xf32> to vector<1x1xf32>
    %371 = vector.broadcast %370 : vector<1x1xf32> to vector<1x128xf32>
    %372 = arith.addf %369, %371 : vector<1x128xf32>
    %373 = arith.maximumf %364, %372 : vector<1x128xf32>
    %374 = arith.subf %364, %373 : vector<1x128xf32>
    %375 = math.exp %374 : vector<1x128xf32>
    %376 = arith.subf %372, %373 : vector<1x128xf32>
    %377 = math.exp %376 : vector<1x128xf32>
    %378 = arith.addf %375, %377 : vector<1x128xf32>
    %379 = math.log %378 : vector<1x128xf32>
    %380 = arith.addf %373, %379 : vector<1x128xf32>
    %381 = arith.subf %364, %380 : vector<1x128xf32>
    %c0_89 = arith.constant 0 : index
    %c5 = arith.constant 5 : index
    %c0_90 = arith.constant 0 : index
    %c0_91 = arith.constant 0 : index
    %382 = vector.load %arg11[%c0_89, %c5, %c0_90, %c0_91] : memref<1x6x2x128xf32, #tpu.memory_space<vmem>>, vector<1x1x1x128xf32>
    %383 = vector.shape_cast %382 : vector<1x1x1x128xf32> to vector<1x128xf32>
    %384 = vector.shape_cast %381 : vector<1x128xf32> to vector<1x1x1x128xf32>
    tpu.vector_store %arg11[%c0_89, %c5, %c0_90, %c0_91], %384 {strides = array<i32>} : memref<1x6x2x128xf32, #tpu.memory_space<vmem>>, vector<1x1x1x128xf32>,
    %385 = arith.subf %372, %380 : vector<1x128xf32>
    %c0_92 = arith.constant 0 : index
    %c5_93 = arith.constant 5 : index
    %c1_94 = arith.constant 1 : index
    %c0_95 = arith.constant 0 : index
    %386 = vector.load %arg11[%c0_92, %c5_93, %c1_94, %c0_95] : memref<1x6x2x128xf32, #tpu.memory_space<vmem>>, vector<1x1x1x128xf32>
    %387 = vector.shape_cast %386 : vector<1x1x1x128xf32> to vector<1x128xf32>
    %388 = vector.shape_cast %385 : vector<1x128xf32> to vector<1x1x1x128xf32>
    tpu.vector_store %arg11[%c0_92, %c5_93, %c1_94, %c0_95], %388 {strides = array<i32>} : memref<1x6x2x128xf32, #tpu.memory_space<vmem>>, vector<1x1x1x128xf32>,
    %c0_96 = arith.constant 0 : index
    %c0_97 = arith.constant 0 : index
    %c0_98 = arith.constant 0 : index
    %389 = vector.load %arg12[%c0_96, %c0_97, %c0_98] : memref<1x32x128xf32, #tpu.memory_space<vmem>>, vector<1x32x128xf32>
    %390 = vector.shape_cast %389 : vector<1x32x128xf32> to vector<32x128xf32>
    %391 = vector.shape_cast %356 : vector<32x128xf32> to vector<1x32x128xf32>
    tpu.vector_store %arg12[%c0_96, %c0_97, %c0_98], %391 {strides = array<i32>} : memref<1x32x128xf32, #tpu.memory_space<vmem>>, vector<1x32x128xf32>,
    return
  }
  func.func @transform_0(%arg0: i32) -> (i32, i32, i32) {
    %c0_i32 = arith.constant 0 : i32
    %c0_i32_0 = arith.constant 0 : i32
    %c0_i32_1 = arith.constant 0 : i32
    return %arg0, %c0_i32, %c0_i32_0 : i32, i32, i32
  }
  func.func @transform_1(%arg0: i32) -> (i32, i32, i32) {
    %c0_i32 = arith.constant 0 : i32
    %c0_i32_0 = arith.constant 0 : i32
    %c0_i32_1 = arith.constant 0 : i32
    return %arg0, %c0_i32, %c0_i32_0 : i32, i32, i32
  }
  func.func @transform_2(%arg0: i32) -> (i32, i32) {
    %c0_i32 = arith.constant 0 : i32
    %c0_i32_0 = arith.constant 0 : i32
    %c0_i32_1 = arith.constant 0 : i32
    return %c0_i32, %c0_i32_0 : i32, i32
  }
  func.func @transform_3(%arg0: i32) -> (i32, i32) {
    %c0_i32 = arith.constant 0 : i32
    %c0_i32_0 = arith.constant 0 : i32
    %c0_i32_1 = arith.constant 0 : i32
    return %c0_i32, %c0_i32_0 : i32, i32
  }
  func.func @transform_4(%arg0: i32) -> (i32, i32) {
    %c0_i32 = arith.constant 0 : i32
    %c0_i32_0 = arith.constant 0 : i32
    %c0_i32_1 = arith.constant 0 : i32
    return %c0_i32, %c0_i32_0 : i32, i32
  }
  func.func @transform_5(%arg0: i32) -> (i32, i32) {
    %c0_i32 = arith.constant 0 : i32
    %c0_i32_0 = arith.constant 0 : i32
    %c0_i32_1 = arith.constant 0 : i32
    return %c0_i32, %c0_i32_0 : i32, i32
  }
  func.func @transform_6(%arg0: i32) -> (i32, i32) {
    %c0_i32 = arith.constant 0 : i32
    %c0_i32_0 = arith.constant 0 : i32
    %c0_i32_1 = arith.constant 0 : i32
    return %c0_i32, %c0_i32_0 : i32, i32
  }
  func.func @transform_7(%arg0: i32) -> (i32, i32) {
    %c0_i32 = arith.constant 0 : i32
    %c0_i32_0 = arith.constant 0 : i32
    %c0_i32_1 = arith.constant 0 : i32
    return %c0_i32, %c0_i32_0 : i32, i32
  }
  func.func @transform_8(%arg0: i32) -> (i32, i32) {
    %c0_i32 = arith.constant 0 : i32
    %c0_i32_0 = arith.constant 0 : i32
    %c0_i32_1 = arith.constant 0 : i32
    return %c0_i32, %c0_i32_0 : i32, i32
  }
  func.func @transform_9(%arg0: i32) -> (i32, i32) {
    %c0_i32 = arith.constant 0 : i32
    %c0_i32_0 = arith.constant 0 : i32
    %c0_i32_1 = arith.constant 0 : i32
    return %c0_i32, %c0_i32_0 : i32, i32
  }
  func.func @transform_10(%arg0: i32) -> (i32, i32, i32, i32) {
    %c0_i32 = arith.constant 0 : i32
    %c0_i32_0 = arith.constant 0 : i32
    %c0_i32_1 = arith.constant 0 : i32
    %c0_i32_2 = arith.constant 0 : i32
    return %arg0, %c0_i32, %c0_i32_0, %c0_i32_1 : i32, i32, i32, i32
  }
  func.func @transform_11(%arg0: i32) -> (i32, i32, i32) {
    %c0_i32 = arith.constant 0 : i32
    %c0_i32_0 = arith.constant 0 : i32
    %c0_i32_1 = arith.constant 0 : i32
    return %arg0, %c0_i32, %c0_i32_0 : i32, i32, i32
  }
}

</mosaic_0001>

<llo_original>
// kernel: answer_rnn_forward_seq.1
$region0: #{answer_rnn_forward_seq.1}
  #allocation0 [shape = 'u32[]', space=smem, size = 0x4, offset = 0x4, fixed_abs, tag = 'smem constant byte address 0x4 - core index']
  #allocation1 [shape = 'u32[72,128]{1,0:T(1,128)}', space=vmem, size = 0x9000, scoped, tag = 'internal scratch']
  %s0 = inlined_call_operand.vmem [shape: s32[1,1,768], index: 0, kind: input, shape index: {}]
  %s1 = inlined_call_operand.vmem [shape: f32[1,32,128], index: 1, kind: input, shape index: {}]
  %s2 = inlined_call_operand.vmem [shape: bf16[32,128], index: 2, kind: input, shape index: {}]
  %s3 = inlined_call_operand.vmem [shape: bf16[96,32], index: 3, kind: input, shape index: {}]
  %s4 = inlined_call_operand.vmem [shape: bf16[96,32], index: 4, kind: input, shape index: {}]
  %s5 = inlined_call_operand.vmem [shape: f32[64,1], index: 5, kind: input, shape index: {}]
  %s6 = inlined_call_operand.vmem [shape: f32[32,1], index: 6, kind: input, shape index: {}]
  %s7 = inlined_call_operand.vmem [shape: f32[32,1], index: 7, kind: input, shape index: {}]
  %s8 = inlined_call_operand.vmem [shape: f32[32,2], index: 8, kind: input, shape index: {}]
  %s9 = inlined_call_operand.vmem [shape: f32[2,1], index: 9, kind: input, shape index: {}]
  %s10 = inlined_call_operand.vmem [shape: f32[1,6,2,128], index: 10, kind: output, shape index: {0}]
  %s11 = inlined_call_operand.vmem [shape: f32[1,32,128], index: 11, kind: output, shape index: {1}]
  %12 = xla_tuple %s10, %s11
  %s13 = sld [smem:[#allocation0]]
  $region58: #{answer_rnn_forward_seq.1} parent=0
    _
  %s15 = ssub.s32 1, %s13
  %s16 = scalar_select 0, %s15, %s13
  // Predicated region
  $region2: #{answer_rnn_forward_seq.1} parent=0 // pred_check
    _
  $region3: #{answer_rnn_forward_seq.1} parent=0 // pred_check_branch
    %18 = sbr.rel (0) target = $region5
  $region4: #{answer_rnn_forward_seq.1} parent=0 // pred_region
    _
  $region5: #{answer_rnn_forward_seq.1} parent=0 // pred_fallthru
    _
  // Predicated region
  $region6: #{answer_rnn_forward_seq.1} parent=0 // pred_check
    _
  $region7: #{answer_rnn_forward_seq.1} parent=0 // pred_check_branch
    %20 = sbr.rel (0) target = $region9
  $region8: #{answer_rnn_forward_seq.1} parent=0 // pred_region
    _
  $region9: #{answer_rnn_forward_seq.1} parent=0 // pred_fallthru
    _
  // Predicated region
  $region10: #{answer_rnn_forward_seq.1} parent=0 // pred_check
    _
  $region11: #{answer_rnn_forward_seq.1} parent=0 // pred_check_branch
    %22 = sbr.rel (0) target = $region13
  $region12: #{answer_rnn_forward_seq.1} parent=0 // pred_region
    _
  $region13: #{answer_rnn_forward_seq.1} parent=0 // pred_fallthru
    _
  // Predicated region
  $region14: #{answer_rnn_forward_seq.1} parent=0 // pred_check
    _
  $region15: #{answer_rnn_forward_seq.1} parent=0 // pred_check_branch
    %24 = sbr.rel (0) target = $region17
  $region16: #{answer_rnn_forward_seq.1} parent=0 // pred_region
    _
  $region17: #{answer_rnn_forward_seq.1} parent=0 // pred_fallthru
    _
  // Predicated region
  $region18: #{answer_rnn_forward_seq.1} parent=0 // pred_check
    _
  $region19: #{answer_rnn_forward_seq.1} parent=0 // pred_check_branch
    %26 = sbr.rel (0) target = $region21
  $region20: #{answer_rnn_forward_seq.1} parent=0 // pred_region
    _
  $region21: #{answer_rnn_forward_seq.1} parent=0 // pred_fallthru
    _
  // Predicated region
  $region22: #{answer_rnn_forward_seq.1} parent=0 // pred_check
    _
  $region23: #{answer_rnn_forward_seq.1} parent=0 // pred_check_branch
    %28 = sbr.rel (0) target = $region25
  $region24: #{answer_rnn_forward_seq.1} parent=0 // pred_region
    _
  $region25: #{answer_rnn_forward_seq.1} parent=0 // pred_fallthru
    _
  // Predicated region
  $region26: #{answer_rnn_forward_seq.1} parent=0 // pred_check
    _
  $region27: #{answer_rnn_forward_seq.1} parent=0 // pred_check_branch
    %30 = sbr.rel (0) target = $region29
  $region28: #{answer_rnn_forward_seq.1} parent=0 // pred_region
    _
  $region29: #{answer_rnn_forward_seq.1} parent=0 // pred_fallthru
    _
  // Predicated region
  $region30: #{answer_rnn_forward_seq.1} parent=0 // pred_check
    _
  $region31: #{answer_rnn_forward_seq.1} parent=0 // pred_check_branch
    %32 = sbr.rel (0) target = $region33
  $region32: #{answer_rnn_forward_seq.1} parent=0 // pred_region
    _
  $region33: #{answer_rnn_forward_seq.1} parent=0 // pred_fallthru
    _
  // Predicated region
  $region34: #{answer_rnn_forward_seq.1} parent=0 // pred_check
    _
  $region35: #{answer_rnn_forward_seq.1} parent=0 // pred_check_branch
    %34 = sbr.rel (0) target = $region37
  $region36: #{answer_rnn_forward_seq.1} parent=0 // pred_region
    _
  $region37: #{answer_rnn_forward_seq.1} parent=0 // pred_fallthru
    _
  // Predicated region
  $region38: #{answer_rnn_forward_seq.1} parent=0 // pred_check
    _
  $region39: #{answer_rnn_forward_seq.1} parent=0 // pred_check_branch
    %36 = sbr.rel (0) target = $region41
  $region40: #{answer_rnn_forward_seq.1} parent=0 // pred_region
    _
  $region41: #{answer_rnn_forward_seq.1} parent=0 // pred_fallthru
    _
  %v38 = vld [vmem:[%s0] sm:$0x3f]
  %v39 = vlaneseq
  %v40 = vshrl.u32 %v39, 7
  %v41 = vadd.s32 %v40, 8
  %v42 = vadd.s32 %v40, 16
  %v43 = vadd.s32 %v40, 24
  %v44 = vadd.s32 %v40, 32
  %v45 = vadd.s32 %v40, 40
  %v46 = vadd.s32 %v40, 48
  %v47 = vadd.s32 %v40, 56
  %v48 = vadd.s32 %v40, 64
  %v49 = vadd.s32 %v40, 72
  %v50 = vadd.s32 %v40, 80
  %v51 = vadd.s32 %v40, 88
  %v52 = vadd.s32 %v40, 96
  %v53 = vadd.s32 %v40, 104
  %v54 = vadd.s32 %v40, 112
  %v55 = vadd.s32 %v40, 120
  %v56 = vperm.slane %v38, 0
  %v57 = vperm.slane %v38, 1
  %v58 = vperm.slane %v38, 2
  %v59 = vperm.slane %v38, 3
  %v60 = vperm.slane %v38, 4
  %v61 = vperm.slane %v38, 5
  %vm62 = vcmp.eq.s32.totalorder %v40, %v56
  %vm63 = vcmp.eq.s32.totalorder %v40, %v57
  %vm64 = vcmp.eq.s32.totalorder %v40, %v58
  %vm65 = vcmp.eq.s32.totalorder %v40, %v59
  %vm66 = vcmp.eq.s32.totalorder %v40, %v60
  %vm67 = vcmp.eq.s32.totalorder %v40, %v61
  %vm68 = vcmp.eq.s32.totalorder %v41, %v56
  %vm69 = vcmp.eq.s32.totalorder %v41, %v57
  %vm70 = vcmp.eq.s32.totalorder %v41, %v58
  %vm71 = vcmp.eq.s32.totalorder %v41, %v59
  %vm72 = vcmp.eq.s32.totalorder %v41, %v60
  %vm73 = vcmp.eq.s32.totalorder %v41, %v61
  %vm74 = vcmp.eq.s32.totalorder %v42, %v56
  %vm75 = vcmp.eq.s32.totalorder %v42, %v57
  %vm76 = vcmp.eq.s32.totalorder %v42, %v58
  %vm77 = vcmp.eq.s32.totalorder %v42, %v59
  %vm78 = vcmp.eq.s32.totalorder %v42, %v60
  %vm79 = vcmp.eq.s32.totalorder %v42, %v61
  %vm80 = vcmp.eq.s32.totalorder %v43, %v56
  %vm81 = vcmp.eq.s32.totalorder %v43, %v57
  %vm82 = vcmp.eq.s32.totalorder %v43, %v58
  %vm83 = vcmp.eq.s32.totalorder %v43, %v59
  %vm84 = vcmp.eq.s32.totalorder %v43, %v60
  %vm85 = vcmp.eq.s32.totalorder %v43, %v61
  %vm86 = vcmp.eq.s32.totalorder %v44, %v56
  %vm87 = vcmp.eq.s32.totalorder %v44, %v57
  %vm88 = vcmp.eq.s32.totalorder %v44, %v58
  %vm89 = vcmp.eq.s32.totalorder %v44, %v59
  %vm90 = vcmp.eq.s32.totalorder %v44, %v60
  %vm91 = vcmp.eq.s32.totalorder %v44, %v61
  %vm92 = vcmp.eq.s32.totalorder %v45, %v56
  %vm93 = vcmp.eq.s32.totalorder %v45, %v57
  %vm94 = vcmp.eq.s32.totalorder %v45, %v58
  %vm95 = vcmp.eq.s32.totalorder %v45, %v59
  %vm96 = vcmp.eq.s32.totalorder %v45, %v60
  %vm97 = vcmp.eq.s32.totalorder %v45, %v61
  %vm98 = vcmp.eq.s32.totalorder %v46, %v56
  %vm99 = vcmp.eq.s32.totalorder %v46, %v57
  %vm100 = vcmp.eq.s32.totalorder %v46, %v58
  %vm101 = vcmp.eq.s32.totalorder %v46, %v59
  %vm102 = vcmp.eq.s32.totalorder %v46, %v60
  %vm103 = vcmp.eq.s32.totalorder %v46, %v61
  %vm104 = vcmp.eq.s32.totalorder %v47, %v56
  %vm105 = vcmp.eq.s32.totalorder %v47, %v57
  %vm106 = vcmp.eq.s32.totalorder %v47, %v58
  %vm107 = vcmp.eq.s32.totalorder %v47, %v59
  %vm108 = vcmp.eq.s32.totalorder %v47, %v60
  %vm109 = vcmp.eq.s32.totalorder %v47, %v61
  %vm110 = vcmp.eq.s32.totalorder %v48, %v56
  %vm111 = vcmp.eq.s32.totalorder %v48, %v57
  %vm112 = vcmp.eq.s32.totalorder %v48, %v58
  %vm113 = vcmp.eq.s32.totalorder %v48, %v59
  %vm114 = vcmp.eq.s32.totalorder %v48, %v60
  %vm115 = vcmp.eq.s32.totalorder %v48, %v61
  %vm116 = vcmp.eq.s32.totalorder %v49, %v56
  %vm117 = vcmp.eq.s32.totalorder %v49, %v57
  %vm118 = vcmp.eq.s32.totalorder %v49, %v58
  %vm119 = vcmp.eq.s32.totalorder %v49, %v59
  %vm120 = vcmp.eq.s32.totalorder %v49, %v60
  %vm121 = vcmp.eq.s32.totalorder %v49, %v61
  %vm122 = vcmp.eq.s32.totalorder %v50, %v56
  %vm123 = vcmp.eq.s32.totalorder %v50, %v57
  %vm124 = vcmp.eq.s32.totalorder %v50, %v58
  %vm125 = vcmp.eq.s32.totalorder %v50, %v59
  %vm126 = vcmp.eq.s32.totalorder %v50, %v60
  %vm127 = vcmp.eq.s32.totalorder %v50, %v61
  %vm128 = vcmp.eq.s32.totalorder %v51, %v56
  %vm129 = vcmp.eq.s32.totalorder %v51, %v57
  %vm130 = vcmp.eq.s32.totalorder %v51, %v58
  %vm131 = vcmp.eq.s32.totalorder %v51, %v59
  %vm132 = vcmp.eq.s32.totalorder %v51, %v60
  %vm133 = vcmp.eq.s32.totalorder %v51, %v61
  %vm134 = vcmp.eq.s32.totalorder %v52, %v56
  %vm135 = vcmp.eq.s32.totalorder %v52, %v57
  %vm136 = vcmp.eq.s32.totalorder %v52, %v58
  %vm137 = vcmp.eq.s32.totalorder %v52, %v59
  %vm138 = vcmp.eq.s32.totalorder %v52, %v60
  %vm139 = vcmp.eq.s32.totalorder %v52, %v61
  %vm140 = vcmp.eq.s32.totalorder %v53, %v56
  %vm141 = vcmp.eq.s32.totalorder %v53, %v57
  %vm142 = vcmp.eq.s32.totalorder %v53, %v58
  %vm143 = vcmp.eq.s32.totalorder %v53, %v59
  %vm144 = vcmp.eq.s32.totalorder %v53, %v60
  %vm145 = vcmp.eq.s32.totalorder %v53, %v61
  %vm146 = vcmp.eq.s32.totalorder %v54, %v56
  %vm147 = vcmp.eq.s32.totalorder %v54, %v57
  %vm148 = vcmp.eq.s32.totalorder %v54, %v58
  %vm149 = vcmp.eq.s32.totalorder %v54, %v59
  %vm150 = vcmp.eq.s32.totalorder %v54, %v60
  %vm151 = vcmp.eq.s32.totalorder %v54, %v61
  %vm152 = vcmp.eq.s32.totalorder %v55, %v56
  %vm153 = vcmp.eq.s32.totalorder %v55, %v57
  %vm154 = vcmp.eq.s32.totalorder %v55, %v58
  %vm155 = vcmp.eq.s32.totalorder %v55, %v59
  %vm156 = vcmp.eq.s32.totalorder %v55, %v60
  %vm157 = vcmp.eq.s32.totalorder %v55, %v61
  %v158 = vsel %vm62, 1, 0
  %v159 = vsel %vm63, 1, 0
  %v160 = vsel %vm64, 1, 0
  %v161 = vsel %vm65, 1, 0
  %v162 = vsel %vm66, 1, 0
  %v163 = vsel %vm67, 1, 0
  %v164 = vsel %vm68, 1, 0
  %v165 = vsel %vm69, 1, 0
  %v166 = vsel %vm70, 1, 0
  %v167 = vsel %vm71, 1, 0
  %v168 = vsel %vm72, 1, 0
  %v169 = vsel %vm73, 1, 0
  %v170 = vsel %vm74, 1, 0
  %v171 = vsel %vm75, 1, 0
  %v172 = vsel %vm76, 1, 0
  %v173 = vsel %vm77, 1, 0
  %v174 = vsel %vm78, 1, 0
  %v175 = vsel %vm79, 1, 0
  %v176 = vsel %vm80, 1, 0
  %v177 = vsel %vm81, 1, 0
  %v178 = vsel %vm82, 1, 0
  %v179 = vsel %vm83, 1, 0
  %v180 = vsel %vm84, 1, 0
  %v181 = vsel %vm85, 1, 0
  %v182 = vsel %vm86, 1, 0
  %v183 = vsel %vm87, 1, 0
  %v184 = vsel %vm88, 1, 0
  %v185 = vsel %vm89, 1, 0
  %v186 = vsel %vm90, 1, 0
  %v187 = vsel %vm91, 1, 0
  %v188 = vsel %vm92, 1, 0
  %v189 = vsel %vm93, 1, 0
  %v190 = vsel %vm94, 1, 0
  %v191 = vsel %vm95, 1, 0
  %v192 = vsel %vm96, 1, 0
  %v193 = vsel %vm97, 1, 0
  %v194 = vsel %vm98, 1, 0
  %v195 = vsel %vm99, 1, 0
  %v196 = vsel %vm100, 1, 0
  %v197 = vsel %vm101, 1, 0
  %v198 = vsel %vm102, 1, 0
  %v199 = vsel %vm103, 1, 0
  %v200 = vsel %vm104, 1, 0
  %v201 = vsel %vm105, 1, 0
  %v202 = vsel %vm106, 1, 0
  %v203 = vsel %vm107, 1, 0
  %v204 = vsel %vm108, 1, 0
  %v205 = vsel %vm109, 1, 0
  %v206 = vsel %vm110, 1, 0
  %v207 = vsel %vm111, 1, 0
  %v208 = vsel %vm112, 1, 0
  %v209 = vsel %vm113, 1, 0
  %v210 = vsel %vm114, 1, 0
  %v211 = vsel %vm115, 1, 0
  %v212 = vsel %vm116, 1, 0
  %v213 = vsel %vm117, 1, 0
  %v214 = vsel %vm118, 1, 0
  %v215 = vsel %vm119, 1, 0
  %v216 = vsel %vm120, 1, 0
  %v217 = vsel %vm121, 1, 0
  %v218 = vsel %vm122, 1, 0
  %v219 = vsel %vm123, 1, 0
  %v220 = vsel %vm124, 1, 0
  %v221 = vsel %vm125, 1, 0
  %v222 = vsel %vm126, 1, 0
  %v223 = vsel %vm127, 1, 0
  %v224 = vsel %vm128, 1, 0
  %v225 = vsel %vm129, 1, 0
  %v226 = vsel %vm130, 1, 0
  %v227 = vsel %vm131, 1, 0
  %v228 = vsel %vm132, 1, 0
  %v229 = vsel %vm133, 1, 0
  %v230 = vsel %vm134, 1, 0
  %v231 = vsel %vm135, 1, 0
  %v232 = vsel %vm136, 1, 0
  %v233 = vsel %vm137, 1, 0
  %v234 = vsel %vm138, 1, 0
  %v235 = vsel %vm139, 1, 0
  %v236 = vsel %vm140, 1, 0
  %v237 = vsel %vm141, 1, 0
  %v238 = vsel %vm142, 1, 0
  %v239 = vsel %vm143, 1, 0
  %v240 = vsel %vm144, 1, 0
  %v241 = vsel %vm145, 1, 0
  %v242 = vsel %vm146, 1, 0
  %v243 = vsel %vm147, 1, 0
  %v244 = vsel %vm148, 1, 0
  %v245 = vsel %vm149, 1, 0
  %v246 = vsel %vm150, 1, 0
  %v247 = vsel %vm151, 1, 0
  %v248 = vsel %vm152, 1, 0
  %v249 = vsel %vm153, 1, 0
  %v250 = vsel %vm154, 1, 0
  %v251 = vsel %vm155, 1, 0
  %v252 = vsel %vm156, 1, 0
  %v253 = vsel %vm157, 1, 0
  %v254 = vcvt.s32.f32 %v158
  %v255 = vcvt.s32.f32 %v159
  %v256 = vcvt.s32.f32 %v160
  %v257 = vcvt.s32.f32 %v161
  %v258 = vcvt.s32.f32 %v162
  %v259 = vcvt.s32.f32 %v163
  %v260 = vcvt.s32.f32 %v164
  %v261 = vcvt.s32.f32 %v165
  %v262 = vcvt.s32.f32 %v166
  %v263 = vcvt.s32.f32 %v167
  %v264 = vcvt.s32.f32 %v168
  %v265 = vcvt.s32.f32 %v169
  %v266 = vcvt.s32.f32 %v170
  %v267 = vcvt.s32.f32 %v171
  %v268 = vcvt.s32.f32 %v172
  %v269 = vcvt.s32.f32 %v173
  %v270 = vcvt.s32.f32 %v174
  %v271 = vcvt.s32.f32 %v175
  %v272 = vcvt.s32.f32 %v176
  %v273 = vcvt.s32.f32 %v177
  %v274 = vcvt.s32.f32 %v178
  %v275 = vcvt.s32.f32 %v179
  %v276 = vcvt.s32.f32 %v180
  %v277 = vcvt.s32.f32 %v181
  %v278 = vcvt.s32.f32 %v182
  %v279 = vcvt.s32.f32 %v183
  %v280 = vcvt.s32.f32 %v184
  %v281 = vcvt.s32.f32 %v185
  %v282 = vcvt.s32.f32 %v186
  %v283 = vcvt.s32.f32 %v187
  %v284 = vcvt.s32.f32 %v188
  %v285 = vcvt.s32.f32 %v189
  %v286 = vcvt.s32.f32 %v190
  %v287 = vcvt.s32.f32 %v191
  %v288 = vcvt.s32.f32 %v192
  %v289 = vcvt.s32.f32 %v193
  %v290 = vcvt.s32.f32 %v194
  %v291 = vcvt.s32.f32 %v195
  %v292 = vcvt.s32.f32 %v196
  %v293 = vcvt.s32.f32 %v197
  %v294 = vcvt.s32.f32 %v198
  %v295 = vcvt.s32.f32 %v199
  %v296 = vcvt.s32.f32 %v200
  %v297 = vcvt.s32.f32 %v201
  %v298 = vcvt.s32.f32 %v202
  %v299 = vcvt.s32.f32 %v203
  %v300 = vcvt.s32.f32 %v204
  %v301 = vcvt.s32.f32 %v205
  %v302 = vcvt.s32.f32 %v206
  %v303 = vcvt.s32.f32 %v207
  %v304 = vcvt.s32.f32 %v208
  %v305 = vcvt.s32.f32 %v209
  %v306 = vcvt.s32.f32 %v210
  %v307 = vcvt.s32.f32 %v211
  %v308 = vcvt.s32.f32 %v212
  %v309 = vcvt.s32.f32 %v213
  %v310 = vcvt.s32.f32 %v214
  %v311 = vcvt.s32.f32 %v215
  %v312 = vcvt.s32.f32 %v216
  %v313 = vcvt.s32.f32 %v217
  %v314 = vcvt.s32.f32 %v218
  %v315 = vcvt.s32.f32 %v219
  %v316 = vcvt.s32.f32 %v220
  %v317 = vcvt.s32.f32 %v221
  %v318 = vcvt.s32.f32 %v222
  %v319 = vcvt.s32.f32 %v223
  %v320 = vcvt.s32.f32 %v224
  %v321 = vcvt.s32.f32 %v225
  %v322 = vcvt.s32.f32 %v226
  %v323 = vcvt.s32.f32 %v227
  %v324 = vcvt.s32.f32 %v228
  %v325 = vcvt.s32.f32 %v229
  %v326 = vcvt.s32.f32 %v230
  %v327 = vcvt.s32.f32 %v231
  %v328 = vcvt.s32.f32 %v232
  %v329 = vcvt.s32.f32 %v233
  %v330 = vcvt.s32.f32 %v234
  %v331 = vcvt.s32.f32 %v235
  %v332 = vcvt.s32.f32 %v236
  %v333 = vcvt.s32.f32 %v237
  %v334 = vcvt.s32.f32 %v238
  %v335 = vcvt.s32.f32 %v239
  %v336 = vcvt.s32.f32 %v240
  %v337 = vcvt.s32.f32 %v241
  %v338 = vcvt.s32.f32 %v242
  %v339 = vcvt.s32.f32 %v243
  %v340 = vcvt.s32.f32 %v244
  %v341 = vcvt.s32.f32 %v245
  %v342 = vcvt.s32.f32 %v246
  %v343 = vcvt.s32.f32 %v247
  %v344 = vcvt.s32.f32 %v248
  %v345 = vcvt.s32.f32 %v249
  %v346 = vcvt.s32.f32 %v250
  %v347 = vcvt.s32.f32 %v251
  %v348 = vcvt.s32.f32 %v252
  %v349 = vcvt.s32.f32 %v253
  %v350 = vpack.c.bf16 %v260, %v254
  %v351 = vpack.c.bf16 %v261, %v255
  %v352 = vpack.c.bf16 %v262, %v256
  %v353 = vpack.c.bf16 %v263, %v257
  %v354 = vpack.c.bf16 %v264, %v258
  %v355 = vpack.c.bf16 %v265, %v259
  %v356 = vpack.c.bf16 %v272, %v266
  %v357 = vpack.c.bf16 %v273, %v267
  %v358 = vpack.c.bf16 %v274, %v268
  %v359 = vpack.c.bf16 %v275, %v269
  %v360 = vpack.c.bf16 %v276, %v270
  %v361 = vpack.c.bf16 %v277, %v271
  %v362 = vpack.c.bf16 %v284, %v278
  %v363 = vpack.c.bf16 %v285, %v279
  %v364 = vpack.c.bf16 %v286, %v280
  %v365 = vpack.c.bf16 %v287, %v281
  %v366 = vpack.c.bf16 %v288, %v282
  %v367 = vpack.c.bf16 %v289, %v283
  %v368 = vpack.c.bf16 %v296, %v290
  %v369 = vpack.c.bf16 %v297, %v291
  %v370 = vpack.c.bf16 %v298, %v292
  %v371 = vpack.c.bf16 %v299, %v293
  %v372 = vpack.c.bf16 %v300, %v294
  %v373 = vpack.c.bf16 %v301, %v295
  %v374 = vpack.c.bf16 %v308, %v302
  %v375 = vpack.c.bf16 %v309, %v303
  %v376 = vpack.c.bf16 %v310, %v304
  %v377 = vpack.c.bf16 %v311, %v305
  %v378 = vpack.c.bf16 %v312, %v306
  %v379 = vpack.c.bf16 %v313, %v307
  %v380 = vpack.c.bf16 %v320, %v314
  %v381 = vpack.c.bf16 %v321, %v315
  %v382 = vpack.c.bf16 %v322, %v316
  %v383 = vpack.c.bf16 %v323, %v317
  %v384 = vpack.c.bf16 %v324, %v318
  %v385 = vpack.c.bf16 %v325, %v319
  %v386 = vpack.c.bf16 %v332, %v326
  %v387 = vpack.c.bf16 %v333, %v327
  %v388 = vpack.c.bf16 %v334, %v328
  %v389 = vpack.c.bf16 %v335, %v329
  %v390 = vpack.c.bf16 %v336, %v330
  %v391 = vpack.c.bf16 %v337, %v331
  %v392 = vpack.c.bf16 %v344, %v338
  %v393 = vpack.c.bf16 %v345, %v339
  %v394 = vpack.c.bf16 %v346, %v340
  %v395 = vpack.c.bf16 %v347, %v341
  %v396 = vpack.c.bf16 %v348, %v342
  %v397 = vpack.c.bf16 %v349, %v343
  %v398 = vld [vmem:[%s2] sm:$0xf]
  %v399 = vld [vmem:[%s2 + $0x4] sm:$0xf]
  %v400 = vld [vmem:[%s2 + $0x8] sm:$0xf]
  %v401 = vld [vmem:[%s2 + $0xc] sm:$0xf]
  %v406 = vunpack.c.l.b16 %v398
  %v407 = vunpack.c.l.b16 %v399
  %v408 = vunpack.c.l.b16 %v400
  %v409 = vunpack.c.l.b16 %v401
  %v410 = vpack.c.b16 %v407, %v406
  %v411 = vpack.c.b16 %v409, %v408
  %414 = vmatpush.bf16.msra.mxu0 %v392
  %415 = vmatpush.bf16.msra.mxu0 %v386
  %416 = vmatpush.bf16.msra.mxu0 %v380
  %417 = vmatpush.bf16.msra.mxu0 %v374
  %418 = vmatpush.bf16.msra.mxu0 %v368
  %419 = vmatpush.bf16.msra.mxu0 %v362
  %420 = vmatpush.bf16.msra.mxu0 %v356
  %421 = vmatpush.bf16.msra.mxu0 %v350
  %422 = vmatmul.bf16.gmra.mxu0 %v410
  %v423 = vpop.f32.mrf.mxu0
  %v424 = vadd.f32 0.0, %v423
  %v425 = vpop.f32.mrf.mxu0
  %v426 = vadd.f32 0.0, %v425
  %427 = vmatmul.bf16.gmra.mxu0 %v411
  %v428 = vpop.f32.mrf.mxu0
  %v429 = vadd.f32 0.0, %v428
  %v430 = vpop.f32.mrf.mxu0
  %v431 = vadd.f32 0.0, %v430
  %432 = vdwg.mxu0
  %433 = vmatpush.bf16.msra.mxu0 %v393
  %434 = vmatpush.bf16.msra.mxu0 %v387
  %435 = vmatpush.bf16.msra.mxu0 %v381
  %436 = vmatpush.bf16.msra.mxu0 %v375
  %437 = vmatpush.bf16.msra.mxu0 %v369
  %438 = vmatpush.bf16.msra.mxu0 %v363
  %439 = vmatpush.bf16.msra.mxu0 %v357
  %440 = vmatpush.bf16.msra.mxu0 %v351
  %441 = vmatmul.bf16.gmra.mxu0 %v410
  %v442 = vpop.f32.mrf.mxu0
  %v443 = vadd.f32 0.0, %v442
  %v444 = vpop.f32.mrf.mxu0
  %v445 = vadd.f32 0.0, %v444
  %446 = vmatmul.bf16.gmra.mxu0 %v411
  %v447 = vpop.f32.mrf.mxu0
  %v448 = vadd.f32 0.0, %v447
  %v449 = vpop.f32.mrf.mxu0
  %v450 = vadd.f32 0.0, %v449
  %451 = vdwg.mxu0
  %452 = vmatpush.bf16.msra.mxu0 %v394
  %453 = vmatpush.bf16.msra.mxu0 %v388
  %454 = vmatpush.bf16.msra.mxu0 %v382
  %455 = vmatpush.bf16.msra.mxu0 %v376
  %456 = vmatpush.bf16.msra.mxu0 %v370
  %457 = vmatpush.bf16.msra.mxu0 %v364
  %458 = vmatpush.bf16.msra.mxu0 %v358
  %459 = vmatpush.bf16.msra.mxu0 %v352
  %460 = vmatmul.bf16.gmra.mxu0 %v410
  %v461 = vpop.f32.mrf.mxu0
  %v462 = vadd.f32 0.0, %v461
  %v463 = vpop.f32.mrf.mxu0
  %v464 = vadd.f32 0.0, %v463
  %465 = vmatmul.bf16.gmra.mxu0 %v411
  %v466 = vpop.f32.mrf.mxu0
  %v467 = vadd.f32 0.0, %v466
  %v468 = vpop.f32.mrf.mxu0
  %v469 = vadd.f32 0.0, %v468
  %470 = vdwg.mxu0
  %471 = vmatpush.bf16.msra.mxu0 %v395
  %472 = vmatpush.bf16.msra.mxu0 %v389
  %473 = vmatpush.bf16.msra.mxu0 %v383
  %474 = vmatpush.bf16.msra.mxu0 %v377
  %475 = vmatpush.bf16.msra.mxu0 %v371
  %476 = vmatpush.bf16.msra.mxu0 %v365
  %477 = vmatpush.bf16.msra.mxu0 %v359
  %478 = vmatpush.bf16.msra.mxu0 %v353
  %479 = vmatmul.bf16.gmra.mxu0 %v410
  %v480 = vpop.f32.mrf.mxu0
  %v481 = vadd.f32 0.0, %v480
  %v482 = vpop.f32.mrf.mxu0
  %v483 = vadd.f32 0.0, %v482
  %484 = vmatmul.bf16.gmra.mxu0 %v411
  %v485 = vpop.f32.mrf.mxu0
  %v486 = vadd.f32 0.0, %v485
  %v487 = vpop.f32.mrf.mxu0
  %v488 = vadd.f32 0.0, %v487
  %489 = vdwg.mxu0
  %490 = vmatpush.bf16.msra.mxu0 %v396
  %491 = vmatpush.bf16.msra.mxu0 %v390
  %492 = vmatpush.bf16.msra.mxu0 %v384
  %493 = vmatpush.bf16.msra.mxu0 %v378
  %494 = vmatpush.bf16.msra.mxu0 %v372
  %495 = vmatpush.bf16.msra.mxu0 %v366
  %496 = vmatpush.bf16.msra.mxu0 %v360
  %497 = vmatpush.bf16.msra.mxu0 %v354
  %498 = vmatmul.bf16.gmra.mxu0 %v410
  %v499 = vpop.f32.mrf.mxu0
  %v500 = vadd.f32 0.0, %v499
  %v501 = vpop.f32.mrf.mxu0
  %v502 = vadd.f32 0.0, %v501
  %503 = vmatmul.bf16.gmra.mxu0 %v411
  %v504 = vpop.f32.mrf.mxu0
  %v505 = vadd.f32 0.0, %v504
  %v506 = vpop.f32.mrf.mxu0
  %v507 = vadd.f32 0.0, %v506
  %508 = vdwg.mxu0
  %509 = vmatpush.bf16.msra.mxu0 %v397
  %510 = vmatpush.bf16.msra.mxu0 %v391
  %511 = vmatpush.bf16.msra.mxu0 %v385
  %512 = vmatpush.bf16.msra.mxu0 %v379
  %513 = vmatpush.bf16.msra.mxu0 %v373
  %514 = vmatpush.bf16.msra.mxu0 %v367
  %515 = vmatpush.bf16.msra.mxu0 %v361
  %516 = vmatpush.bf16.msra.mxu0 %v355
  %517 = vmatmul.bf16.gmra.mxu0 %v410
  %v518 = vpop.f32.mrf.mxu0
  %v519 = vadd.f32 0.0, %v518
  %v520 = vpop.f32.mrf.mxu0
  %v521 = vadd.f32 0.0, %v520
  %522 = vmatmul.bf16.gmra.mxu0 %v411
  %v523 = vpop.f32.mrf.mxu0
  %v524 = vadd.f32 0.0, %v523
  %v525 = vpop.f32.mrf.mxu0
  %v526 = vadd.f32 0.0, %v525
  %527 = vdwg.mxu0
  %v528 = vmax.f32 %v424, 0.0
  %v529 = vmax.f32 %v443, 0.0
  %v530 = vmax.f32 %v462, 0.0
  %v531 = vmax.f32 %v481, 0.0
  %v532 = vmax.f32 %v500, 0.0
  %v533 = vmax.f32 %v519, 0.0
  %v534 = vmax.f32 %v426, 0.0
  %v535 = vmax.f32 %v445, 0.0
  %v536 = vmax.f32 %v464, 0.0
  %v537 = vmax.f32 %v483, 0.0
  %v538 = vmax.f32 %v502, 0.0
  %v539 = vmax.f32 %v521, 0.0
  %v540 = vmax.f32 %v429, 0.0
  %v541 = vmax.f32 %v448, 0.0
  %v542 = vmax.f32 %v467, 0.0
  %v543 = vmax.f32 %v486, 0.0
  %v544 = vmax.f32 %v505, 0.0
  %v545 = vmax.f32 %v524, 0.0
  %v546 = vmax.f32 %v431, 0.0
  %v547 = vmax.f32 %v450, 0.0
  %v548 = vmax.f32 %v469, 0.0
  %v549 = vmax.f32 %v488, 0.0
  %v550 = vmax.f32 %v507, 0.0
  %v551 = vmax.f32 %v526, 0.0
  %v552 = vld [vmem:[%s3] sm:$0xf]
  %v553 = vld [vmem:[%s3 + $0x4] sm:$0xf]
  %v554 = vld [vmem:[%s3 + $0x8] sm:$0xf]
  %v555 = vld [vmem:[%s3 + $0xc] sm:$0xf]
  %v556 = vld [vmem:[%s3 + $0x10] sm:$0xf]
  %v557 = vld [vmem:[%s3 + $0x14] sm:$0xf]
  %v558 = vld [vmem:[%s3 + $0x18] sm:$0xf]
  %v559 = vld [vmem:[%s3 + $0x1c] sm:$0xf]
  %v560 = vld [vmem:[%s3 + $0x20] sm:$0xf]
  %v561 = vld [vmem:[%s3 + $0x24] sm:$0xf]
  %v562 = vld [vmem:[%s3 + $0x28] sm:$0xf]
  %v563 = vld [vmem:[%s3 + $0x2c] sm:$0xf]
  %v564 = vpack.c.bf16 %v534, %v528
  %v565 = vpack.c.bf16 %v535, %v529
  %v566 = vpack.c.bf16 %v536, %v530
  %v567 = vpack.c.bf16 %v537, %v531
  %v568 = vpack.c.bf16 %v538, %v532
  %v569 = vpack.c.bf16 %v539, %v533
  %v570 = vpack.c.bf16 %v546, %v540
  %v571 = vpack.c.bf16 %v547, %v541
  %v572 = vpack.c.bf16 %v548, %v542
  %v573 = vpack.c.bf16 %v549, %v543
  %v574 = vpack.c.bf16 %v550, %v544
  %v575 = vpack.c.bf16 %v551, %v545
  %v588 = vunpack.c.l.b16 %v552
  %v589 = vunpack.c.l.b16 %v553
  %v590 = vunpack.c.l.b16 %v554
  %v591 = vunpack.c.l.b16 %v555
  %v592 = vunpack.c.l.b16 %v556
  %v593 = vunpack.c.l.b16 %v557
  %v594 = vunpack.c.l.b16 %v558
  %v595 = vunpack.c.l.b16 %v559
  %v596 = vunpack.c.l.b16 %v560
  %v597 = vunpack.c.l.b16 %v561
  %v598 = vunpack.c.l.b16 %v562
  %v599 = vunpack.c.l.b16 %v563
  %v600 = vpack.c.b16 %v589, %v588
  %v601 = vpack.c.b16 %v591, %v590
  %v602 = vpack.c.b16 %v593, %v592
  %v603 = vpack.c.b16 %v595, %v594
  %v604 = vpack.c.b16 %v597, %v596
  %v605 = vpack.c.b16 %v599, %v598
  %vm606 = vcmask 261120
  %v608 = vsel %vm606, %v600, 0
  %v611 = vsel %vm606, %v601, 0
  %v614 = vsel %vm606, %v602, 0
  %v617 = vsel %vm606, %v603, 0
  %v620 = vsel %vm606, %v604, 0
  %v623 = vsel %vm606, %v605, 0
  %625 = vmatpush.bf16.msra.mxu0 0
  %626 = vmatpush.bf16.msra.mxu0 0
  %627 = vmatpush.bf16.msra.mxu0 0
  %628 = vmatpush.bf16.msra.mxu0 0
  %629 = vmatpush.bf16.msra.mxu0 0
  %630 = vmatpush.bf16.msra.mxu0 0
  %631 = vmatpush.bf16.msra.mxu0 %v570
  %632 = vmatpush.bf16.msra.mxu0 %v564
  %633 = vmatmul.bf16.gmra.mxu0 %v608
  %v634 = vpop.f32.mrf.mxu0
  %v635 = vadd.f32 0.0, %v634
  %v636 = vpop.f32.mrf.mxu0
  %v637 = vadd.f32 0.0, %v636
  %638 = vmatmul.bf16.gmra.mxu0 %v611
  %v639 = vpop.f32.mrf.mxu0
  %v640 = vadd.f32 0.0, %v639
  %v641 = vpop.f32.mrf.mxu0
  %v642 = vadd.f32 0.0, %v641
  %643 = vmatmul.bf16.gmra.mxu0 %v614
  %v644 = vpop.f32.mrf.mxu0
  %v645 = vadd.f32 0.0, %v644
  %v646 = vpop.f32.mrf.mxu0
  %v647 = vadd.f32 0.0, %v646
  %648 = vmatmul.bf16.gmra.mxu0 %v617
  %v649 = vpop.f32.mrf.mxu0
  %v650 = vadd.f32 0.0, %v649
  %v651 = vpop.f32.mrf.mxu0
  %v652 = vadd.f32 0.0, %v651
  %653 = vmatmul.bf16.gmra.mxu0 %v620
  %v654 = vpop.f32.mrf.mxu0
  %v655 = vadd.f32 0.0, %v654
  %v656 = vpop.f32.mrf.mxu0
  %v657 = vadd.f32 0.0, %v656
  %658 = vmatmul.bf16.gmra.mxu0 %v623
  %v659 = vpop.f32.mrf.mxu0
  %v660 = vadd.f32 0.0, %v659
  %v661 = vpop.f32.mrf.mxu0
  %v662 = vadd.f32 0.0, %v661
  %663 = vdwg.mxu0
  %664 = vmatpush.bf16.msra.mxu0 0
  %665 = vmatpush.bf16.msra.mxu0 0
  %666 = vmatpush.bf16.msra.mxu0 0
  %667 = vmatpush.bf16.msra.mxu0 0
  %668 = vmatpush.bf16.msra.mxu0 0
  %669 = vmatpush.bf16.msra.mxu0 0
  %670 = vmatpush.bf16.msra.mxu0 %v571
  %671 = vmatpush.bf16.msra.mxu0 %v565
  %672 = vmatmul.bf16.gmra.mxu0 %v608
  %v673 = vpop.f32.mrf.mxu0
  %v674 = vadd.f32 0.0, %v673
  %v675 = vpop.f32.mrf.mxu0
  %v676 = vadd.f32 0.0, %v675
  %677 = vmatmul.bf16.gmra.mxu0 %v611
  %v678 = vpop.f32.mrf.mxu0
  %v679 = vadd.f32 0.0, %v678
  %v680 = vpop.f32.mrf.mxu0
  %v681 = vadd.f32 0.0, %v680
  %682 = vmatmul.bf16.gmra.mxu0 %v614
  %v683 = vpop.f32.mrf.mxu0
  %v684 = vadd.f32 0.0, %v683
  %v685 = vpop.f32.mrf.mxu0
  %v686 = vadd.f32 0.0, %v685
  %687 = vmatmul.bf16.gmra.mxu0 %v617
  %v688 = vpop.f32.mrf.mxu0
  %v689 = vadd.f32 0.0, %v688
  %v690 = vpop.f32.mrf.mxu0
  %v691 = vadd.f32 0.0, %v690
  %692 = vmatmul.bf16.gmra.mxu0 %v620
  %v693 = vpop.f32.mrf.mxu0
  %v694 = vadd.f32 0.0, %v693
  %v695 = vpop.f32.mrf.mxu0
  %v696 = vadd.f32 0.0, %v695
  %697 = vmatmul.bf16.gmra.mxu0 %v623
  %v698 = vpop.f32.mrf.mxu0
  %v699 = vadd.f32 0.0, %v698
  %v700 = vpop.f32.mrf.mxu0
  %v701 = vadd.f32 0.0, %v700
  %702 = vdwg.mxu0
  %703 = vmatpush.bf16.msra.mxu0 0
  %704 = vmatpush.bf16.msra.mxu0 0
  %705 = vmatpush.bf16.msra.mxu0 0
  %706 = vmatpush.bf16.msra.mxu0 0
  %707 = vmatpush.bf16.msra.mxu0 0
  %708 = vmatpush.bf16.msra.mxu0 0
  %709 = vmatpush.bf16.msra.mxu0 %v572
  %710 = vmatpush.bf16.msra.mxu0 %v566
  %711 = vmatmul.bf16.gmra.mxu0 %v608
  %v712 = vpop.f32.mrf.mxu0
  %v713 = vadd.f32 0.0, %v712
  %v714 = vpop.f32.mrf.mxu0
  %v715 = vadd.f32 0.0, %v714
  %716 = vmatmul.bf16.gmra.mxu0 %v611
  %v717 = vpop.f32.mrf.mxu0
  %v718 = vadd.f32 0.0, %v717
  %v719 = vpop.f32.mrf.mxu0
  %v720 = vadd.f32 0.0, %v719
  %721 = vmatmul.bf16.gmra.mxu0 %v614
  %v722 = vpop.f32.mrf.mxu0
  %v723 = vadd.f32 0.0, %v722
  %v724 = vpop.f32.mrf.mxu0
  %v725 = vadd.f32 0.0, %v724
  %726 = vmatmul.bf16.gmra.mxu0 %v617
  %v727 = vpop.f32.mrf.mxu0
  %v728 = vadd.f32 0.0, %v727
  %v729 = vpop.f32.mrf.mxu0
  %v730 = vadd.f32 0.0, %v729
  %731 = vmatmul.bf16.gmra.mxu0 %v620
  %v732 = vpop.f32.mrf.mxu0
  %v733 = vadd.f32 0.0, %v732
  %v734 = vpop.f32.mrf.mxu0
  %v735 = vadd.f32 0.0, %v734
  %736 = vmatmul.bf16.gmra.mxu0 %v623
  %v737 = vpop.f32.mrf.mxu0
  %v738 = vadd.f32 0.0, %v737
  %v739 = vpop.f32.mrf.mxu0
  %v740 = vadd.f32 0.0, %v739
  %741 = vdwg.mxu0
  %742 = vmatpush.bf16.msra.mxu0 0
  %743 = vmatpush.bf16.msra.mxu0 0
  %744 = vmatpush.bf16.msra.mxu0 0
  %745 = vmatpush.bf16.msra.mxu0 0
  %746 = vmatpush.bf16.msra.mxu0 0
  %747 = vmatpush.bf16.msra.mxu0 0
  %748 = vmatpush.bf16.msra.mxu0 %v573
  %749 = vmatpush.bf16.msra.mxu0 %v567
  %750 = vmatmul.bf16.gmra.mxu0 %v608
  %v751 = vpop.f32.mrf.mxu0
  %v752 = vadd.f32 0.0, %v751
  %v753 = vpop.f32.mrf.mxu0
  %v754 = vadd.f32 0.0, %v753
  %755 = vmatmul.bf16.gmra.mxu0 %v611
  %v756 = vpop.f32.mrf.mxu0
  %v757 = vadd.f32 0.0, %v756
  %v758 = vpop.f32.mrf.mxu0
  %v759 = vadd.f32 0.0, %v758
  %760 = vmatmul.bf16.gmra.mxu0 %v614
  %v761 = vpop.f32.mrf.mxu0
  %v762 = vadd.f32 0.0, %v761
  %v763 = vpop.f32.mrf.mxu0
  %v764 = vadd.f32 0.0, %v763
  %765 = vmatmul.bf16.gmra.mxu0 %v617
  %v766 = vpop.f32.mrf.mxu0
  %v767 = vadd.f32 0.0, %v766
  %v768 = vpop.f32.mrf.mxu0
  %v769 = vadd.f32 0.0, %v768
  %770 = vmatmul.bf16.gmra.mxu0 %v620
  %v771 = vpop.f32.mrf.mxu0
  %v772 = vadd.f32 0.0, %v771
  %v773 = vpop.f32.mrf.mxu0
  %v774 = vadd.f32 0.0, %v773
  %775 = vmatmul.bf16.gmra.mxu0 %v623
  %v776 = vpop.f32.mrf.mxu0
  %v777 = vadd.f32 0.0, %v776
  %v778 = vpop.f32.mrf.mxu0
  %v779 = vadd.f32 0.0, %v778
  %780 = vdwg.mxu0
  %781 = vmatpush.bf16.msra.mxu0 0
  %782 = vmatpush.bf16.msra.mxu0 0
  %783 = vmatpush.bf16.msra.mxu0 0
  %784 = vmatpush.bf16.msra.mxu0 0
  %785 = vmatpush.bf16.msra.mxu0 0
  %786 = vmatpush.bf16.msra.mxu0 0
  %787 = vmatpush.bf16.msra.mxu0 %v574
  %788 = vmatpush.bf16.msra.mxu0 %v568
  %789 = vmatmul.bf16.gmra.mxu0 %v608
  %v790 = vpop.f32.mrf.mxu0
  %v791 = vadd.f32 0.0, %v790
  %v792 = vpop.f32.mrf.mxu0
  %v793 = vadd.f32 0.0, %v792
  %794 = vmatmul.bf16.gmra.mxu0 %v611
  %v795 = vpop.f32.mrf.mxu0
  %v796 = vadd.f32 0.0, %v795
  %v797 = vpop.f32.mrf.mxu0
  %v798 = vadd.f32 0.0, %v797
  %799 = vmatmul.bf16.gmra.mxu0 %v614
  %v800 = vpop.f32.mrf.mxu0
  %v801 = vadd.f32 0.0, %v800
  %v802 = vpop.f32.mrf.mxu0
  %v803 = vadd.f32 0.0, %v802
  %804 = vmatmul.bf16.gmra.mxu0 %v617
  %v805 = vpop.f32.mrf.mxu0
  %v806 = vadd.f32 0.0, %v805
  %v807 = vpop.f32.mrf.mxu0
  %v808 = vadd.f32 0.0, %v807
  %809 = vmatmul.bf16.gmra.mxu0 %v620
  %v810 = vpop.f32.mrf.mxu0
  %v811 = vadd.f32 0.0, %v810
  %v812 = vpop.f32.mrf.mxu0
  %v813 = vadd.f32 0.0, %v812
  %814 = vmatmul.bf16.gmra.mxu0 %v623
  %v815 = vpop.f32.mrf.mxu0
  %v816 = vadd.f32 0.0, %v815
  %v817 = vpop.f32.mrf.mxu0
  %v818 = vadd.f32 0.0, %v817
  %819 = vdwg.mxu0
  %820 = vmatpush.bf16.msra.mxu0 0
  %821 = vmatpush.bf16.msra.mxu0 0
  %822 = vmatpush.bf16.msra.mxu0 0
  %823 = vmatpush.bf16.msra.mxu0 0
  %824 = vmatpush.bf16.msra.mxu0 0
  %825 = vmatpush.bf16.msra.mxu0 0
  %826 = vmatpush.bf16.msra.mxu0 %v575
  %827 = vmatpush.bf16.msra.mxu0 %v569
  %828 = vmatmul.bf16.gmra.mxu0 %v608
  %v829 = vpop.f32.mrf.mxu0
  %v830 = vadd.f32 0.0, %v829
  %v831 = vpop.f32.mrf.mxu0
  %v832 = vadd.f32 0.0, %v831
  %833 = vmatmul.bf16.gmra.mxu0 %v611
  %v834 = vpop.f32.mrf.mxu0
  %v835 = vadd.f32 0.0, %v834
  %v836 = vpop.f32.mrf.mxu0
  %v837 = vadd.f32 0.0, %v836
  %838 = vmatmul.bf16.gmra.mxu0 %v614
  %v839 = vpop.f32.mrf.mxu0
  %v840 = vadd.f32 0.0, %v839
  %v841 = vpop.f32.mrf.mxu0
  %v842 = vadd.f32 0.0, %v841
  %843 = vmatmul.bf16.gmra.mxu0 %v617
  %v844 = vpop.f32.mrf.mxu0
  %v845 = vadd.f32 0.0, %v844
  %v846 = vpop.f32.mrf.mxu0
  %v847 = vadd.f32 0.0, %v846
  %848 = vmatmul.bf16.gmra.mxu0 %v620
  %v849 = vpop.f32.mrf.mxu0
  %v850 = vadd.f32 0.0, %v849
  %v851 = vpop.f32.mrf.mxu0
  %v852 = vadd.f32 0.0, %v851
  %853 = vmatmul.bf16.gmra.mxu0 %v623
  %v854 = vpop.f32.mrf.mxu0
  %v855 = vadd.f32 0.0, %v854
  %v856 = vpop.f32.mrf.mxu0
  %v857 = vadd.f32 0.0, %v856
  %858 = vdwg.mxu0
  %v859 = vld [vmem:[%s4] sm:$0xf]
  %v860 = vld [vmem:[%s4 + $0x4] sm:$0xf]
  %v861 = vld [vmem:[%s4 + $0x8] sm:$0xf]
  %v862 = vld [vmem:[%s4 + $0xc] sm:$0xf]
  %v863 = vld [vmem:[%s4 + $0x10] sm:$0xf]
  %v864 = vld [vmem:[%s4 + $0x14] sm:$0xf]
  %v865 = vld [vmem:[%s4 + $0x18] sm:$0xf]
  %v866 = vld [vmem:[%s4 + $0x1c] sm:$0xf]
  %v867 = vld [vmem:[%s4 + $0x20] sm:$0xf]
  %v868 = vld [vmem:[%s4 + $0x24] sm:$0xf]
  %v869 = vld [vmem:[%s4 + $0x28] sm:$0xf]
  %v870 = vld [vmem:[%s4 + $0x2c] sm:$0xf]
  %v871 = vld [vmem:[%s5] sm:$0xff]
  %v872 = vld [vmem:[%s5 + $0x8] sm:$0xff]
  %v873 = vld [vmem:[%s5 + $0x10] sm:$0xff]
  %v874 = vld [vmem:[%s5 + $0x18] sm:$0xff]
  %v875 = vld [vmem:[%s5 + $0x20] sm:$0xff]
  %v876 = vld [vmem:[%s5 + $0x28] sm:$0xff]
  %v877 = vld [vmem:[%s5 + $0x30] sm:$0xff]
  %v878 = vld [vmem:[%s5 + $0x38] sm:$0xff]
  %v879 = vld [vmem:[%s6] sm:$0xff]
  %v880 = vld [vmem:[%s6 + $0x8] sm:$0xff]
  %v881 = vld [vmem:[%s6 + $0x10] sm:$0xff]
  %v882 = vld [vmem:[%s6 + $0x18] sm:$0xff]
  %v883 = vld [vmem:[%s7] sm:$0xff]
  %v884 = vld [vmem:[%s7 + $0x8] sm:$0xff]
  %v885 = vld [vmem:[%s7 + $0x10] sm:$0xff]
  %v886 = vld [vmem:[%s7 + $0x18] sm:$0xff]
  %v887 = vld [vmem:[%s8] sm:$0xff]
  %v888 = vld [vmem:[%s8 + $0x8] sm:$0xff]
  %v889 = vld [vmem:[%s8 + $0x10] sm:$0xff]
  %v890 = vld [vmem:[%s8 + $0x18] sm:$0xff]
  %v891 = vld [vmem:[%s9] sm:$0x3]
  %v892 = vld [vmem:[%s1] sm:$0xff]
  %v893 = vld [vmem:[%s1 + $0x8] sm:$0xff]
  %v894 = vld [vmem:[%s1 + $0x10] sm:$0xff]
  %v895 = vld [vmem:[%s1 + $0x18] sm:$0xff]
  %v896 = vpack.c.bf16 %v893, %v892
  %v897 = vpack.c.bf16 %v895, %v894
  %v910 = vunpack.c.l.b16 %v859
  %v911 = vunpack.c.l.b16 %v860
  %v912 = vunpack.c.l.b16 %v861
  %v913 = vunpack.c.l.b16 %v862
  %v914 = vunpack.c.l.b16 %v863
  %v915 = vunpack.c.l.b16 %v864
  %v916 = vunpack.c.l.b16 %v865
  %v917 = vunpack.c.l.b16 %v866
  %v918 = vunpack.c.l.b16 %v867
  %v919 = vunpack.c.l.b16 %v868
  %v920 = vunpack.c.l.b16 %v869
  %v921 = vunpack.c.l.b16 %v870
  %v922 = vpack.c.b16 %v911, %v910
  %v923 = vpack.c.b16 %v913, %v912
  %v924 = vpack.c.b16 %v915, %v914
  %v925 = vpack.c.b16 %v917, %v916
  %v926 = vpack.c.b16 %v919, %v918
  %v927 = vpack.c.b16 %v921, %v920
  %v929 = vsel %vm606, %v922, 0
  %v932 = vsel %vm606, %v923, 0
  %v935 = vsel %vm606, %v924, 0
  %v938 = vsel %vm606, %v925, 0
  %v941 = vsel %vm606, %v926, 0
  %v944 = vsel %vm606, %v927, 0
  %946 = vmatpush.bf16.msra.mxu0 0
  %947 = vmatpush.bf16.msra.mxu0 0
  %948 = vmatpush.bf16.msra.mxu0 0
  %949 = vmatpush.bf16.msra.mxu0 0
  %950 = vmatpush.bf16.msra.mxu0 0
  %951 = vmatpush.bf16.msra.mxu0 0
  %952 = vmatpush.bf16.msra.mxu0 %v897
  %953 = vmatpush.bf16.msra.mxu0 %v896
  %954 = vmatmul.bf16.gmra.mxu0 %v929
  %v955 = vpop.f32.mrf.mxu0
  %v956 = vadd.f32 0.0, %v955
  %v957 = vpop.f32.mrf.mxu0
  %v958 = vadd.f32 0.0, %v957
  %959 = vmatmul.bf16.gmra.mxu0 %v932
  %v960 = vpop.f32.mrf.mxu0
  %v961 = vadd.f32 0.0, %v960
  %v962 = vpop.f32.mrf.mxu0
  %v963 = vadd.f32 0.0, %v962
  %964 = vmatmul.bf16.gmra.mxu0 %v935
  %v965 = vpop.f32.mrf.mxu0
  %v966 = vadd.f32 0.0, %v965
  %v967 = vpop.f32.mrf.mxu0
  %v968 = vadd.f32 0.0, %v967
  %969 = vmatmul.bf16.gmra.mxu0 %v938
  %v970 = vpop.f32.mrf.mxu0
  %v971 = vadd.f32 0.0, %v970
  %v972 = vpop.f32.mrf.mxu0
  %v973 = vadd.f32 0.0, %v972
  %974 = vmatmul.bf16.gmra.mxu0 %v941
  %v975 = vpop.f32.mrf.mxu0
  %v976 = vadd.f32 0.0, %v975
  %v977 = vpop.f32.mrf.mxu0
  %v978 = vadd.f32 0.0, %v977
  %979 = vmatmul.bf16.gmra.mxu0 %v944
  %v980 = vpop.f32.mrf.mxu0
  %v981 = vadd.f32 0.0, %v980
  %v982 = vpop.f32.mrf.mxu0
  %v983 = vadd.f32 0.0, %v982
  %984 = vdwg.mxu0
  %v985 = vadd.f32 %v635, %v956
  %v986 = vadd.f32 %v637, %v958
  %v987 = vadd.f32 %v640, %v961
  %v988 = vadd.f32 %v642, %v963
  %v989 = vadd.f32 %v645, %v966
  %v990 = vadd.f32 %v647, %v968
  %v991 = vadd.f32 %v650, %v971
  %v992 = vadd.f32 %v652, %v973
  %994 = vset.pattern.permute.xlu0 0
  %995 = vperm.xlu0 %994, %v871
  %v996 = vpop.permute.xlu0 %995
  %999 = vset.pattern.permute.xlu0 0
  %1000 = vperm.xlu0 %999, %v872
  %v1001 = vpop.permute.xlu0 %1000
  %1004 = vset.pattern.permute.xlu0 0
  %1005 = vperm.xlu0 %1004, %v873
  %v1006 = vpop.permute.xlu0 %1005
  %1009 = vset.pattern.permute.xlu0 0
  %1010 = vperm.xlu0 %1009, %v874
  %v1011 = vpop.permute.xlu0 %1010
  %1014 = vset.pattern.permute.xlu0 0
  %1015 = vperm.xlu0 %1014, %v875
  %v1016 = vpop.permute.xlu0 %1015
  %1019 = vset.pattern.permute.xlu0 0
  %1020 = vperm.xlu0 %1019, %v876
  %v1021 = vpop.permute.xlu0 %1020
  %1024 = vset.pattern.permute.xlu0 0
  %1025 = vperm.xlu0 %1024, %v877
  %v1026 = vpop.permute.xlu0 %1025
  %1029 = vset.pattern.permute.xlu0 0
  %1030 = vperm.xlu0 %1029, %v878
  %v1031 = vpop.permute.xlu0 %1030
  %v1033 = vadd.f32 %v985, %v996
  %v1034 = vadd.f32 %v986, %v1001
  %v1035 = vadd.f32 %v987, %v1006
  %v1036 = vadd.f32 %v988, %v1011
  %v1037 = vadd.f32 %v989, %v1016
  %v1038 = vadd.f32 %v990, %v1021
  %v1039 = vadd.f32 %v991, %v1026
  %v1040 = vadd.f32 %v992, %v1031
  %v1041 = vxor.u32 %v1033, 2147483648
  %v1042 = vxor.u32 %v1034, 2147483648
  %v1043 = vxor.u32 %v1035, 2147483648
  %v1044 = vxor.u32 %v1036, 2147483648
  %v1045 = vxor.u32 %v1037, 2147483648
  %v1046 = vxor.u32 %v1038, 2147483648
  %v1047 = vxor.u32 %v1039, 2147483648
  %v1048 = vxor.u32 %v1040, 2147483648
  %v1049 = vmul.f32 %v1041, 1.442695
  %v1050 = vpow.pop %v1049
  %v1051 = vmul.f32 %v1042, 1.442695
  %v1052 = vpow.pop %v1051
  %v1053 = vmul.f32 %v1043, 1.442695
  %v1054 = vpow.pop %v1053
  %v1055 = vmul.f32 %v1044, 1.442695
  %v1056 = vpow.pop %v1055
  %v1057 = vmul.f32 %v1045, 1.442695
  %v1058 = vpow.pop %v1057
  %v1059 = vmul.f32 %v1046, 1.442695
  %v1060 = vpow.pop %v1059
  %v1061 = vmul.f32 %v1047, 1.442695
  %v1062 = vpow.pop %v1061
  %v1063 = vmul.f32 %v1048, 1.442695
  %v1064 = vpow.pop %v1063
  %v1065 = vadd.f32 %v1050, 1.0
  %v1066 = vadd.f32 %v1052, 1.0
  %v1067 = vadd.f32 %v1054, 1.0
  %v1068 = vadd.f32 %v1056, 1.0
  %v1069 = vadd.f32 %v1058, 1.0
  %v1070 = vadd.f32 %v1060, 1.0
  %v1071 = vadd.f32 %v1062, 1.0
  %v1072 = vadd.f32 %v1064, 1.0
  %v1073 = vrcp.pop %v1065
  %v1074 = vmul.f32 %v1065, %v1073
  %v1075 = vsub.f32 1.0, %v1074
  %v1076 = vmul.f32 %v1073, %v1075
  %v1077 = vadd.f32 %v1073, %v1076
  %vm1078 = vweird.f32 %v1065
  %vm1079 = vweird.f32 %v1073
  %vm1080 = vmor %vm1078, %vm1079
  %v1081 = vsel %vm1080, %v1073, %v1077
  %v1082 = vand.u32 2147483647, %v1065
  %vm1083 = vcmp.eq.f32.partialorder %v1082, 8.507059e+37
  %v1084 = vand.u32 %v1065, 2147483648
  %v1085 = vor.u32 1.1754944e-38, %v1084
  %v1086 = vsel %vm1083, %v1085, %v1081
  %v1087 = vmul.f32 1.0, %v1086
  %v1088 = vrcp.pop %v1066
  %v1089 = vmul.f32 %v1066, %v1088
  %v1090 = vsub.f32 1.0, %v1089
  %v1091 = vmul.f32 %v1088, %v1090
  %v1092 = vadd.f32 %v1088, %v1091
  %vm1093 = vweird.f32 %v1066
  %vm1094 = vweird.f32 %v1088
  %vm1095 = vmor %vm1093, %vm1094
  %v1096 = vsel %vm1095, %v1088, %v1092
  %v1097 = vand.u32 2147483647, %v1066
  %vm1098 = vcmp.eq.f32.partialorder %v1097, 8.507059e+37
  %v1099 = vand.u32 %v1066, 2147483648
  %v1100 = vor.u32 1.1754944e-38, %v1099
  %v1101 = vsel %vm1098, %v1100, %v1096
  %v1102 = vmul.f32 1.0, %v1101
  %v1103 = vrcp.pop %v1067
  %v1104 = vmul.f32 %v1067, %v1103
  %v1105 = vsub.f32 1.0, %v1104
  %v1106 = vmul.f32 %v1103, %v1105
  %v1107 = vadd.f32 %v1103, %v1106
  %vm1108 = vweird.f32 %v1067
  %vm1109 = vweird.f32 %v1103
  %vm1110 = vmor %vm1108, %vm1109
  %v1111 = vsel %vm1110, %v1103, %v1107
  %v1112 = vand.u32 2147483647, %v1067
  %vm1113 = vcmp.eq.f32.partialorder %v1112, 8.507059e+37
  %v1114 = vand.u32 %v1067, 2147483648
  %v1115 = vor.u32 1.1754944e-38, %v1114
  %v1116 = vsel %vm1113, %v1115, %v1111
  %v1117 = vmul.f32 1.0, %v1116
  %v1118 = vrcp.pop %v1068
  %v1119 = vmul.f32 %v1068, %v1118
  %v1120 = vsub.f32 1.0, %v1119
  %v1121 = vmul.f32 %v1118, %v1120
  %v1122 = vadd.f32 %v1118, %v1121
  %vm1123 = vweird.f32 %v1068
  %vm1124 = vweird.f32 %v1118
  %vm1125 = vmor %vm1123, %vm1124
  %v1126 = vsel %vm1125, %v1118, %v1122
  %v1127 = vand.u32 2147483647, %v1068
  %vm1128 = vcmp.eq.f32.partialorder %v1127, 8.507059e+37
  %v1129 = vand.u32 %v1068, 2147483648
  %v1130 = vor.u32 1.1754944e-38, %v1129
  %v1131 = vsel %vm1128, %v1130, %v1126
  %v1132 = vmul.f32 1.0, %v1131
  %v1133 = vrcp.pop %v1069
  %v1134 = vmul.f32 %v1069, %v1133
  %v1135 = vsub.f32 1.0, %v1134
  %v1136 = vmul.f32 %v1133, %v1135
  %v1137 = vadd.f32 %v1133, %v1136
  %vm1138 = vweird.f32 %v1069
  %vm1139 = vweird.f32 %v1133
  %vm1140 = vmor %vm1138, %vm1139
  %v1141 = vsel %vm1140, %v1133, %v1137
  %v1142 = vand.u32 2147483647, %v1069
  %vm1143 = vcmp.eq.f32.partialorder %v1142, 8.507059e+37
  %v1144 = vand.u32 %v1069, 2147483648
  %v1145 = vor.u32 1.1754944e-38, %v1144
  %v1146 = vsel %vm1143, %v1145, %v1141
  %v1147 = vmul.f32 1.0, %v1146
  %v1148 = vrcp.pop %v1070
  %v1149 = vmul.f32 %v1070, %v1148
  %v1150 = vsub.f32 1.0, %v1149
  %v1151 = vmul.f32 %v1148, %v1150
  %v1152 = vadd.f32 %v1148, %v1151
  %vm1153 = vweird.f32 %v1070
  %vm1154 = vweird.f32 %v1148
  %vm1155 = vmor %vm1153, %vm1154
  %v1156 = vsel %vm1155, %v1148, %v1152
  %v1157 = vand.u32 2147483647, %v1070
  %vm1158 = vcmp.eq.f32.partialorder %v1157, 8.507059e+37
  %v1159 = vand.u32 %v1070, 2147483648
  %v1160 = vor.u32 1.1754944e-38, %v1159
  %v1161 = vsel %vm1158, %v1160, %v1156
  %v1162 = vmul.f32 1.0, %v1161
  %v1163 = vrcp.pop %v1071
  %v1164 = vmul.f32 %v1071, %v1163
  %v1165 = vsub.f32 1.0, %v1164
  %v1166 = vmul.f32 %v1163, %v1165
  %v1167 = vadd.f32 %v1163, %v1166
  %vm1168 = vweird.f32 %v1071
  %vm1169 = vweird.f32 %v1163
  %vm1170 = vmor %vm1168, %vm1169
  %v1171 = vsel %vm1170, %v1163, %v1167
  %v1172 = vand.u32 2147483647, %v1071
  %vm1173 = vcmp.eq.f32.partialorder %v1172, 8.507059e+37
  %v1174 = vand.u32 %v1071, 2147483648
  %v1175 = vor.u32 1.1754944e-38, %v1174
  %v1176 = vsel %vm1173, %v1175, %v1171
  %v1177 = vmul.f32 1.0, %v1176
  %v1178 = vrcp.pop %v1072
  %v1179 = vmul.f32 %v1072, %v1178
  %v1180 = vsub.f32 1.0, %v1179
  %v1181 = vmul.f32 %v1178, %v1180
  %v1182 = vadd.f32 %v1178, %v1181
  %vm1183 = vweird.f32 %v1072
  %vm1184 = vweird.f32 %v1178
  %vm1185 = vmor %vm1183, %vm1184
  %v1186 = vsel %vm1185, %v1178, %v1182
  %v1187 = vand.u32 2147483647, %v1072
  %vm1188 = vcmp.eq.f32.partialorder %v1187, 8.507059e+37
  %v1189 = vand.u32 %v1072, 2147483648
  %v1190 = vor.u32 1.1754944e-38, %v1189
  %v1191 = vsel %vm1188, %v1190, %v1186
  %v1192 = vmul.f32 1.0, %v1191
  %1194 = vset.pattern.permute.xlu0 0
  %1195 = vperm.xlu0 %1194, %v879
  %v1196 = vpop.permute.xlu0 %1195
  %1199 = vset.pattern.permute.xlu0 0
  %1200 = vperm.xlu0 %1199, %v880
  %v1201 = vpop.permute.xlu0 %1200
  %1204 = vset.pattern.permute.xlu0 0
  %1205 = vperm.xlu0 %1204, %v881
  %v1206 = vpop.permute.xlu0 %1205
  %1209 = vset.pattern.permute.xlu0 0
  %1210 = vperm.xlu0 %1209, %v882
  %v1211 = vpop.permute.xlu0 %1210
  %v1213 = vadd.f32 %v655, %v1196
  %v1214 = vadd.f32 %v657, %v1201
  %v1215 = vadd.f32 %v660, %v1206
  %v1216 = vadd.f32 %v662, %v1211
  %1218 = vset.pattern.permute.xlu0 0
  %1219 = vperm.xlu0 %1218, %v883
  %v1220 = vpop.permute.xlu0 %1219
  %1223 = vset.pattern.permute.xlu0 0
  %1224 = vperm.xlu0 %1223, %v884
  %v1225 = vpop.permute.xlu0 %1224
  %1228 = vset.pattern.permute.xlu0 0
  %1229 = vperm.xlu0 %1228, %v885
  %v1230 = vpop.permute.xlu0 %1229
  %1233 = vset.pattern.permute.xlu0 0
  %1234 = vperm.xlu0 %1233, %v886
  %v1235 = vpop.permute.xlu0 %1234
  %v1237 = vadd.f32 %v976, %v1220
  %v1238 = vadd.f32 %v978, %v1225
  %v1239 = vadd.f32 %v981, %v1230
  %v1240 = vadd.f32 %v983, %v1235
  %v1241 = vmul.f32 %v1087, %v1237
  %v1242 = vmul.f32 %v1102, %v1238
  %v1243 = vmul.f32 %v1117, %v1239
  %v1244 = vmul.f32 %v1132, %v1240
  %v1245 = vadd.f32 %v1213, %v1241
  %v1246 = vadd.f32 %v1214, %v1242
  %v1247 = vadd.f32 %v1215, %v1243
  %v1248 = vadd.f32 %v1216, %v1244
  %v1249 = vtanh.pop %v1245
  %v1250 = vtanh.pop %v1246
  %v1251 = vtanh.pop %v1247
  %v1252 = vtanh.pop %v1248
  %v1253 = vsub.f32 1.0, %v1147
  %v1254 = vsub.f32 1.0, %v1162
  %v1255 = vsub.f32 1.0, %v1177
  %v1256 = vsub.f32 1.0, %v1192
  %v1257 = vmul.f32 %v1253, %v1249
  %v1258 = vmul.f32 %v1254, %v1250
  %v1259 = vmul.f32 %v1255, %v1251
  %v1260 = vmul.f32 %v1256, %v1252
  %v1261 = vmul.f32 %v1147, %v892
  %v1262 = vmul.f32 %v1162, %v893
  %v1263 = vmul.f32 %v1177, %v894
  %v1264 = vmul.f32 %v1192, %v895
  %v1265 = vadd.f32 %v1257, %v1261
  %v1266 = vadd.f32 %v1258, %v1262
  %v1267 = vadd.f32 %v1259, %v1263
  %v1268 = vadd.f32 %v1260, %v1264
  %1270 = vset.pattern.permute.xlu0 0
  %1271 = vperm.xlu0 %1270, %v887
  %v1272 = vpop.permute.xlu0 %1271
  %1275 = vset.pattern.permute.xlu0 0
  %1276 = vperm.xlu0 %1275, %v888
  %v1277 = vpop.permute.xlu0 %1276
  %1280 = vset.pattern.permute.xlu0 0
  %1281 = vperm.xlu0 %1280, %v889
  %v1282 = vpop.permute.xlu0 %1281
  %1285 = vset.pattern.permute.xlu0 0
  %1286 = vperm.xlu0 %1285, %v890
  %v1287 = vpop.permute.xlu0 %1286
  %v1289 = vmul.f32 %v1265, %v1272
  %v1290 = vmul.f32 %v1266, %v1277
  %v1291 = vmul.f32 %v1267, %v1282
  %v1292 = vmul.f32 %v1268, %v1287
  %v1293 = vadd.f32 %v1289, %v1290
  %v1294 = vadd.f32 %v1293, %v1291
  %v1295 = vadd.f32 %v1294, %v1292
  %v1296 = vrot.slane %v1295, 4
  %v1297 = vadd.f32 %v1295, %v1296
  %v1298 = vrot.slane %v1297, 2
  %v1299 = vadd.f32 %v1297, %v1298
  %v1300 = vrot.slane %v1299, 1
  %v1301 = vadd.f32 %v1299, %v1300
  %1303 = vset.pattern.permute.xlu0 0
  %1304 = vperm.xlu0 %1303, %v891
  %v1305 = vpop.permute.xlu0 %1304
  %v1307 = vadd.f32 %v1301, %v1305
  %1308 = vset.pattern.permute.xlu0 1
  %1309 = vperm.xlu0 %1308, %v887
  %v1310 = vpop.permute.xlu0 %1309
  %1312 = vset.pattern.permute.xlu0 1
  %1313 = vperm.xlu0 %1312, %v888
  %v1314 = vpop.permute.xlu0 %1313
  %1316 = vset.pattern.permute.xlu0 1
  %1317 = vperm.xlu0 %1316, %v889
  %v1318 = vpop.permute.xlu0 %1317
  %1320 = vset.pattern.permute.xlu0 1
  %1321 = vperm.xlu0 %1320, %v890
  %v1322 = vpop.permute.xlu0 %1321
  %v1324 = vmul.f32 %v1265, %v1310
  %v1325 = vmul.f32 %v1266, %v1314
  %v1326 = vmul.f32 %v1267, %v1318
  %v1327 = vmul.f32 %v1268, %v1322
  %v1328 = vadd.f32 %v1324, %v1325
  %v1329 = vadd.f32 %v1328, %v1326
  %v1330 = vadd.f32 %v1329, %v1327
  %v1331 = vrot.slane %v1330, 4
  %v1332 = vadd.f32 %v1330, %v1331
  %v1333 = vrot.slane %v1332, 2
  %v1334 = vadd.f32 %v1332, %v1333
  %v1335 = vrot.slane %v1334, 1
  %v1336 = vadd.f32 %v1334, %v1335
  %v1337 = vadd.f32 %v1336, %v1305
  %v1339 = vrot.slane %v1337, 1
  %v1341 = vmax.f32 %v1307, %v1339
  %v1342 = vsub.f32 %v1307, %v1341
  %v1343 = vmul.f32 %v1342, 1.442695
  %v1344 = vpow.pop %v1343
  %v1346 = vrot.slane %v1341, 7
  %v1348 = vsub.f32 %v1337, %v1346
  %v1349 = vmul.f32 %v1348, 1.442695
  %v1350 = vpow.pop %v1349
  %v1352 = vrot.slane %v1350, 1
  %v1354 = vadd.f32 %v1344, %v1352
  %v1355 = vlog2.pop %v1354
  %v1356 = vmul.f32 %v1355, 0.6931472
  %v1357 = vadd.f32 %v1341, %v1356
  %v1358 = vsub.f32 %v1307, %v1357
  %1359 = vst [vmem:[%s10] sm:$0x1] %v1358
  %v1361 = vrot.slane %v1357, 7
  %v1363 = vsub.f32 %v1337, %v1361
  %1364 = vst [vmem:[%s10] sm:$0x2] %v1363
  %v1365 = vpack.c.bf16 %v1266, %v1265
  %v1366 = vpack.c.bf16 %v1268, %v1267
  %1367 = vmatpush.bf16.msra.mxu0 0
  %1368 = vmatpush.bf16.msra.mxu0 0
  %1369 = vmatpush.bf16.msra.mxu0 0
  %1370 = vmatpush.bf16.msra.mxu0 0
  %1371 = vmatpush.bf16.msra.mxu0 0
  %1372 = vmatpush.bf16.msra.mxu0 0
  %1373 = vmatpush.bf16.msra.mxu0 %v1366
  %1374 = vmatpush.bf16.msra.mxu0 %v1365
  %1375 = vmatmul.bf16.gmra.mxu0 %v929
  %v1376 = vpop.f32.mrf.mxu0
  %v1377 = vadd.f32 0.0, %v1376
  %v1378 = vpop.f32.mrf.mxu0
  %v1379 = vadd.f32 0.0, %v1378
  %1380 = vmatmul.bf16.gmra.mxu0 %v932
  %v1381 = vpop.f32.mrf.mxu0
  %v1382 = vadd.f32 0.0, %v1381
  %v1383 = vpop.f32.mrf.mxu0
  %v1384 = vadd.f32 0.0, %v1383
  %1385 = vmatmul.bf16.gmra.mxu0 %v935
  %v1386 = vpop.f32.mrf.mxu0
  %v1387 = vadd.f32 0.0, %v1386
  %v1388 = vpop.f32.mrf.mxu0
  %v1389 = vadd.f32 0.0, %v1388
  %1390 = vmatmul.bf16.gmra.mxu0 %v938
  %v1391 = vpop.f32.mrf.mxu0
  %v1392 = vadd.f32 0.0, %v1391
  %v1393 = vpop.f32.mrf.mxu0
  %v1394 = vadd.f32 0.0, %v1393
  %1395 = vmatmul.bf16.gmra.mxu0 %v941
  %v1396 = vpop.f32.mrf.mxu0
  %v1397 = vadd.f32 0.0, %v1396
  %v1398 = vpop.f32.mrf.mxu0
  %v1399 = vadd.f32 0.0, %v1398
  %1400 = vmatmul.bf16.gmra.mxu0 %v944
  %v1401 = vpop.f32.mrf.mxu0
  %v1402 = vadd.f32 0.0, %v1401
  %v1403 = vpop.f32.mrf.mxu0
  %v1404 = vadd.f32 0.0, %v1403
  %1405 = vdwg.mxu0
  %v1406 = vadd.f32 %v674, %v1377
  %v1407 = vadd.f32 %v676, %v1379
  %v1408 = vadd.f32 %v679, %v1382
  %v1409 = vadd.f32 %v681, %v1384
  %v1410 = vadd.f32 %v684, %v1387
  %v1411 = vadd.f32 %v686, %v1389
  %v1412 = vadd.f32 %v689, %v1392
  %v1413 = vadd.f32 %v691, %v1394
  %v1414 = vadd.f32 %v1406, %v996
  %v1415 = vadd.f32 %v1407, %v1001
  %v1416 = vadd.f32 %v1408, %v1006
  %v1417 = vadd.f32 %v1409, %v1011
  %v1418 = vadd.f32 %v1410, %v1016
  %v1419 = vadd.f32 %v1411, %v1021
  %v1420 = vadd.f32 %v1412, %v1026
  %v1421 = vadd.f32 %v1413, %v1031
  %v1422 = vxor.u32 %v1414, 2147483648
  %v1423 = vxor.u32 %v1415, 2147483648
  %v1424 = vxor.u32 %v1416, 2147483648
  %v1425 = vxor.u32 %v1417, 2147483648
  %v1426 = vxor.u32 %v1418, 2147483648
  %v1427 = vxor.u32 %v1419, 2147483648
  %v1428 = vxor.u32 %v1420, 2147483648
  %v1429 = vxor.u32 %v1421, 2147483648
  %v1430 = vmul.f32 %v1422, 1.442695
  %v1431 = vpow.pop %v1430
  %v1432 = vmul.f32 %v1423, 1.442695
  %v1433 = vpow.pop %v1432
  %v1434 = vmul.f32 %v1424, 1.442695
  %v1435 = vpow.pop %v1434
  %v1436 = vmul.f32 %v1425, 1.442695
  %v1437 = vpow.pop %v1436
  %v1438 = vmul.f32 %v1426, 1.442695
  %v1439 = vpow.pop %v1438
  %v1440 = vmul.f32 %v1427, 1.442695
  %v1441 = vpow.pop %v1440
  %v1442 = vmul.f32 %v1428, 1.442695
  %v1443 = vpow.pop %v1442
  %v1444 = vmul.f32 %v1429, 1.442695
  %v1445 = vpow.pop %v1444
  %v1446 = vadd.f32 %v1431, 1.0
  %v1447 = vadd.f32 %v1433, 1.0
  %v1448 = vadd.f32 %v1435, 1.0
  %v1449 = vadd.f32 %v1437, 1.0
  %v1450 = vadd.f32 %v1439, 1.0
  %v1451 = vadd.f32 %v1441, 1.0
  %v1452 = vadd.f32 %v1443, 1.0
  %v1453 = vadd.f32 %v1445, 1.0
  %v1454 = vrcp.pop %v1446
  %v1455 = vmul.f32 %v1446, %v1454
  %v1456 = vsub.f32 1.0, %v1455
  %v1457 = vmul.f32 %v1454, %v1456
  %v1458 = vadd.f32 %v1454, %v1457
  %vm1459 = vweird.f32 %v1446
  %vm1460 = vweird.f32 %v1454
  %vm1461 = vmor %vm1459, %vm1460
  %v1462 = vsel %vm1461, %v1454, %v1458
  %v1463 = vand.u32 2147483647, %v1446
  %vm1464 = vcmp.eq.f32.partialorder %v1463, 8.507059e+37
  %v1465 = vand.u32 %v1446, 2147483648
  %v1466 = vor.u32 1.1754944e-38, %v1465
  %v1467 = vsel %vm1464, %v1466, %v1462
  %v1468 = vmul.f32 1.0, %v1467
  %v1469 = vrcp.pop %v1447
  %v1470 = vmul.f32 %v1447, %v1469
  %v1471 = vsub.f32 1.0, %v1470
  %v1472 = vmul.f32 %v1469, %v1471
  %v1473 = vadd.f32 %v1469, %v1472
  %vm1474 = vweird.f32 %v1447
  %vm1475 = vweird.f32 %v1469
  %vm1476 = vmor %vm1474, %vm1475
  %v1477 = vsel %vm1476, %v1469, %v1473
  %v1478 = vand.u32 2147483647, %v1447
  %vm1479 = vcmp.eq.f32.partialorder %v1478, 8.507059e+37
  %v1480 = vand.u32 %v1447, 2147483648
  %v1481 = vor.u32 1.1754944e-38, %v1480
  %v1482 = vsel %vm1479, %v1481, %v1477
  %v1483 = vmul.f32 1.0, %v1482
  %v1484 = vrcp.pop %v1448
  %v1485 = vmul.f32 %v1448, %v1484
  %v1486 = vsub.f32 1.0, %v1485
  %v1487 = vmul.f32 %v1484, %v1486
  %v1488 = vadd.f32 %v1484, %v1487
  %vm1489 = vweird.f32 %v1448
  %vm1490 = vweird.f32 %v1484
  %vm1491 = vmor %vm1489, %vm1490
  %v1492 = vsel %vm1491, %v1484, %v1488
  %v1493 = vand.u32 2147483647, %v1448
  %vm1494 = vcmp.eq.f32.partialorder %v1493, 8.507059e+37
  %v1495 = vand.u32 %v1448, 2147483648
  %v1496 = vor.u32 1.1754944e-38, %v1495
  %v1497 = vsel %vm1494, %v1496, %v1492
  %v1498 = vmul.f32 1.0, %v1497
  %v1499 = vrcp.pop %v1449
  %v1500 = vmul.f32 %v1449, %v1499
  %v1501 = vsub.f32 1.0, %v1500
  %v1502 = vmul.f32 %v1499, %v1501
  %v1503 = vadd.f32 %v1499, %v1502
  %vm1504 = vweird.f32 %v1449
  %vm1505 = vweird.f32 %v1499
  %vm1506 = vmor %vm1504, %vm1505
  %v1507 = vsel %vm1506, %v1499, %v1503
  %v1508 = vand.u32 2147483647, %v1449
  %vm1509 = vcmp.eq.f32.partialorder %v1508, 8.507059e+37
  %v1510 = vand.u32 %v1449, 2147483648
  %v1511 = vor.u32 1.1754944e-38, %v1510
  %v1512 = vsel %vm1509, %v1511, %v1507
  %v1513 = vmul.f32 1.0, %v1512
  %v1514 = vrcp.pop %v1450
  %v1515 = vmul.f32 %v1450, %v1514
  %v1516 = vsub.f32 1.0, %v1515
  %v1517 = vmul.f32 %v1514, %v1516
  %v1518 = vadd.f32 %v1514, %v1517
  %vm1519 = vweird.f32 %v1450
  %vm1520 = vweird.f32 %v1514
  %vm1521 = vmor %vm1519, %vm1520
  %v1522 = vsel %vm1521, %v1514, %v1518
  %v1523 = vand.u32 2147483647, %v1450
  %vm1524 = vcmp.eq.f32.partialorder %v1523, 8.507059e+37
  %v1525 = vand.u32 %v1450, 2147483648
  %v1526 = vor.u32 1.1754944e-38, %v1525
  %v1527 = vsel %vm1524, %v1526, %v1522
  %v1528 = vmul.f32 1.0, %v1527
  %v1529 = vrcp.pop %v1451
  %v1530 = vmul.f32 %v1451, %v1529
  %v1531 = vsub.f32 1.0, %v1530
  %v1532 = vmul.f32 %v1529, %v1531
  %v1533 = vadd.f32 %v1529, %v1532
  %vm1534 = vweird.f32 %v1451
  %vm1535 = vweird.f32 %v1529
  %vm1536 = vmor %vm1534, %vm1535
  %v1537 = vsel %vm1536, %v1529, %v1533
  %v1538 = vand.u32 2147483647, %v1451
  %vm1539 = vcmp.eq.f32.partialorder %v1538, 8.507059e+37
  %v1540 = vand.u32 %v1451, 2147483648
  %v1541 = vor.u32 1.1754944e-38, %v1540
  %v1542 = vsel %vm1539, %v1541, %v1537
  %v1543 = vmul.f32 1.0, %v1542
  %v1544 = vrcp.pop %v1452
  %v1545 = vmul.f32 %v1452, %v1544
  %v1546 = vsub.f32 1.0, %v1545
  %v1547 = vmul.f32 %v1544, %v1546
  %v1548 = vadd.f32 %v1544, %v1547
  %vm1549 = vweird.f32 %v1452
  %vm1550 = vweird.f32 %v1544
  %vm1551 = vmor %vm1549, %vm1550
  %v1552 = vsel %vm1551, %v1544, %v1548
  %v1553 = vand.u32 2147483647, %v1452
  %vm1554 = vcmp.eq.f32.partialorder %v1553, 8.507059e+37
  %v1555 = vand.u32 %v1452, 2147483648
  %v1556 = vor.u32 1.1754944e-38, %v1555
  %v1557 = vsel %vm1554, %v1556, %v1552
  %v1558 = vmul.f32 1.0, %v1557
  %v1559 = vrcp.pop %v1453
  %v1560 = vmul.f32 %v1453, %v1559
  %v1561 = vsub.f32 1.0, %v1560
  %v1562 = vmul.f32 %v1559, %v1561
  %v1563 = vadd.f32 %v1559, %v1562
  %vm1564 = vweird.f32 %v1453
  %vm1565 = vweird.f32 %v1559
  %vm1566 = vmor %vm1564, %vm1565
  %v1567 = vsel %vm1566, %v1559, %v1563
  %v1568 = vand.u32 2147483647, %v1453
  %vm1569 = vcmp.eq.f32.partialorder %v1568, 8.507059e+37
  %v1570 = vand.u32 %v1453, 2147483648
  %v1571 = vor.u32 1.1754944e-38, %v1570
  %v1572 = vsel %vm1569, %v1571, %v1567
  %v1573 = vmul.f32 1.0, %v1572
  %v1574 = vadd.f32 %v694, %v1196
  %v1575 = vadd.f32 %v696, %v1201
  %v1576 = vadd.f32 %v699, %v1206
  %v1577 = vadd.f32 %v701, %v1211
  %v1578 = vadd.f32 %v1397, %v1220
  %v1579 = vadd.f32 %v1399, %v1225
  %v1580 = vadd.f32 %v1402, %v1230
  %v1581 = vadd.f32 %v1404, %v1235
  %v1582 = vmul.f32 %v1468, %v1578
  %v1583 = vmul.f32 %v1483, %v1579
  %v1584 = vmul.f32 %v1498, %v1580
  %v1585 = vmul.f32 %v1513, %v1581
  %v1586 = vadd.f32 %v1574, %v1582
  %v1587 = vadd.f32 %v1575, %v1583
  %v1588 = vadd.f32 %v1576, %v1584
  %v1589 = vadd.f32 %v1577, %v1585
  %v1590 = vtanh.pop %v1586
  %v1591 = vtanh.pop %v1587
  %v1592 = vtanh.pop %v1588
  %v1593 = vtanh.pop %v1589
  %v1594 = vsub.f32 1.0, %v1528
  %v1595 = vsub.f32 1.0, %v1543
  %v1596 = vsub.f32 1.0, %v1558
  %v1597 = vsub.f32 1.0, %v1573
  %v1598 = vmul.f32 %v1594, %v1590
  %v1599 = vmul.f32 %v1595, %v1591
  %v1600 = vmul.f32 %v1596, %v1592
  %v1601 = vmul.f32 %v1597, %v1593
  %v1602 = vmul.f32 %v1528, %v1265
  %v1603 = vmul.f32 %v1543, %v1266
  %v1604 = vmul.f32 %v1558, %v1267
  %v1605 = vmul.f32 %v1573, %v1268
  %v1606 = vadd.f32 %v1598, %v1602
  %v1607 = vadd.f32 %v1599, %v1603
  %v1608 = vadd.f32 %v1600, %v1604
  %v1609 = vadd.f32 %v1601, %v1605
  %v1610 = vmul.f32 %v1606, %v1272
  %v1611 = vmul.f32 %v1607, %v1277
  %v1612 = vmul.f32 %v1608, %v1282
  %v1613 = vmul.f32 %v1609, %v1287
  %v1614 = vadd.f32 %v1610, %v1611
  %v1615 = vadd.f32 %v1614, %v1612
  %v1616 = vadd.f32 %v1615, %v1613
  %v1617 = vrot.slane %v1616, 4
  %v1618 = vadd.f32 %v1616, %v1617
  %v1619 = vrot.slane %v1618, 2
  %v1620 = vadd.f32 %v1618, %v1619
  %v1621 = vrot.slane %v1620, 1
  %v1622 = vadd.f32 %v1620, %v1621
  %v1623 = vadd.f32 %v1622, %v1305
  %v1624 = vmul.f32 %v1606, %v1310
  %v1625 = vmul.f32 %v1607, %v1314
  %v1626 = vmul.f32 %v1608, %v1318
  %v1627 = vmul.f32 %v1609, %v1322
  %v1628 = vadd.f32 %v1624, %v1625
  %v1629 = vadd.f32 %v1628, %v1626
  %v1630 = vadd.f32 %v1629, %v1627
  %v1631 = vrot.slane %v1630, 4
  %v1632 = vadd.f32 %v1630, %v1631
  %v1633 = vrot.slane %v1632, 2
  %v1634 = vadd.f32 %v1632, %v1633
  %v1635 = vrot.slane %v1634, 1
  %v1636 = vadd.f32 %v1634, %v1635
  %v1637 = vadd.f32 %v1636, %v1305
  %v1639 = vrot.slane %v1637, 1
  %v1641 = vmax.f32 %v1623, %v1639
  %v1642 = vsub.f32 %v1623, %v1641
  %v1643 = vmul.f32 %v1642, 1.442695
  %v1644 = vpow.pop %v1643
  %v1646 = vrot.slane %v1641, 7
  %v1648 = vsub.f32 %v1637, %v1646
  %v1649 = vmul.f32 %v1648, 1.442695
  %v1650 = vpow.pop %v1649
  %v1652 = vrot.slane %v1650, 1
  %v1654 = vadd.f32 %v1644, %v1652
  %v1655 = vlog2.pop %v1654
  %v1656 = vmul.f32 %v1655, 0.6931472
  %v1657 = vadd.f32 %v1641, %v1656
  %v1658 = vsub.f32 %v1623, %v1657
  %s1659 = scalar_lea.vmem %s10, 2
  %1660 = vst [vmem:[%s1659] sm:$0x1] %v1658
  %v1662 = vrot.slane %v1657, 7
  %v1664 = vsub.f32 %v1637, %v1662
  %1665 = vst [vmem:[%s1659] sm:$0x2] %v1664
  %v1666 = vpack.c.bf16 %v1607, %v1606
  %v1667 = vpack.c.bf16 %v1609, %v1608
  %1668 = vmatpush.bf16.msra.mxu0 0
  %1669 = vmatpush.bf16.msra.mxu0 0
  %1670 = vmatpush.bf16.msra.mxu0 0
  %1671 = vmatpush.bf16.msra.mxu0 0
  %1672 = vmatpush.bf16.msra.mxu0 0
  %1673 = vmatpush.bf16.msra.mxu0 0
  %1674 = vmatpush.bf16.msra.mxu0 %v1667
  %1675 = vmatpush.bf16.msra.mxu0 %v1666
  %1676 = vmatmul.bf16.gmra.mxu0 %v929
  %v1677 = vpop.f32.mrf.mxu0
  %v1678 = vadd.f32 0.0, %v1677
  %v1679 = vpop.f32.mrf.mxu0
  %v1680 = vadd.f32 0.0, %v1679
  %1681 = vmatmul.bf16.gmra.mxu0 %v932
  %v1682 = vpop.f32.mrf.mxu0
  %v1683 = vadd.f32 0.0, %v1682
  %v1684 = vpop.f32.mrf.mxu0
  %v1685 = vadd.f32 0.0, %v1684
  %1686 = vmatmul.bf16.gmra.mxu0 %v935
  %v1687 = vpop.f32.mrf.mxu0
  %v1688 = vadd.f32 0.0, %v1687
  %v1689 = vpop.f32.mrf.mxu0
  %v1690 = vadd.f32 0.0, %v1689
  %1691 = vmatmul.bf16.gmra.mxu0 %v938
  %v1692 = vpop.f32.mrf.mxu0
  %v1693 = vadd.f32 0.0, %v1692
  %v1694 = vpop.f32.mrf.mxu0
  %v1695 = vadd.f32 0.0, %v1694
  %1696 = vmatmul.bf16.gmra.mxu0 %v941
  %v1697 = vpop.f32.mrf.mxu0
  %v1698 = vadd.f32 0.0, %v1697
  %v1699 = vpop.f32.mrf.mxu0
  %v1700 = vadd.f32 0.0, %v1699
  %1701 = vmatmul.bf16.gmra.mxu0 %v944
  %v1702 = vpop.f32.mrf.mxu0
  %v1703 = vadd.f32 0.0, %v1702
  %v1704 = vpop.f32.mrf.mxu0
  %v1705 = vadd.f32 0.0, %v1704
  %1706 = vdwg.mxu0
  %v1707 = vadd.f32 %v713, %v1678
  %v1708 = vadd.f32 %v715, %v1680
  %v1709 = vadd.f32 %v718, %v1683
  %v1710 = vadd.f32 %v720, %v1685
  %v1711 = vadd.f32 %v723, %v1688
  %v1712 = vadd.f32 %v725, %v1690
  %v1713 = vadd.f32 %v728, %v1693
  %v1714 = vadd.f32 %v730, %v1695
  %v1715 = vadd.f32 %v1707, %v996
  %v1716 = vadd.f32 %v1708, %v1001
  %v1717 = vadd.f32 %v1709, %v1006
  %v1718 = vadd.f32 %v1710, %v1011
  %v1719 = vadd.f32 %v1711, %v1016
  %v1720 = vadd.f32 %v1712, %v1021
  %v1721 = vadd.f32 %v1713, %v1026
  %v1722 = vadd.f32 %v1714, %v1031
  %v1723 = vxor.u32 %v1715, 2147483648
  %v1724 = vxor.u32 %v1716, 2147483648
  %v1725 = vxor.u32 %v1717, 2147483648
  %v1726 = vxor.u32 %v1718, 2147483648
  %v1727 = vxor.u32 %v1719, 2147483648
  %v1728 = vxor.u32 %v1720, 2147483648
  %v1729 = vxor.u32 %v1721, 2147483648
  %v1730 = vxor.u32 %v1722, 2147483648
  %v1731 = vmul.f32 %v1723, 1.442695
  %v1732 = vpow.pop %v1731
  %v1733 = vmul.f32 %v1724, 1.442695
  %v1734 = vpow.pop %v1733
  %v1735 = vmul.f32 %v1725, 1.442695
  %v1736 = vpow.pop %v1735
  %v1737 = vmul.f32 %v1726, 1.442695
  %v1738 = vpow.pop %v1737
  %v1739 = vmul.f32 %v1727, 1.442695
  %v1740 = vpow.pop %v1739
  %v1741 = vmul.f32 %v1728, 1.442695
  %v1742 = vpow.pop %v1741
  %v1743 = vmul.f32 %v1729, 1.442695
  %v1744 = vpow.pop %v1743
  %v1745 = vmul.f32 %v1730, 1.442695
  %v1746 = vpow.pop %v1745
  %v1747 = vadd.f32 %v1732, 1.0
  %v1748 = vadd.f32 %v1734, 1.0
  %v1749 = vadd.f32 %v1736, 1.0
  %v1750 = vadd.f32 %v1738, 1.0
  %v1751 = vadd.f32 %v1740, 1.0
  %v1752 = vadd.f32 %v1742, 1.0
  %v1753 = vadd.f32 %v1744, 1.0
  %v1754 = vadd.f32 %v1746, 1.0
  %v1755 = vrcp.pop %v1747
  %v1756 = vmul.f32 %v1747, %v1755
  %v1757 = vsub.f32 1.0, %v1756
  %v1758 = vmul.f32 %v1755, %v1757
  %v1759 = vadd.f32 %v1755, %v1758
  %vm1760 = vweird.f32 %v1747
  %vm1761 = vweird.f32 %v1755
  %vm1762 = vmor %vm1760, %vm1761
  %v1763 = vsel %vm1762, %v1755, %v1759
  %v1764 = vand.u32 2147483647, %v1747
  %vm1765 = vcmp.eq.f32.partialorder %v1764, 8.507059e+37
  %v1766 = vand.u32 %v1747, 2147483648
  %v1767 = vor.u32 1.1754944e-38, %v1766
  %v1768 = vsel %vm1765, %v1767, %v1763
  %v1769 = vmul.f32 1.0, %v1768
  %v1770 = vrcp.pop %v1748
  %v1771 = vmul.f32 %v1748, %v1770
  %v1772 = vsub.f32 1.0, %v1771
  %v1773 = vmul.f32 %v1770, %v1772
  %v1774 = vadd.f32 %v1770, %v1773
  %vm1775 = vweird.f32 %v1748
  %vm1776 = vweird.f32 %v1770
  %vm1777 = vmor %vm1775, %vm1776
  %v1778 = vsel %vm1777, %v1770, %v1774
  %v1779 = vand.u32 2147483647, %v1748
  %vm1780 = vcmp.eq.f32.partialorder %v1779, 8.507059e+37
  %v1781 = vand.u32 %v1748, 2147483648
  %v1782 = vor.u32 1.1754944e-38, %v1781
  %v1783 = vsel %vm1780, %v1782, %v1778
  %v1784 = vmul.f32 1.0, %v1783
  %v1785 = vrcp.pop %v1749
  %v1786 = vmul.f32 %v1749, %v1785
  %v1787 = vsub.f32 1.0, %v1786
  %v1788 = vmul.f32 %v1785, %v1787
  %v1789 = vadd.f32 %v1785, %v1788
  %vm1790 = vweird.f32 %v1749
  %vm1791 = vweird.f32 %v1785
  %vm1792 = vmor %vm1790, %vm1791
  %v1793 = vsel %vm1792, %v1785, %v1789
  %v1794 = vand.u32 2147483647, %v1749
  %vm1795 = vcmp.eq.f32.partialorder %v1794, 8.507059e+37
  %v1796 = vand.u32 %v1749, 2147483648
  %v1797 = vor.u32 1.1754944e-38, %v1796
  %v1798 = vsel %vm1795, %v1797, %v1793
  %v1799 = vmul.f32 1.0, %v1798
  %v1800 = vrcp.pop %v1750
  %v1801 = vmul.f32 %v1750, %v1800
  %v1802 = vsub.f32 1.0, %v1801
  %v1803 = vmul.f32 %v1800, %v1802
  %v1804 = vadd.f32 %v1800, %v1803
  %vm1805 = vweird.f32 %v1750
  %vm1806 = vweird.f32 %v1800
  %vm1807 = vmor %vm1805, %vm1806
  %v1808 = vsel %vm1807, %v1800, %v1804
  %v1809 = vand.u32 2147483647, %v1750
  %vm1810 = vcmp.eq.f32.partialorder %v1809, 8.507059e+37
  %v1811 = vand.u32 %v1750, 2147483648
  %v1812 = vor.u32 1.1754944e-38, %v1811
  %v1813 = vsel %vm1810, %v1812, %v1808
  %v1814 = vmul.f32 1.0, %v1813
  %v1815 = vrcp.pop %v1751
  %v1816 = vmul.f32 %v1751, %v1815
  %v1817 = vsub.f32 1.0, %v1816
  %v1818 = vmul.f32 %v1815, %v1817
  %v1819 = vadd.f32 %v1815, %v1818
  %vm1820 = vweird.f32 %v1751
  %vm1821 = vweird.f32 %v1815
  %vm1822 = vmor %vm1820, %vm1821
  %v1823 = vsel %vm1822, %v1815, %v1819
  %v1824 = vand.u32 2147483647, %v1751
  %vm1825 = vcmp.eq.f32.partialorder %v1824, 8.507059e+37
  %v1826 = vand.u32 %v1751, 2147483648
  %v1827 = vor.u32 1.1754944e-38, %v1826
  %v1828 = vsel %vm1825, %v1827, %v1823
  %v1829 = vmul.f32 1.0, %v1828
  %v1830 = vrcp.pop %v1752
  %v1831 = vmul.f32 %v1752, %v1830
  %v1832 = vsub.f32 1.0, %v1831
  %v1833 = vmul.f32 %v1830, %v1832
  %v1834 = vadd.f32 %v1830, %v1833
  %vm1835 = vweird.f32 %v1752
  %vm1836 = vweird.f32 %v1830
  %vm1837 = vmor %vm1835, %vm1836
  %v1838 = vsel %vm1837, %v1830, %v1834
  %v1839 = vand.u32 2147483647, %v1752
  %vm1840 = vcmp.eq.f32.partialorder %v1839, 8.507059e+37
  %v1841 = vand.u32 %v1752, 2147483648
  %v1842 = vor.u32 1.1754944e-38, %v1841
  %v1843 = vsel %vm1840, %v1842, %v1838
  %v1844 = vmul.f32 1.0, %v1843
  %v1845 = vrcp.pop %v1753
  %v1846 = vmul.f32 %v1753, %v1845
  %v1847 = vsub.f32 1.0, %v1846
  %v1848 = vmul.f32 %v1845, %v1847
  %v1849 = vadd.f32 %v1845, %v1848
  %vm1850 = vweird.f32 %v1753
  %vm1851 = vweird.f32 %v1845
  %vm1852 = vmor %vm1850, %vm1851
  %v1853 = vsel %vm1852, %v1845, %v1849
  %v1854 = vand.u32 2147483647, %v1753
  %vm1855 = vcmp.eq.f32.partialorder %v1854, 8.507059e+37
  %v1856 = vand.u32 %v1753, 2147483648
  %v1857 = vor.u32 1.1754944e-38, %v1856
  %v1858 = vsel %vm1855, %v1857, %v1853
  %v1859 = vmul.f32 1.0, %v1858
  %v1860 = vrcp.pop %v1754
  %v1861 = vmul.f32 %v1754, %v1860
  %v1862 = vsub.f32 1.0, %v1861
  %v1863 = vmul.f32 %v1860, %v1862
  %v1864 = vadd.f32 %v1860, %v1863
  %vm1865 = vweird.f32 %v1754
  %vm1866 = vweird.f32 %v1860
  %vm1867 = vmor %vm1865, %vm1866
  %v1868 = vsel %vm1867, %v1860, %v1864
  %v1869 = vand.u32 2147483647, %v1754
  %vm1870 = vcmp.eq.f32.partialorder %v1869, 8.507059e+37
  %v1871 = vand.u32 %v1754, 2147483648
  %v1872 = vor.u32 1.1754944e-38, %v1871
  %v1873 = vsel %vm1870, %v1872, %v1868
  %v1874 = vmul.f32 1.0, %v1873
  %v1875 = vadd.f32 %v733, %v1196
  %v1876 = vadd.f32 %v735, %v1201
  %v1877 = vadd.f32 %v738, %v1206
  %v1878 = vadd.f32 %v740, %v1211
  %v1879 = vadd.f32 %v1698, %v1220
  %v1880 = vadd.f32 %v1700, %v1225
  %v1881 = vadd.f32 %v1703, %v1230
  %v1882 = vadd.f32 %v1705, %v1235
  %v1883 = vmul.f32 %v1769, %v1879
  %v1884 = vmul.f32 %v1784, %v1880
  %v1885 = vmul.f32 %v1799, %v1881
  %v1886 = vmul.f32 %v1814, %v1882
  %v1887 = vadd.f32 %v1875, %v1883
  %v1888 = vadd.f32 %v1876, %v1884
  %v1889 = vadd.f32 %v1877, %v1885
  %v1890 = vadd.f32 %v1878, %v1886
  %v1891 = vtanh.pop %v1887
  %v1892 = vtanh.pop %v1888
  %v1893 = vtanh.pop %v1889
  %v1894 = vtanh.pop %v1890
  %v1895 = vsub.f32 1.0, %v1829
  %v1896 = vsub.f32 1.0, %v1844
  %v1897 = vsub.f32 1.0, %v1859
  %v1898 = vsub.f32 1.0, %v1874
  %v1899 = vmul.f32 %v1895, %v1891
  %v1900 = vmul.f32 %v1896, %v1892
  %v1901 = vmul.f32 %v1897, %v1893
  %v1902 = vmul.f32 %v1898, %v1894
  %v1903 = vmul.f32 %v1829, %v1606
  %v1904 = vmul.f32 %v1844, %v1607
  %v1905 = vmul.f32 %v1859, %v1608
  %v1906 = vmul.f32 %v1874, %v1609
  %v1907 = vadd.f32 %v1899, %v1903
  %v1908 = vadd.f32 %v1900, %v1904
  %v1909 = vadd.f32 %v1901, %v1905
  %v1910 = vadd.f32 %v1902, %v1906
  %v1911 = vmul.f32 %v1907, %v1272
  %v1912 = vmul.f32 %v1908, %v1277
  %v1913 = vmul.f32 %v1909, %v1282
  %v1914 = vmul.f32 %v1910, %v1287
  %v1915 = vadd.f32 %v1911, %v1912
  %v1916 = vadd.f32 %v1915, %v1913
  %v1917 = vadd.f32 %v1916, %v1914
  %v1918 = vrot.slane %v1917, 4
  %v1919 = vadd.f32 %v1917, %v1918
  %v1920 = vrot.slane %v1919, 2
  %v1921 = vadd.f32 %v1919, %v1920
  %v1922 = vrot.slane %v1921, 1
  %v1923 = vadd.f32 %v1921, %v1922
  %v1924 = vadd.f32 %v1923, %v1305
  %v1925 = vmul.f32 %v1907, %v1310
  %v1926 = vmul.f32 %v1908, %v1314
  %v1927 = vmul.f32 %v1909, %v1318
  %v1928 = vmul.f32 %v1910, %v1322
  %v1929 = vadd.f32 %v1925, %v1926
  %v1930 = vadd.f32 %v1929, %v1927
  %v1931 = vadd.f32 %v1930, %v1928
  %v1932 = vrot.slane %v1931, 4
  %v1933 = vadd.f32 %v1931, %v1932
  %v1934 = vrot.slane %v1933, 2
  %v1935 = vadd.f32 %v1933, %v1934
  %v1936 = vrot.slane %v1935, 1
  %v1937 = vadd.f32 %v1935, %v1936
  %v1938 = vadd.f32 %v1937, %v1305
  %v1940 = vrot.slane %v1938, 1
  %v1942 = vmax.f32 %v1924, %v1940
  %v1943 = vsub.f32 %v1924, %v1942
  %v1944 = vmul.f32 %v1943, 1.442695
  %v1945 = vpow.pop %v1944
  %v1947 = vrot.slane %v1942, 7
  %v1949 = vsub.f32 %v1938, %v1947
  %v1950 = vmul.f32 %v1949, 1.442695
  %v1951 = vpow.pop %v1950
  %v1953 = vrot.slane %v1951, 1
  %v1955 = vadd.f32 %v1945, %v1953
  %v1956 = vlog2.pop %v1955
  %v1957 = vmul.f32 %v1956, 0.6931472
  %v1958 = vadd.f32 %v1942, %v1957
  %v1959 = vsub.f32 %v1924, %v1958
  %s1960 = scalar_lea.vmem %s10, 4
  %1961 = vst [vmem:[%s1960] sm:$0x1] %v1959
  %v1963 = vrot.slane %v1958, 7
  %v1965 = vsub.f32 %v1938, %v1963
  %1966 = vst [vmem:[%s1960] sm:$0x2] %v1965
  %v1967 = vpack.c.bf16 %v1908, %v1907
  %v1968 = vpack.c.bf16 %v1910, %v1909
  %1969 = vmatpush.bf16.msra.mxu0 0
  %1970 = vmatpush.bf16.msra.mxu0 0
  %1971 = vmatpush.bf16.msra.mxu0 0
  %1972 = vmatpush.bf16.msra.mxu0 0
  %1973 = vmatpush.bf16.msra.mxu0 0
  %1974 = vmatpush.bf16.msra.mxu0 0
  %1975 = vmatpush.bf16.msra.mxu0 %v1968
  %1976 = vmatpush.bf16.msra.mxu0 %v1967
  %1977 = vmatmul.bf16.gmra.mxu0 %v929
  %v1978 = vpop.f32.mrf.mxu0
  %v1979 = vadd.f32 0.0, %v1978
  %v1980 = vpop.f32.mrf.mxu0
  %v1981 = vadd.f32 0.0, %v1980
  %1982 = vmatmul.bf16.gmra.mxu0 %v932
  %v1983 = vpop.f32.mrf.mxu0
  %v1984 = vadd.f32 0.0, %v1983
  %v1985 = vpop.f32.mrf.mxu0
  %v1986 = vadd.f32 0.0, %v1985
  %1987 = vmatmul.bf16.gmra.mxu0 %v935
  %v1988 = vpop.f32.mrf.mxu0
  %v1989 = vadd.f32 0.0, %v1988
  %v1990 = vpop.f32.mrf.mxu0
  %v1991 = vadd.f32 0.0, %v1990
  %1992 = vmatmul.bf16.gmra.mxu0 %v938
  %v1993 = vpop.f32.mrf.mxu0
  %v1994 = vadd.f32 0.0, %v1993
  %v1995 = vpop.f32.mrf.mxu0
  %v1996 = vadd.f32 0.0, %v1995
  %1997 = vmatmul.bf16.gmra.mxu0 %v941
  %v1998 = vpop.f32.mrf.mxu0
  %v1999 = vadd.f32 0.0, %v1998
  %v2000 = vpop.f32.mrf.mxu0
  %v2001 = vadd.f32 0.0, %v2000
  %2002 = vmatmul.bf16.gmra.mxu0 %v944
  %v2003 = vpop.f32.mrf.mxu0
  %v2004 = vadd.f32 0.0, %v2003
  %v2005 = vpop.f32.mrf.mxu0
  %v2006 = vadd.f32 0.0, %v2005
  %2007 = vdwg.mxu0
  %v2008 = vadd.f32 %v752, %v1979
  %v2009 = vadd.f32 %v754, %v1981
  %v2010 = vadd.f32 %v757, %v1984
  %v2011 = vadd.f32 %v759, %v1986
  %v2012 = vadd.f32 %v762, %v1989
  %v2013 = vadd.f32 %v764, %v1991
  %v2014 = vadd.f32 %v767, %v1994
  %v2015 = vadd.f32 %v769, %v1996
  %v2016 = vadd.f32 %v2008, %v996
  %v2017 = vadd.f32 %v2009, %v1001
  %v2018 = vadd.f32 %v2010, %v1006
  %v2019 = vadd.f32 %v2011, %v1011
  %v2020 = vadd.f32 %v2012, %v1016
  %v2021 = vadd.f32 %v2013, %v1021
  %v2022 = vadd.f32 %v2014, %v1026
  %v2023 = vadd.f32 %v2015, %v1031
  %v2024 = vxor.u32 %v2016, 2147483648
  %v2025 = vxor.u32 %v2017, 2147483648
  %v2026 = vxor.u32 %v2018, 2147483648
  %v2027 = vxor.u32 %v2019, 2147483648
  %v2028 = vxor.u32 %v2020, 2147483648
  %v2029 = vxor.u32 %v2021, 2147483648
  %v2030 = vxor.u32 %v2022, 2147483648
  %v2031 = vxor.u32 %v2023, 2147483648
  %v2032 = vmul.f32 %v2024, 1.442695
  %v2033 = vpow.pop %v2032
  %v2034 = vmul.f32 %v2025, 1.442695
  %v2035 = vpow.pop %v2034
  %v2036 = vmul.f32 %v2026, 1.442695
  %v2037 = vpow.pop %v2036
  %v2038 = vmul.f32 %v2027, 1.442695
  %v2039 = vpow.pop %v2038
  %v2040 = vmul.f32 %v2028, 1.442695
  %v2041 = vpow.pop %v2040
  %v2042 = vmul.f32 %v2029, 1.442695
  %v2043 = vpow.pop %v2042
  %v2044 = vmul.f32 %v2030, 1.442695
  %v2045 = vpow.pop %v2044
  %v2046 = vmul.f32 %v2031, 1.442695
  %v2047 = vpow.pop %v2046
  %v2048 = vadd.f32 %v2033, 1.0
  %v2049 = vadd.f32 %v2035, 1.0
  %v2050 = vadd.f32 %v2037, 1.0
  %v2051 = vadd.f32 %v2039, 1.0
  %v2052 = vadd.f32 %v2041, 1.0
  %v2053 = vadd.f32 %v2043, 1.0
  %v2054 = vadd.f32 %v2045, 1.0
  %v2055 = vadd.f32 %v2047, 1.0
  %v2056 = vrcp.pop %v2048
  %v2057 = vmul.f32 %v2048, %v2056
  %v2058 = vsub.f32 1.0, %v2057
  %v2059 = vmul.f32 %v2056, %v2058
  %v2060 = vadd.f32 %v2056, %v2059
  %vm2061 = vweird.f32 %v2048
  %vm2062 = vweird.f32 %v2056
  %vm2063 = vmor %vm2061, %vm2062
  %v2064 = vsel %vm2063, %v2056, %v2060
  %v2065 = vand.u32 2147483647, %v2048
  %vm2066 = vcmp.eq.f32.partialorder %v2065, 8.507059e+37
  %v2067 = vand.u32 %v2048, 2147483648
  %v2068 = vor.u32 1.1754944e-38, %v2067
  %v2069 = vsel %vm2066, %v2068, %v2064
  %v2070 = vmul.f32 1.0, %v2069
  %v2071 = vrcp.pop %v2049
  %v2072 = vmul.f32 %v2049, %v2071
  %v2073 = vsub.f32 1.0, %v2072
  %v2074 = vmul.f32 %v2071, %v2073
  %v2075 = vadd.f32 %v2071, %v2074
  %vm2076 = vweird.f32 %v2049
  %vm2077 = vweird.f32 %v2071
  %vm2078 = vmor %vm2076, %vm2077
  %v2079 = vsel %vm2078, %v2071, %v2075
  %v2080 = vand.u32 2147483647, %v2049
  %vm2081 = vcmp.eq.f32.partialorder %v2080, 8.507059e+37
  %v2082 = vand.u32 %v2049, 2147483648
  %v2083 = vor.u32 1.1754944e-38, %v2082
  %v2084 = vsel %vm2081, %v2083, %v2079
  %v2085 = vmul.f32 1.0, %v2084
  %v2086 = vrcp.pop %v2050
  %v2087 = vmul.f32 %v2050, %v2086
  %v2088 = vsub.f32 1.0, %v2087
  %v2089 = vmul.f32 %v2086, %v2088
  %v2090 = vadd.f32 %v2086, %v2089
  %vm2091 = vweird.f32 %v2050
  %vm2092 = vweird.f32 %v2086
  %vm2093 = vmor %vm2091, %vm2092
  %v2094 = vsel %vm2093, %v2086, %v2090
  %v2095 = vand.u32 2147483647, %v2050
  %vm2096 = vcmp.eq.f32.partialorder %v2095, 8.507059e+37
  %v2097 = vand.u32 %v2050, 2147483648
  %v2098 = vor.u32 1.1754944e-38, %v2097
  %v2099 = vsel %vm2096, %v2098, %v2094
  %v2100 = vmul.f32 1.0, %v2099
  %v2101 = vrcp.pop %v2051
  %v2102 = vmul.f32 %v2051, %v2101
  %v2103 = vsub.f32 1.0, %v2102
  %v2104 = vmul.f32 %v2101, %v2103
  %v2105 = vadd.f32 %v2101, %v2104
  %vm2106 = vweird.f32 %v2051
  %vm2107 = vweird.f32 %v2101
  %vm2108 = vmor %vm2106, %vm2107
  %v2109 = vsel %vm2108, %v2101, %v2105
  %v2110 = vand.u32 2147483647, %v2051
  %vm2111 = vcmp.eq.f32.partialorder %v2110, 8.507059e+37
  %v2112 = vand.u32 %v2051, 2147483648
  %v2113 = vor.u32 1.1754944e-38, %v2112
  %v2114 = vsel %vm2111, %v2113, %v2109
  %v2115 = vmul.f32 1.0, %v2114
  %v2116 = vrcp.pop %v2052
  %v2117 = vmul.f32 %v2052, %v2116
  %v2118 = vsub.f32 1.0, %v2117
  %v2119 = vmul.f32 %v2116, %v2118
  %v2120 = vadd.f32 %v2116, %v2119
  %vm2121 = vweird.f32 %v2052
  %vm2122 = vweird.f32 %v2116
  %vm2123 = vmor %vm2121, %vm2122
  %v2124 = vsel %vm2123, %v2116, %v2120
  %v2125 = vand.u32 2147483647, %v2052
  %vm2126 = vcmp.eq.f32.partialorder %v2125, 8.507059e+37
  %v2127 = vand.u32 %v2052, 2147483648
  %v2128 = vor.u32 1.1754944e-38, %v2127
  %v2129 = vsel %vm2126, %v2128, %v2124
  %v2130 = vmul.f32 1.0, %v2129
  %v2131 = vrcp.pop %v2053
  %v2132 = vmul.f32 %v2053, %v2131
  %v2133 = vsub.f32 1.0, %v2132
  %v2134 = vmul.f32 %v2131, %v2133
  %v2135 = vadd.f32 %v2131, %v2134
  %vm2136 = vweird.f32 %v2053
  %vm2137 = vweird.f32 %v2131
  %vm2138 = vmor %vm2136, %vm2137
  %v2139 = vsel %vm2138, %v2131, %v2135
  %v2140 = vand.u32 2147483647, %v2053
  %vm2141 = vcmp.eq.f32.partialorder %v2140, 8.507059e+37
  %v2142 = vand.u32 %v2053, 2147483648
  %v2143 = vor.u32 1.1754944e-38, %v2142
  %v2144 = vsel %vm2141, %v2143, %v2139
  %v2145 = vmul.f32 1.0, %v2144
  %v2146 = vrcp.pop %v2054
  %v2147 = vmul.f32 %v2054, %v2146
  %v2148 = vsub.f32 1.0, %v2147
  %v2149 = vmul.f32 %v2146, %v2148
  %v2150 = vadd.f32 %v2146, %v2149
  %vm2151 = vweird.f32 %v2054
  %vm2152 = vweird.f32 %v2146
  %vm2153 = vmor %vm2151, %vm2152
  %v2154 = vsel %vm2153, %v2146, %v2150
  %v2155 = vand.u32 2147483647, %v2054
  %vm2156 = vcmp.eq.f32.partialorder %v2155, 8.507059e+37
  %v2157 = vand.u32 %v2054, 2147483648
  %v2158 = vor.u32 1.1754944e-38, %v2157
  %v2159 = vsel %vm2156, %v2158, %v2154
  %v2160 = vmul.f32 1.0, %v2159
  %v2161 = vrcp.pop %v2055
  %v2162 = vmul.f32 %v2055, %v2161
  %v2163 = vsub.f32 1.0, %v2162
  %v2164 = vmul.f32 %v2161, %v2163
  %v2165 = vadd.f32 %v2161, %v2164
  %vm2166 = vweird.f32 %v2055
  %vm2167 = vweird.f32 %v2161
  %vm2168 = vmor %vm2166, %vm2167
  %v2169 = vsel %vm2168, %v2161, %v2165
  %v2170 = vand.u32 2147483647, %v2055
  %vm2171 = vcmp.eq.f32.partialorder %v2170, 8.507059e+37
  %v2172 = vand.u32 %v2055, 2147483648
  %v2173 = vor.u32 1.1754944e-38, %v2172
  %v2174 = vsel %vm2171, %v2173, %v2169
  %v2175 = vmul.f32 1.0, %v2174
  %v2176 = vadd.f32 %v772, %v1196
  %v2177 = vadd.f32 %v774, %v1201
  %v2178 = vadd.f32 %v777, %v1206
  %v2179 = vadd.f32 %v779, %v1211
  %v2180 = vadd.f32 %v1999, %v1220
  %v2181 = vadd.f32 %v2001, %v1225
  %v2182 = vadd.f32 %v2004, %v1230
  %v2183 = vadd.f32 %v2006, %v1235
  %v2184 = vmul.f32 %v2070, %v2180
  %v2185 = vmul.f32 %v2085, %v2181
  %v2186 = vmul.f32 %v2100, %v2182
  %v2187 = vmul.f32 %v2115, %v2183
  %v2188 = vadd.f32 %v2176, %v2184
  %v2189 = vadd.f32 %v2177, %v2185
  %v2190 = vadd.f32 %v2178, %v2186
  %v2191 = vadd.f32 %v2179, %v2187
  %v2192 = vtanh.pop %v2188
  %v2193 = vtanh.pop %v2189
  %v2194 = vtanh.pop %v2190
  %v2195 = vtanh.pop %v2191
  %v2196 = vsub.f32 1.0, %v2130
  %v2197 = vsub.f32 1.0, %v2145
  %v2198 = vsub.f32 1.0, %v2160
  %v2199 = vsub.f32 1.0, %v2175
  %v2200 = vmul.f32 %v2196, %v2192
  %v2201 = vmul.f32 %v2197, %v2193
  %v2202 = vmul.f32 %v2198, %v2194
  %v2203 = vmul.f32 %v2199, %v2195
  %v2204 = vmul.f32 %v2130, %v1907
  %v2205 = vmul.f32 %v2145, %v1908
  %v2206 = vmul.f32 %v2160, %v1909
  %v2207 = vmul.f32 %v2175, %v1910
  %v2208 = vadd.f32 %v2200, %v2204
  %v2209 = vadd.f32 %v2201, %v2205
  %v2210 = vadd.f32 %v2202, %v2206
  %v2211 = vadd.f32 %v2203, %v2207
  %v2212 = vmul.f32 %v2208, %v1272
  %v2213 = vmul.f32 %v2209, %v1277
  %v2214 = vmul.f32 %v2210, %v1282
  %v2215 = vmul.f32 %v2211, %v1287
  %v2216 = vadd.f32 %v2212, %v2213
  %v2217 = vadd.f32 %v2216, %v2214
  %v2218 = vadd.f32 %v2217, %v2215
  %v2219 = vrot.slane %v2218, 4
  %v2220 = vadd.f32 %v2218, %v2219
  %v2221 = vrot.slane %v2220, 2
  %v2222 = vadd.f32 %v2220, %v2221
  %v2223 = vrot.slane %v2222, 1
  %v2224 = vadd.f32 %v2222, %v2223
  %v2225 = vadd.f32 %v2224, %v1305
  %v2226 = vmul.f32 %v2208, %v1310
  %v2227 = vmul.f32 %v2209, %v1314
  %v2228 = vmul.f32 %v2210, %v1318
  %v2229 = vmul.f32 %v2211, %v1322
  %v2230 = vadd.f32 %v2226, %v2227
  %v2231 = vadd.f32 %v2230, %v2228
  %v2232 = vadd.f32 %v2231, %v2229
  %v2233 = vrot.slane %v2232, 4
  %v2234 = vadd.f32 %v2232, %v2233
  %v2235 = vrot.slane %v2234, 2
  %v2236 = vadd.f32 %v2234, %v2235
  %v2237 = vrot.slane %v2236, 1
  %v2238 = vadd.f32 %v2236, %v2237
  %v2239 = vadd.f32 %v2238, %v1305
  %v2241 = vrot.slane %v2239, 1
  %v2243 = vmax.f32 %v2225, %v2241
  %v2244 = vsub.f32 %v2225, %v2243
  %v2245 = vmul.f32 %v2244, 1.442695
  %v2246 = vpow.pop %v2245
  %v2248 = vrot.slane %v2243, 7
  %v2250 = vsub.f32 %v2239, %v2248
  %v2251 = vmul.f32 %v2250, 1.442695
  %v2252 = vpow.pop %v2251
  %v2254 = vrot.slane %v2252, 1
  %v2256 = vadd.f32 %v2246, %v2254
  %v2257 = vlog2.pop %v2256
  %v2258 = vmul.f32 %v2257, 0.6931472
  %v2259 = vadd.f32 %v2243, %v2258
  %v2260 = vsub.f32 %v2225, %v2259
  %s2261 = scalar_lea.vmem %s10, 6
  %2262 = vst [vmem:[%s2261] sm:$0x1] %v2260
  %v2264 = vrot.slane %v2259, 7
  %v2266 = vsub.f32 %v2239, %v2264
  %2267 = vst [vmem:[%s2261] sm:$0x2] %v2266
  %v2268 = vpack.c.bf16 %v2209, %v2208
  %v2269 = vpack.c.bf16 %v2211, %v2210
  %2270 = vmatpush.bf16.msra.mxu0 0
  %2271 = vmatpush.bf16.msra.mxu0 0
  %2272 = vmatpush.bf16.msra.mxu0 0
  %2273 = vmatpush.bf16.msra.mxu0 0
  %2274 = vmatpush.bf16.msra.mxu0 0
  %2275 = vmatpush.bf16.msra.mxu0 0
  %2276 = vmatpush.bf16.msra.mxu0 %v2269
  %2277 = vmatpush.bf16.msra.mxu0 %v2268
  %2278 = vmatmul.bf16.gmra.mxu0 %v929
  %v2279 = vpop.f32.mrf.mxu0
  %v2280 = vadd.f32 0.0, %v2279
  %v2281 = vpop.f32.mrf.mxu0
  %v2282 = vadd.f32 0.0, %v2281
  %2283 = vmatmul.bf16.gmra.mxu0 %v932
  %v2284 = vpop.f32.mrf.mxu0
  %v2285 = vadd.f32 0.0, %v2284
  %v2286 = vpop.f32.mrf.mxu0
  %v2287 = vadd.f32 0.0, %v2286
  %2288 = vmatmul.bf16.gmra.mxu0 %v935
  %v2289 = vpop.f32.mrf.mxu0
  %v2290 = vadd.f32 0.0, %v2289
  %v2291 = vpop.f32.mrf.mxu0
  %v2292 = vadd.f32 0.0, %v2291
  %2293 = vmatmul.bf16.gmra.mxu0 %v938
  %v2294 = vpop.f32.mrf.mxu0
  %v2295 = vadd.f32 0.0, %v2294
  %v2296 = vpop.f32.mrf.mxu0
  %v2297 = vadd.f32 0.0, %v2296
  %2298 = vmatmul.bf16.gmra.mxu0 %v941
  %v2299 = vpop.f32.mrf.mxu0
  %v2300 = vadd.f32 0.0, %v2299
  %v2301 = vpop.f32.mrf.mxu0
  %v2302 = vadd.f32 0.0, %v2301
  %2303 = vmatmul.bf16.gmra.mxu0 %v944
  %v2304 = vpop.f32.mrf.mxu0
  %v2305 = vadd.f32 0.0, %v2304
  %v2306 = vpop.f32.mrf.mxu0
  %v2307 = vadd.f32 0.0, %v2306
  %2308 = vdwg.mxu0
  %v2309 = vadd.f32 %v791, %v2280
  %v2310 = vadd.f32 %v793, %v2282
  %v2311 = vadd.f32 %v796, %v2285
  %v2312 = vadd.f32 %v798, %v2287
  %v2313 = vadd.f32 %v801, %v2290
  %v2314 = vadd.f32 %v803, %v2292
  %v2315 = vadd.f32 %v806, %v2295
  %v2316 = vadd.f32 %v808, %v2297
  %v2317 = vadd.f32 %v2309, %v996
  %v2318 = vadd.f32 %v2310, %v1001
  %v2319 = vadd.f32 %v2311, %v1006
  %v2320 = vadd.f32 %v2312, %v1011
  %v2321 = vadd.f32 %v2313, %v1016
  %v2322 = vadd.f32 %v2314, %v1021
  %v2323 = vadd.f32 %v2315, %v1026
  %v2324 = vadd.f32 %v2316, %v1031
  %v2325 = vxor.u32 %v2317, 2147483648
  %v2326 = vxor.u32 %v2318, 2147483648
  %v2327 = vxor.u32 %v2319, 2147483648
  %v2328 = vxor.u32 %v2320, 2147483648
  %v2329 = vxor.u32 %v2321, 2147483648
  %v2330 = vxor.u32 %v2322, 2147483648
  %v2331 = vxor.u32 %v2323, 2147483648
  %v2332 = vxor.u32 %v2324, 2147483648
  %v2333 = vmul.f32 %v2325, 1.442695
  %v2334 = vpow.pop %v2333
  %v2335 = vmul.f32 %v2326, 1.442695
  %v2336 = vpow.pop %v2335
  %v2337 = vmul.f32 %v2327, 1.442695
  %v2338 = vpow.pop %v2337
  %v2339 = vmul.f32 %v2328, 1.442695
  %v2340 = vpow.pop %v2339
  %v2341 = vmul.f32 %v2329, 1.442695
  %v2342 = vpow.pop %v2341
  %v2343 = vmul.f32 %v2330, 1.442695
  %v2344 = vpow.pop %v2343
  %v2345 = vmul.f32 %v2331, 1.442695
  %v2346 = vpow.pop %v2345
  %v2347 = vmul.f32 %v2332, 1.442695
  %v2348 = vpow.pop %v2347
  %v2349 = vadd.f32 %v2334, 1.0
  %v2350 = vadd.f32 %v2336, 1.0
  %v2351 = vadd.f32 %v2338, 1.0
  %v2352 = vadd.f32 %v2340, 1.0
  %v2353 = vadd.f32 %v2342, 1.0
  %v2354 = vadd.f32 %v2344, 1.0
  %v2355 = vadd.f32 %v2346, 1.0
  %v2356 = vadd.f32 %v2348, 1.0
  %v2357 = vrcp.pop %v2349
  %v2358 = vmul.f32 %v2349, %v2357
  %v2359 = vsub.f32 1.0, %v2358
  %v2360 = vmul.f32 %v2357, %v2359
  %v2361 = vadd.f32 %v2357, %v2360
  %vm2362 = vweird.f32 %v2349
  %vm2363 = vweird.f32 %v2357
  %vm2364 = vmor %vm2362, %vm2363
  %v2365 = vsel %vm2364, %v2357, %v2361
  %v2366 = vand.u32 2147483647, %v2349
  %vm2367 = vcmp.eq.f32.partialorder %v2366, 8.507059e+37
  %v2368 = vand.u32 %v2349, 2147483648
  %v2369 = vor.u32 1.1754944e-38, %v2368
  %v2370 = vsel %vm2367, %v2369, %v2365
  %v2371 = vmul.f32 1.0, %v2370
  %v2372 = vrcp.pop %v2350
  %v2373 = vmul.f32 %v2350, %v2372
  %v2374 = vsub.f32 1.0, %v2373
  %v2375 = vmul.f32 %v2372, %v2374
  %v2376 = vadd.f32 %v2372, %v2375
  %vm2377 = vweird.f32 %v2350
  %vm2378 = vweird.f32 %v2372
  %vm2379 = vmor %vm2377, %vm2378
  %v2380 = vsel %vm2379, %v2372, %v2376
  %v2381 = vand.u32 2147483647, %v2350
  %vm2382 = vcmp.eq.f32.partialorder %v2381, 8.507059e+37
  %v2383 = vand.u32 %v2350, 2147483648
  %v2384 = vor.u32 1.1754944e-38, %v2383
  %v2385 = vsel %vm2382, %v2384, %v2380
  %v2386 = vmul.f32 1.0, %v2385
  %v2387 = vrcp.pop %v2351
  %v2388 = vmul.f32 %v2351, %v2387
  %v2389 = vsub.f32 1.0, %v2388
  %v2390 = vmul.f32 %v2387, %v2389
  %v2391 = vadd.f32 %v2387, %v2390
  %vm2392 = vweird.f32 %v2351
  %vm2393 = vweird.f32 %v2387
  %vm2394 = vmor %vm2392, %vm2393
  %v2395 = vsel %vm2394, %v2387, %v2391
  %v2396 = vand.u32 2147483647, %v2351
  %vm2397 = vcmp.eq.f32.partialorder %v2396, 8.507059e+37
  %v2398 = vand.u32 %v2351, 2147483648
  %v2399 = vor.u32 1.1754944e-38, %v2398
  %v2400 = vsel %vm2397, %v2399, %v2395
  %v2401 = vmul.f32 1.0, %v2400
  %v2402 = vrcp.pop %v2352
  %v2403 = vmul.f32 %v2352, %v2402
  %v2404 = vsub.f32 1.0, %v2403
  %v2405 = vmul.f32 %v2402, %v2404
  %v2406 = vadd.f32 %v2402, %v2405
  %vm2407 = vweird.f32 %v2352
  %vm2408 = vweird.f32 %v2402
  %vm2409 = vmor %vm2407, %vm2408
  %v2410 = vsel %vm2409, %v2402, %v2406
  %v2411 = vand.u32 2147483647, %v2352
  %vm2412 = vcmp.eq.f32.partialorder %v2411, 8.507059e+37
  %v2413 = vand.u32 %v2352, 2147483648
  %v2414 = vor.u32 1.1754944e-38, %v2413
  %v2415 = vsel %vm2412, %v2414, %v2410
  %v2416 = vmul.f32 1.0, %v2415
  %v2417 = vrcp.pop %v2353
  %v2418 = vmul.f32 %v2353, %v2417
  %v2419 = vsub.f32 1.0, %v2418
  %v2420 = vmul.f32 %v2417, %v2419
  %v2421 = vadd.f32 %v2417, %v2420
  %vm2422 = vweird.f32 %v2353
  %vm2423 = vweird.f32 %v2417
  %vm2424 = vmor %vm2422, %vm2423
  %v2425 = vsel %vm2424, %v2417, %v2421
  %v2426 = vand.u32 2147483647, %v2353
  %vm2427 = vcmp.eq.f32.partialorder %v2426, 8.507059e+37
  %v2428 = vand.u32 %v2353, 2147483648
  %v2429 = vor.u32 1.1754944e-38, %v2428
  %v2430 = vsel %vm2427, %v2429, %v2425
  %v2431 = vmul.f32 1.0, %v2430
  %v2432 = vrcp.pop %v2354
  %v2433 = vmul.f32 %v2354, %v2432
  %v2434 = vsub.f32 1.0, %v2433
  %v2435 = vmul.f32 %v2432, %v2434
  %v2436 = vadd.f32 %v2432, %v2435
  %vm2437 = vweird.f32 %v2354
  %vm2438 = vweird.f32 %v2432
  %vm2439 = vmor %vm2437, %vm2438
  %v2440 = vsel %vm2439, %v2432, %v2436
  %v2441 = vand.u32 2147483647, %v2354
  %vm2442 = vcmp.eq.f32.partialorder %v2441, 8.507059e+37
  %v2443 = vand.u32 %v2354, 2147483648
  %v2444 = vor.u32 1.1754944e-38, %v2443
  %v2445 = vsel %vm2442, %v2444, %v2440
  %v2446 = vmul.f32 1.0, %v2445
  %v2447 = vrcp.pop %v2355
  %v2448 = vmul.f32 %v2355, %v2447
  %v2449 = vsub.f32 1.0, %v2448
  %v2450 = vmul.f32 %v2447, %v2449
  %v2451 = vadd.f32 %v2447, %v2450
  %vm2452 = vweird.f32 %v2355
  %vm2453 = vweird.f32 %v2447
  %vm2454 = vmor %vm2452, %vm2453
  %v2455 = vsel %vm2454, %v2447, %v2451
  %v2456 = vand.u32 2147483647, %v2355
  %vm2457 = vcmp.eq.f32.partialorder %v2456, 8.507059e+37
  %v2458 = vand.u32 %v2355, 2147483648
  %v2459 = vor.u32 1.1754944e-38, %v2458
  %v2460 = vsel %vm2457, %v2459, %v2455
  %v2461 = vmul.f32 1.0, %v2460
  %v2462 = vrcp.pop %v2356
  %v2463 = vmul.f32 %v2356, %v2462
  %v2464 = vsub.f32 1.0, %v2463
  %v2465 = vmul.f32 %v2462, %v2464
  %v2466 = vadd.f32 %v2462, %v2465
  %vm2467 = vweird.f32 %v2356
  %vm2468 = vweird.f32 %v2462
  %vm2469 = vmor %vm2467, %vm2468
  %v2470 = vsel %vm2469, %v2462, %v2466
  %v2471 = vand.u32 2147483647, %v2356
  %vm2472 = vcmp.eq.f32.partialorder %v2471, 8.507059e+37
  %v2473 = vand.u32 %v2356, 2147483648
  %v2474 = vor.u32 1.1754944e-38, %v2473
  %v2475 = vsel %vm2472, %v2474, %v2470
  %v2476 = vmul.f32 1.0, %v2475
  %v2477 = vadd.f32 %v811, %v1196
  %v2478 = vadd.f32 %v813, %v1201
  %v2479 = vadd.f32 %v816, %v1206
  %v2480 = vadd.f32 %v818, %v1211
  %v2481 = vadd.f32 %v2300, %v1220
  %v2482 = vadd.f32 %v2302, %v1225
  %v2483 = vadd.f32 %v2305, %v1230
  %v2484 = vadd.f32 %v2307, %v1235
  %v2485 = vmul.f32 %v2371, %v2481
  %v2486 = vmul.f32 %v2386, %v2482
  %v2487 = vmul.f32 %v2401, %v2483
  %v2488 = vmul.f32 %v2416, %v2484
  %v2489 = vadd.f32 %v2477, %v2485
  %v2490 = vadd.f32 %v2478, %v2486
  %v2491 = vadd.f32 %v2479, %v2487
  %v2492 = vadd.f32 %v2480, %v2488
  %v2493 = vtanh.pop %v2489
  %v2494 = vtanh.pop %v2490
  %v2495 = vtanh.pop %v2491
  %v2496 = vtanh.pop %v2492
  %v2497 = vsub.f32 1.0, %v2431
  %v2498 = vsub.f32 1.0, %v2446
  %v2499 = vsub.f32 1.0, %v2461
  %v2500 = vsub.f32 1.0, %v2476
  %v2501 = vmul.f32 %v2497, %v2493
  %v2502 = vmul.f32 %v2498, %v2494
  %v2503 = vmul.f32 %v2499, %v2495
  %v2504 = vmul.f32 %v2500, %v2496
  %v2505 = vmul.f32 %v2431, %v2208
  %v2506 = vmul.f32 %v2446, %v2209
  %v2507 = vmul.f32 %v2461, %v2210
  %v2508 = vmul.f32 %v2476, %v2211
  %v2509 = vadd.f32 %v2501, %v2505
  %v2510 = vadd.f32 %v2502, %v2506
  %v2511 = vadd.f32 %v2503, %v2507
  %v2512 = vadd.f32 %v2504, %v2508
  %v2513 = vmul.f32 %v2509, %v1272
  %v2514 = vmul.f32 %v2510, %v1277
  %v2515 = vmul.f32 %v2511, %v1282
  %v2516 = vmul.f32 %v2512, %v1287
  %v2517 = vadd.f32 %v2513, %v2514
  %v2518 = vadd.f32 %v2517, %v2515
  %v2519 = vadd.f32 %v2518, %v2516
  %v2520 = vrot.slane %v2519, 4
  %v2521 = vadd.f32 %v2519, %v2520
  %v2522 = vrot.slane %v2521, 2
  %v2523 = vadd.f32 %v2521, %v2522
  %v2524 = vrot.slane %v2523, 1
  %v2525 = vadd.f32 %v2523, %v2524
  %v2526 = vadd.f32 %v2525, %v1305
  %v2527 = vmul.f32 %v2509, %v1310
  %v2528 = vmul.f32 %v2510, %v1314
  %v2529 = vmul.f32 %v2511, %v1318
  %v2530 = vmul.f32 %v2512, %v1322
  %v2531 = vadd.f32 %v2527, %v2528
  %v2532 = vadd.f32 %v2531, %v2529
  %v2533 = vadd.f32 %v2532, %v2530
  %v2534 = vrot.slane %v2533, 4
  %v2535 = vadd.f32 %v2533, %v2534
  %v2536 = vrot.slane %v2535, 2
  %v2537 = vadd.f32 %v2535, %v2536
  %v2538 = vrot.slane %v2537, 1
  %v2539 = vadd.f32 %v2537, %v2538
  %v2540 = vadd.f32 %v2539, %v1305
  %v2542 = vrot.slane %v2540, 1
  %v2544 = vmax.f32 %v2526, %v2542
  %v2545 = vsub.f32 %v2526, %v2544
  %v2546 = vmul.f32 %v2545, 1.442695
  %v2547 = vpow.pop %v2546
  %v2549 = vrot.slane %v2544, 7
  %v2551 = vsub.f32 %v2540, %v2549
  %v2552 = vmul.f32 %v2551, 1.442695
  %v2553 = vpow.pop %v2552
  %v2555 = vrot.slane %v2553, 1
  %v2557 = vadd.f32 %v2547, %v2555
  %v2558 = vlog2.pop %v2557
  %v2559 = vmul.f32 %v2558, 0.6931472
  %v2560 = vadd.f32 %v2544, %v2559
  %v2561 = vsub.f32 %v2526, %v2560
  %s2562 = scalar_lea.vmem %s10, 8
  %2563 = vst [vmem:[%s2562] sm:$0x1] %v2561
  %v2565 = vrot.slane %v2560, 7
  %v2567 = vsub.f32 %v2540, %v2565
  %2568 = vst [vmem:[%s2562] sm:$0x2] %v2567
  %v2569 = vpack.c.bf16 %v2510, %v2509
  %v2570 = vpack.c.bf16 %v2512, %v2511
  %2571 = vmatpush.bf16.msra.mxu0 0
  %2572 = vmatpush.bf16.msra.mxu0 0
  %2573 = vmatpush.bf16.msra.mxu0 0
  %2574 = vmatpush.bf16.msra.mxu0 0
  %2575 = vmatpush.bf16.msra.mxu0 0
  %2576 = vmatpush.bf16.msra.mxu0 0
  %2577 = vmatpush.bf16.msra.mxu0 %v2570
  %2578 = vmatpush.bf16.msra.mxu0 %v2569
  %2579 = vmatmul.bf16.gmra.mxu0 %v929
  %v2580 = vpop.f32.mrf.mxu0
  %v2581 = vadd.f32 0.0, %v2580
  %v2582 = vpop.f32.mrf.mxu0
  %v2583 = vadd.f32 0.0, %v2582
  %2584 = vmatmul.bf16.gmra.mxu0 %v932
  %v2585 = vpop.f32.mrf.mxu0
  %v2586 = vadd.f32 0.0, %v2585
  %v2587 = vpop.f32.mrf.mxu0
  %v2588 = vadd.f32 0.0, %v2587
  %2589 = vmatmul.bf16.gmra.mxu0 %v935
  %v2590 = vpop.f32.mrf.mxu0
  %v2591 = vadd.f32 0.0, %v2590
  %v2592 = vpop.f32.mrf.mxu0
  %v2593 = vadd.f32 0.0, %v2592
  %2594 = vmatmul.bf16.gmra.mxu0 %v938
  %v2595 = vpop.f32.mrf.mxu0
  %v2596 = vadd.f32 0.0, %v2595
  %v2597 = vpop.f32.mrf.mxu0
  %v2598 = vadd.f32 0.0, %v2597
  %2599 = vmatmul.bf16.gmra.mxu0 %v941
  %v2600 = vpop.f32.mrf.mxu0
  %v2601 = vadd.f32 0.0, %v2600
  %v2602 = vpop.f32.mrf.mxu0
  %v2603 = vadd.f32 0.0, %v2602
  %2604 = vmatmul.bf16.gmra.mxu0 %v944
  %v2605 = vpop.f32.mrf.mxu0
  %v2606 = vadd.f32 0.0, %v2605
  %v2607 = vpop.f32.mrf.mxu0
  %v2608 = vadd.f32 0.0, %v2607
  %2609 = vdwg.mxu0
  %v2610 = vadd.f32 %v830, %v2581
  %v2611 = vadd.f32 %v832, %v2583
  %v2612 = vadd.f32 %v835, %v2586
  %v2613 = vadd.f32 %v837, %v2588
  %v2614 = vadd.f32 %v840, %v2591
  %v2615 = vadd.f32 %v842, %v2593
  %v2616 = vadd.f32 %v845, %v2596
  %v2617 = vadd.f32 %v847, %v2598
  %v2618 = vadd.f32 %v2610, %v996
  %v2619 = vadd.f32 %v2611, %v1001
  %v2620 = vadd.f32 %v2612, %v1006
  %v2621 = vadd.f32 %v2613, %v1011
  %v2622 = vadd.f32 %v2614, %v1016
  %v2623 = vadd.f32 %v2615, %v1021
  %v2624 = vadd.f32 %v2616, %v1026
  %v2625 = vadd.f32 %v2617, %v1031
  %v2626 = vxor.u32 %v2618, 2147483648
  %v2627 = vxor.u32 %v2619, 2147483648
  %v2628 = vxor.u32 %v2620, 2147483648
  %v2629 = vxor.u32 %v2621, 2147483648
  %v2630 = vxor.u32 %v2622, 2147483648
  %v2631 = vxor.u32 %v2623, 2147483648
  %v2632 = vxor.u32 %v2624, 2147483648
  %v2633 = vxor.u32 %v2625, 2147483648
  %v2634 = vmul.f32 %v2626, 1.442695
  %v2635 = vpow.pop %v2634
  %v2636 = vmul.f32 %v2627, 1.442695
  %v2637 = vpow.pop %v2636
  %v2638 = vmul.f32 %v2628, 1.442695
  %v2639 = vpow.pop %v2638
  %v2640 = vmul.f32 %v2629, 1.442695
  %v2641 = vpow.pop %v2640
  %v2642 = vmul.f32 %v2630, 1.442695
  %v2643 = vpow.pop %v2642
  %v2644 = vmul.f32 %v2631, 1.442695
  %v2645 = vpow.pop %v2644
  %v2646 = vmul.f32 %v2632, 1.442695
  %v2647 = vpow.pop %v2646
  %v2648 = vmul.f32 %v2633, 1.442695
  %v2649 = vpow.pop %v2648
  %v2650 = vadd.f32 %v2635, 1.0
  %v2651 = vadd.f32 %v2637, 1.0
  %v2652 = vadd.f32 %v2639, 1.0
  %v2653 = vadd.f32 %v2641, 1.0
  %v2654 = vadd.f32 %v2643, 1.0
  %v2655 = vadd.f32 %v2645, 1.0
  %v2656 = vadd.f32 %v2647, 1.0
  %v2657 = vadd.f32 %v2649, 1.0
  %v2658 = vrcp.pop %v2650
  %v2659 = vmul.f32 %v2650, %v2658
  %v2660 = vsub.f32 1.0, %v2659
  %v2661 = vmul.f32 %v2658, %v2660
  %v2662 = vadd.f32 %v2658, %v2661
  %vm2663 = vweird.f32 %v2650
  %vm2664 = vweird.f32 %v2658
  %vm2665 = vmor %vm2663, %vm2664
  %v2666 = vsel %vm2665, %v2658, %v2662
  %v2667 = vand.u32 2147483647, %v2650
  %vm2668 = vcmp.eq.f32.partialorder %v2667, 8.507059e+37
  %v2669 = vand.u32 %v2650, 2147483648
  %v2670 = vor.u32 1.1754944e-38, %v2669
  %v2671 = vsel %vm2668, %v2670, %v2666
  %v2672 = vmul.f32 1.0, %v2671
  %v2673 = vrcp.pop %v2651
  %v2674 = vmul.f32 %v2651, %v2673
  %v2675 = vsub.f32 1.0, %v2674
  %v2676 = vmul.f32 %v2673, %v2675
  %v2677 = vadd.f32 %v2673, %v2676
  %vm2678 = vweird.f32 %v2651
  %vm2679 = vweird.f32 %v2673
  %vm2680 = vmor %vm2678, %vm2679
  %v2681 = vsel %vm2680, %v2673, %v2677
  %v2682 = vand.u32 2147483647, %v2651
  %vm2683 = vcmp.eq.f32.partialorder %v2682, 8.507059e+37
  %v2684 = vand.u32 %v2651, 2147483648
  %v2685 = vor.u32 1.1754944e-38, %v2684
  %v2686 = vsel %vm2683, %v2685, %v2681
  %v2687 = vmul.f32 1.0, %v2686
  %v2688 = vrcp.pop %v2652
  %v2689 = vmul.f32 %v2652, %v2688
  %v2690 = vsub.f32 1.0, %v2689
  %v2691 = vmul.f32 %v2688, %v2690
  %v2692 = vadd.f32 %v2688, %v2691
  %vm2693 = vweird.f32 %v2652
  %vm2694 = vweird.f32 %v2688
  %vm2695 = vmor %vm2693, %vm2694
  %v2696 = vsel %vm2695, %v2688, %v2692
  %v2697 = vand.u32 2147483647, %v2652
  %vm2698 = vcmp.eq.f32.partialorder %v2697, 8.507059e+37
  %v2699 = vand.u32 %v2652, 2147483648
  %v2700 = vor.u32 1.1754944e-38, %v2699
  %v2701 = vsel %vm2698, %v2700, %v2696
  %v2702 = vmul.f32 1.0, %v2701
  %v2703 = vrcp.pop %v2653
  %v2704 = vmul.f32 %v2653, %v2703
  %v2705 = vsub.f32 1.0, %v2704
  %v2706 = vmul.f32 %v2703, %v2705
  %v2707 = vadd.f32 %v2703, %v2706
  %vm2708 = vweird.f32 %v2653
  %vm2709 = vweird.f32 %v2703
  %vm2710 = vmor %vm2708, %vm2709
  %v2711 = vsel %vm2710, %v2703, %v2707
  %v2712 = vand.u32 2147483647, %v2653
  %vm2713 = vcmp.eq.f32.partialorder %v2712, 8.507059e+37
  %v2714 = vand.u32 %v2653, 2147483648
  %v2715 = vor.u32 1.1754944e-38, %v2714
  %v2716 = vsel %vm2713, %v2715, %v2711
  %v2717 = vmul.f32 1.0, %v2716
  %v2718 = vrcp.pop %v2654
  %v2719 = vmul.f32 %v2654, %v2718
  %v2720 = vsub.f32 1.0, %v2719
  %v2721 = vmul.f32 %v2718, %v2720
  %v2722 = vadd.f32 %v2718, %v2721
  %vm2723 = vweird.f32 %v2654
  %vm2724 = vweird.f32 %v2718
  %vm2725 = vmor %vm2723, %vm2724
  %v2726 = vsel %vm2725, %v2718, %v2722
  %v2727 = vand.u32 2147483647, %v2654
  %vm2728 = vcmp.eq.f32.partialorder %v2727, 8.507059e+37
  %v2729 = vand.u32 %v2654, 2147483648
  %v2730 = vor.u32 1.1754944e-38, %v2729
  %v2731 = vsel %vm2728, %v2730, %v2726
  %v2732 = vmul.f32 1.0, %v2731
  %v2733 = vrcp.pop %v2655
  %v2734 = vmul.f32 %v2655, %v2733
  %v2735 = vsub.f32 1.0, %v2734
  %v2736 = vmul.f32 %v2733, %v2735
  %v2737 = vadd.f32 %v2733, %v2736
  %vm2738 = vweird.f32 %v2655
  %vm2739 = vweird.f32 %v2733
  %vm2740 = vmor %vm2738, %vm2739
  %v2741 = vsel %vm2740, %v2733, %v2737
  %v2742 = vand.u32 2147483647, %v2655
  %vm2743 = vcmp.eq.f32.partialorder %v2742, 8.507059e+37
  %v2744 = vand.u32 %v2655, 2147483648
  %v2745 = vor.u32 1.1754944e-38, %v2744
  %v2746 = vsel %vm2743, %v2745, %v2741
  %v2747 = vmul.f32 1.0, %v2746
  %v2748 = vrcp.pop %v2656
  %v2749 = vmul.f32 %v2656, %v2748
  %v2750 = vsub.f32 1.0, %v2749
  %v2751 = vmul.f32 %v2748, %v2750
  %v2752 = vadd.f32 %v2748, %v2751
  %vm2753 = vweird.f32 %v2656
  %vm2754 = vweird.f32 %v2748
  %vm2755 = vmor %vm2753, %vm2754
  %v2756 = vsel %vm2755, %v2748, %v2752
  %v2757 = vand.u32 2147483647, %v2656
  %vm2758 = vcmp.eq.f32.partialorder %v2757, 8.507059e+37
  %v2759 = vand.u32 %v2656, 2147483648
  %v2760 = vor.u32 1.1754944e-38, %v2759
  %v2761 = vsel %vm2758, %v2760, %v2756
  %v2762 = vmul.f32 1.0, %v2761
  %v2763 = vrcp.pop %v2657
  %v2764 = vmul.f32 %v2657, %v2763
  %v2765 = vsub.f32 1.0, %v2764
  %v2766 = vmul.f32 %v2763, %v2765
  %v2767 = vadd.f32 %v2763, %v2766
  %vm2768 = vweird.f32 %v2657
  %vm2769 = vweird.f32 %v2763
  %vm2770 = vmor %vm2768, %vm2769
  %v2771 = vsel %vm2770, %v2763, %v2767
  %v2772 = vand.u32 2147483647, %v2657
  %vm2773 = vcmp.eq.f32.partialorder %v2772, 8.507059e+37
  %v2774 = vand.u32 %v2657, 2147483648
  %v2775 = vor.u32 1.1754944e-38, %v2774
  %v2776 = vsel %vm2773, %v2775, %v2771
  %v2777 = vmul.f32 1.0, %v2776
  %v2778 = vadd.f32 %v850, %v1196
  %v2779 = vadd.f32 %v852, %v1201
  %v2780 = vadd.f32 %v855, %v1206
  %v2781 = vadd.f32 %v857, %v1211
  %v2782 = vadd.f32 %v2601, %v1220
  %v2783 = vadd.f32 %v2603, %v1225
  %v2784 = vadd.f32 %v2606, %v1230
  %v2785 = vadd.f32 %v2608, %v1235
  %v2786 = vmul.f32 %v2672, %v2782
  %v2787 = vmul.f32 %v2687, %v2783
  %v2788 = vmul.f32 %v2702, %v2784
  %v2789 = vmul.f32 %v2717, %v2785
  %v2790 = vadd.f32 %v2778, %v2786
  %v2791 = vadd.f32 %v2779, %v2787
  %v2792 = vadd.f32 %v2780, %v2788
  %v2793 = vadd.f32 %v2781, %v2789
  %v2794 = vtanh.pop %v2790
  %v2795 = vtanh.pop %v2791
  %v2796 = vtanh.pop %v2792
  %v2797 = vtanh.pop %v2793
  %v2798 = vsub.f32 1.0, %v2732
  %v2799 = vsub.f32 1.0, %v2747
  %v2800 = vsub.f32 1.0, %v2762
  %v2801 = vsub.f32 1.0, %v2777
  %v2802 = vmul.f32 %v2798, %v2794
  %v2803 = vmul.f32 %v2799, %v2795
  %v2804 = vmul.f32 %v2800, %v2796
  %v2805 = vmul.f32 %v2801, %v2797
  %v2806 = vmul.f32 %v2732, %v2509
  %v2807 = vmul.f32 %v2747, %v2510
  %v2808 = vmul.f32 %v2762, %v2511
  %v2809 = vmul.f32 %v2777, %v2512
  %v2810 = vadd.f32 %v2802, %v2806
  %v2811 = vadd.f32 %v2803, %v2807
  %v2812 = vadd.f32 %v2804, %v2808
  %v2813 = vadd.f32 %v2805, %v2809
  %v2814 = vmul.f32 %v2810, %v1272
  %v2815 = vmul.f32 %v2811, %v1277
  %v2816 = vmul.f32 %v2812, %v1282
  %v2817 = vmul.f32 %v2813, %v1287
  %v2818 = vadd.f32 %v2814, %v2815
  %v2819 = vadd.f32 %v2818, %v2816
  %v2820 = vadd.f32 %v2819, %v2817
  %v2821 = vrot.slane %v2820, 4
  %v2822 = vadd.f32 %v2820, %v2821
  %v2823 = vrot.slane %v2822, 2
  %v2824 = vadd.f32 %v2822, %v2823
  %v2825 = vrot.slane %v2824, 1
  %v2826 = vadd.f32 %v2824, %v2825
  %v2827 = vadd.f32 %v2826, %v1305
  %v2828 = vmul.f32 %v2810, %v1310
  %v2829 = vmul.f32 %v2811, %v1314
  %v2830 = vmul.f32 %v2812, %v1318
  %v2831 = vmul.f32 %v2813, %v1322
  %v2832 = vadd.f32 %v2828, %v2829
  %v2833 = vadd.f32 %v2832, %v2830
  %v2834 = vadd.f32 %v2833, %v2831
  %v2835 = vrot.slane %v2834, 4
  %v2836 = vadd.f32 %v2834, %v2835
  %v2837 = vrot.slane %v2836, 2
  %v2838 = vadd.f32 %v2836, %v2837
  %v2839 = vrot.slane %v2838, 1
  %v2840 = vadd.f32 %v2838, %v2839
  %v2841 = vadd.f32 %v2840, %v1305
  %v2843 = vrot.slane %v2841, 1
  %v2845 = vmax.f32 %v2827, %v2843
  %v2846 = vsub.f32 %v2827, %v2845
  %v2847 = vmul.f32 %v2846, 1.442695
  %v2848 = vpow.pop %v2847
  %v2850 = vrot.slane %v2845, 7
  %v2852 = vsub.f32 %v2841, %v2850
  %v2853 = vmul.f32 %v2852, 1.442695
  %v2854 = vpow.pop %v2853
  %v2856 = vrot.slane %v2854, 1
  %v2858 = vadd.f32 %v2848, %v2856
  %v2859 = vlog2.pop %v2858
  %v2860 = vmul.f32 %v2859, 0.6931472
  %v2861 = vadd.f32 %v2845, %v2860
  %v2862 = vsub.f32 %v2827, %v2861
  %s2863 = scalar_lea.vmem %s10, 10
  %2864 = vst [vmem:[%s2863] sm:$0x1] %v2862
  %v2866 = vrot.slane %v2861, 7
  %v2868 = vsub.f32 %v2841, %v2866
  %2869 = vst [vmem:[%s2863] sm:$0x2] %v2868
  %2870 = vst [vmem:[%s11] sm:$0xff] %v2810
  %2871 = vst [vmem:[%s11 + $0x8] sm:$0xff] %v2811
  %2872 = vst [vmem:[%s11 + $0x10] sm:$0xff] %v2812
  %2873 = vst [vmem:[%s11 + $0x18] sm:$0xff] %v2813
  // Predicated region
  $region42: #{answer_rnn_forward_seq.1} parent=0 // pred_check
    _
  $region43: #{answer_rnn_forward_seq.1} parent=0 // pred_check_branch
    %2875 = sbr.rel (0) target = $region45
  $region44: #{answer_rnn_forward_seq.1} parent=0 // pred_region
    _
  $region45: #{answer_rnn_forward_seq.1} parent=0 // pred_fallthru
    _
  // Predicated region
  $region46: #{answer_rnn_forward_seq.1} parent=0 // pred_check
    _
  $region47: #{answer_rnn_forward_seq.1} parent=0 // pred_check_branch
    %2877 = sbr.rel (0) target = $region49
  $region48: #{answer_rnn_forward_seq.1} parent=0 // pred_region
    _
  $region49: #{answer_rnn_forward_seq.1} parent=0 // pred_fallthru
    _
  // Predicated region
  $region50: #{answer_rnn_forward_seq.1} parent=0 // pred_check
    _
  $region51: #{answer_rnn_forward_seq.1} parent=0 // pred_check_branch
    %2879 = sbr.rel (0) target = $region53
  $region52: #{answer_rnn_forward_seq.1} parent=0 // pred_region
    _
  $region53: #{answer_rnn_forward_seq.1} parent=0 // pred_fallthru
    _
  // Predicated region
  $region54: #{answer_rnn_forward_seq.1} parent=0 // pred_check
    _
  $region55: #{answer_rnn_forward_seq.1} parent=0 // pred_check_branch
    %2881 = sbr.rel (0) target = $region57
  $region56: #{answer_rnn_forward_seq.1} parent=0 // pred_region
    _
  $region57: #{answer_rnn_forward_seq.1} parent=0 // pred_fallthru
    _

</llo_original>
